<compile_context>
chip_gen: v6e
topology: v6e:2x2x1
jax: 0.10.0
libtpu: 0.0.40
codegen_flags: <defaults>
</compile_context>

<pallas_src>
import jax
import jax.numpy as jnp
from jax.experimental import pallas as pl
from jax.experimental.pallas import tpu as pltpu

D_IN, D_HID, D_LAT = 784, 512, 20


def vae_kernel(x_ref, eps_ref,
               w1_ref, b1_ref, w2_ref, b2_ref,
               w3_ref, b3_ref, w4_ref, b4_ref,
               recon_ref, stats_ref):
    x = x_ref[...]                                                  # bf16 [TM, 784]

    # encode: h = relu(fc1(x))   (bf16 operands, f32 accumulate)
    h = jnp.dot(x, w1_ref[...], preferred_element_type=jnp.float32) + b1_ref[...]
    h = jnp.maximum(h, 0.0)                                         # f32 [TM, 512]

    # fused encoder head: stats = h @ [w21 | w22] + [b21 | b22]  -> [TM, 40]
    stats = jnp.dot(h.astype(jnp.bfloat16), w2_ref[...],
                    preferred_element_type=jnp.float32) + b2_ref[...]
    mu = stats[:, :D_LAT]
    logvar = stats[:, D_LAT:]

    # reparameterize (training mode): z = mu + eps * exp(0.5 * logvar)
    std = jnp.exp(0.5 * logvar)
    z = mu + eps_ref[...] * std                                     # f32 [TM, 20]

    # decode: sigmoid(fc4(relu(fc3(z))))
    h2 = jnp.dot(z.astype(jnp.bfloat16), w3_ref[...],
                 preferred_element_type=jnp.float32) + b3_ref[...]
    h2 = jnp.maximum(h2, 0.0)                                       # f32 [TM, 512]
    logits = jnp.dot(h2.astype(jnp.bfloat16), w4_ref[...],
                     preferred_element_type=jnp.float32) + b4_ref[...]

    # sigmoid = 1 / (1 + exp(-x)); exp on EUP, approx reciprocal on EUP (free slot)
    e = jnp.exp(-logits)
    recon_ref[...] = pl.reciprocal(1.0 + e, approx=True)            # f32 [TM, 784]
    stats_ref[...] = stats                                          # f32 [TM, 40]


def vae_forward(x, eps, params, *, tm=None):
    """x: [B, 1, 28, 28] (NCHW, like PyTorch) or [B, 784]; eps: [B, 20]."""
    (w1, b1, w21, b21, w22, b22, w3, b3, w4, b4) = params
    B = x.shape[0]
    x2d = x.reshape(B, D_IN)

    # Fuse fc21/fc22 into one [512, 40] weight / [1, 40] bias.
    w2 = jnp.concatenate([w21, w22], axis=1)
    b2 = jnp.concatenate([b21, b22], axis=1)

    # bf16 MXU operands; f32 biases / elementwise math.
    x_bf = x2d.astype(jnp.bfloat16)
    w1b, w2b, w3b, w4b = (w.astype(jnp.bfloat16) for w in (w1, w2, w3, w4))
    b1f, b2f, b3f, b4f = (b.astype(jnp.float32) for b in (b1, b2, b3, b4))
    eps_f = eps.astype(jnp.float32)

    # Batch tile: multiple of 8 sublanes, capped at 512 rows (fits v7x 64 MiB
    # VMEM comfortably with double-buffered tiles + ~1.7 MiB resident weights).
    if tm is None:
        tm = min(512, 8 * pl.cdiv(B, 8))
    n_tiles = pl.cdiv(B, tm)
    Bp = n_tiles * tm
    if Bp != B:
        pad = Bp - B
        x_bf = jnp.pad(x_bf, ((0, pad), (0, 0)))
        eps_f = jnp.pad(eps_f, ((0, pad), (0, 0)))

    const2 = lambda i: (0, 0)
    row = lambda i: (i, 0)

    in_specs = [
        pl.BlockSpec((tm, D_IN), row),          # x
        pl.BlockSpec((tm, D_LAT), row),         # eps
        pl.BlockSpec((D_IN, D_HID), const2),    # w1  (VMEM-resident across tiles)
        pl.BlockSpec((1, D_HID), const2),       # b1
        pl.BlockSpec((D_HID, 2 * D_LAT), const2),  # w2 (fused fc21|fc22)
        pl.BlockSpec((1, 2 * D_LAT), const2),      # b2
        pl.BlockSpec((D_LAT, D_HID), const2),   # w3
        pl.BlockSpec((1, D_HID), const2),       # b3
        pl.BlockSpec((D_HID, D_IN), const2),    # w4
        pl.BlockSpec((1, D_IN), const2),        # b4
    ]
    out_specs = (
        pl.BlockSpec((tm, D_IN), row),          # recon
        pl.BlockSpec((tm, 2 * D_LAT), row),     # stats = mu || logvar
    )
    out_shapes = (
        jax.ShapeDtypeStruct((Bp, D_IN), jnp.float32),
        jax.ShapeDtypeStruct((Bp, 2 * D_LAT), jnp.float32),
    )

    weight_elems = D_IN * D_HID + D_HID * 2 * D_LAT + D_LAT * D_HID + D_HID * D_IN
    bias_elems = D_HID + 2 * D_LAT + D_HID + D_IN
    cost = pl.CostEstimate(
        flops=2 * Bp * weight_elems,
        transcendentals=Bp * (D_LAT + D_IN),
        bytes_accessed=(2 * weight_elems + 4 * bias_elems
                        + Bp * (2 * D_IN + 4 * D_LAT + 4 * D_IN + 4 * 2 * D_LAT)),
    )

    recon, stats = pl.pallas_call(
        vae_kernel,
        out_shape=out_shapes,
        grid=(n_tiles,),
        in_specs=in_specs,
        out_specs=out_specs,
        compiler_params=pltpu.CompilerParams(
            dimension_semantics=("parallel",),
            vmem_limit_bytes=24 << 20,
        ),
        cost_estimate=cost,
    )(x_bf, eps_f, w1b, b1f, w2b, b2f, w3b, b3f, w4b, b4f)

    recon = recon[:B]
    mu = stats[:B, :D_LAT]
    logvar = stats[:B, D_LAT:]
    return recon, mu, logvar


def vae_reference(x, eps, params):
    """Pure-JAX f32 reference matching the PyTorch forward (training mode)."""
    (w1, b1, w21, b21, w22, b22, w3, b3, w4, b4) = params
    x2d = x.reshape(x.shape[0], D_IN).astype(jnp.float32)
    h = jax.nn.relu(x2d @ w1 + b1)
    mu = h @ w21 + b21
    logvar = h @ w22 + b22
    z = mu + eps * jnp.exp(0.5 * logvar)
    h2 = jax.nn.relu(z @ w3 + b3)
    recon = jax.nn.sigmoid(h2 @ w4 + b4)
    return recon, mu, logvar


def init_params(key):
    """PyTorch Linear default init (U[-1/sqrt(in), 1/sqrt(in)]).
    Weights stored as (in, out); biases as (1, out)."""
    dims = [(D_IN, D_HID), (D_HID, D_LAT), (D_HID, D_LAT),
            (D_LAT, D_HID), (D_HID, D_IN)]
    params = []
    for (fan_in, fan_out) in dims:
        key, kw, kb = jax.random.split(key, 3)
        bound = 1.0 / jnp.sqrt(fan_in)
        w = jax.random.uniform(kw, (fan_in, fan_out), jnp.float32, -bound, bound)
        b = jax.random.uniform(kb, (1, fan_out), jnp.float32, -bound, bound)
        params += [w, b]
    return tuple(params)


if __name__ == "__main__":
    key = jax.random.PRNGKey(0)
    kx, keps, kp = jax.random.split(key, 3)

    B = 8
    x = jax.random.normal(kx, (B, 1, 28, 28), jnp.float32)   # NCHW like PyTorch MNIST
    eps = jax.random.normal(keps, (B, D_LAT), jnp.float32)   # reparameterization noise
    params = init_params(kp)

    recon, mu, logvar = vae_forward(x, eps, params)
    jax.block_until_ready((recon, mu, logvar))

    assert recon.shape == (B, D_IN) and mu.shape == (B, D_LAT) and logvar.shape == (B, D_LAT)

    # Loose tolerance vs the f32 reference (kernel uses bf16 MXU operands).
    r_ref, m_ref, lv_ref = vae_reference(x, eps, params)
    assert float(jnp.max(jnp.abs(recon - r_ref))) < 4e-2
    assert float(jnp.max(jnp.abs(mu - m_ref))) < 4e-2
    assert float(jnp.max(jnp.abs(logvar - lv_ref))) < 4e-2
    assert bool(jnp.all(jnp.isfinite(recon)))

    print("KERNEL_OK")
</pallas_src>

<mosaic_0001>
module attributes {stable_mosaic.version = 11 : i64} {
  func.func @vae_kernel(%arg0: i32, %arg1: memref<8x784xbf16, #tpu.memory_space<vmem>>, %arg2: memref<8x20xf32, #tpu.memory_space<vmem>>, %arg3: memref<784x512xbf16, #tpu.memory_space<vmem>>, %arg4: memref<1x512xf32, #tpu.memory_space<vmem>>, %arg5: memref<512x40xbf16, #tpu.memory_space<vmem>>, %arg6: memref<1x40xf32, #tpu.memory_space<vmem>>, %arg7: memref<20x512xbf16, #tpu.memory_space<vmem>>, %arg8: memref<1x512xf32, #tpu.memory_space<vmem>>, %arg9: memref<512x784xbf16, #tpu.memory_space<vmem>>, %arg10: memref<1x784xf32, #tpu.memory_space<vmem>>, %arg11: memref<8x784xf32, #tpu.memory_space<vmem>>, %arg12: memref<8x40xf32, #tpu.memory_space<vmem>>) attributes {dimension_semantics = [#tpu.dimension_semantics<parallel>], iteration_bounds = array<i64: 1>, scalar_prefetch = 0 : i64, scratch_operands = 0 : i64, tpu.core_type = #tpu.core_type<tc>, window_params = [{transform_indices = @transform_0, window_bounds = array<i64: 8, 784>}, {transform_indices = @transform_1, window_bounds = array<i64: 8, 20>}, {pipeline_mode = #tpu.pipeline_mode<synchronous>, transform_indices = @transform_2, window_bounds = array<i64: 784, 512>}, {pipeline_mode = #tpu.pipeline_mode<synchronous>, transform_indices = @transform_3, window_bounds = array<i64: 1, 512>}, {pipeline_mode = #tpu.pipeline_mode<synchronous>, transform_indices = @transform_4, window_bounds = array<i64: 512, 40>}, {pipeline_mode = #tpu.pipeline_mode<synchronous>, transform_indices = @transform_5, window_bounds = array<i64: 1, 40>}, {pipeline_mode = #tpu.pipeline_mode<synchronous>, transform_indices = @transform_6, window_bounds = array<i64: 20, 512>}, {pipeline_mode = #tpu.pipeline_mode<synchronous>, transform_indices = @transform_7, window_bounds = array<i64: 1, 512>}, {pipeline_mode = #tpu.pipeline_mode<synchronous>, transform_indices = @transform_8, window_bounds = array<i64: 512, 784>}, {pipeline_mode = #tpu.pipeline_mode<synchronous>, transform_indices = @transform_9, window_bounds = array<i64: 1, 784>}, {transform_indices = @transform_10, window_bounds = array<i64: 8, 784>}, {transform_indices = @transform_11, window_bounds = array<i64: 8, 40>}]} {
    %c0 = arith.constant 0 : index
    %c0_0 = arith.constant 0 : index
    %0 = vector.load %arg1[%c0, %c0_0] : memref<8x784xbf16, #tpu.memory_space<vmem>>, vector<8x784xbf16>
    %c0_1 = arith.constant 0 : index
    %c0_2 = arith.constant 0 : index
    %1 = vector.load %arg3[%c0_1, %c0_2] : memref<784x512xbf16, #tpu.memory_space<vmem>>, vector<784x512xbf16>
    %cst = arith.constant dense<0.000000e+00> : vector<8x512xf32>
    %2 = tpu.matmul %0, %1, %cst {dimension_numbers = #tpu.dot_dimension_numbers<[1], [0], [0], [1], [0, 0, 1, 1], [], []>} : vector<8x784xbf16>, vector<784x512xbf16>, vector<8x512xf32> -> vector<8x512xf32>
    %c0_3 = arith.constant 0 : index
    %c0_4 = arith.constant 0 : index
    %3 = vector.load %arg4[%c0_3, %c0_4] : memref<1x512xf32, #tpu.memory_space<vmem>>, vector<1x512xf32>
    %4 = vector.broadcast %3 : vector<1x512xf32> to vector<8x512xf32>
    %5 = arith.addf %2, %4 : vector<8x512xf32>
    %cst_5 = arith.constant 0.000000e+00 : f32
    %6 = vector.broadcast %cst_5 : f32 to vector<8x512xf32>
    %7 = arith.maximumf %5, %6 : vector<8x512xf32>
    %8 = arith.truncf %7 : vector<8x512xf32> to vector<8x512xbf16>
    %c0_6 = arith.constant 0 : index
    %c0_7 = arith.constant 0 : index
    %9 = vector.load %arg5[%c0_6, %c0_7] : memref<512x40xbf16, #tpu.memory_space<vmem>>, vector<512x40xbf16>
    %cst_8 = arith.constant dense<0.000000e+00> : vector<8x40xf32>
    %10 = tpu.matmul %8, %9, %cst_8 {dimension_numbers = #tpu.dot_dimension_numbers<[1], [0], [0], [1], [0, 0, 1, 1], [], []>} : vector<8x512xbf16>, vector<512x40xbf16>, vector<8x40xf32> -> vector<8x40xf32>
    %c0_9 = arith.constant 0 : index
    %c0_10 = arith.constant 0 : index
    %11 = vector.load %arg6[%c0_9, %c0_10] : memref<1x40xf32, #tpu.memory_space<vmem>>, vector<1x40xf32>
    %12 = vector.broadcast %11 : vector<1x40xf32> to vector<8x40xf32>
    %13 = arith.addf %10, %12 : vector<8x40xf32>
    %14 = vector.extract_strided_slice %13 {offsets = [0, 0], sizes = [8, 20], strides = [1, 1]} : vector<8x40xf32> to vector<8x20xf32>
    %15 = vector.extract_strided_slice %13 {offsets = [0, 20], sizes = [8, 20], strides = [1, 1]} : vector<8x40xf32> to vector<8x20xf32>
    %cst_11 = arith.constant 5.000000e-01 : f32
    %16 = vector.broadcast %cst_11 : f32 to vector<8x20xf32>
    %17 = arith.mulf %16, %15 : vector<8x20xf32>
    %18 = math.exp %17 : vector<8x20xf32>
    %c0_12 = arith.constant 0 : index
    %c0_13 = arith.constant 0 : index
    %19 = vector.load %arg2[%c0_12, %c0_13] : memref<8x20xf32, #tpu.memory_space<vmem>>, vector<8x20xf32>
    %20 = arith.mulf %19, %18 : vector<8x20xf32>
    %21 = arith.addf %14, %20 : vector<8x20xf32>
    %22 = arith.truncf %21 : vector<8x20xf32> to vector<8x20xbf16>
    %c0_14 = arith.constant 0 : index
    %c0_15 = arith.constant 0 : index
    %23 = vector.load %arg7[%c0_14, %c0_15] : memref<20x512xbf16, #tpu.memory_space<vmem>>, vector<20x512xbf16>
    %cst_16 = arith.constant dense<0.000000e+00> : vector<8x512xf32>
    %24 = tpu.matmul %22, %23, %cst_16 {dimension_numbers = #tpu.dot_dimension_numbers<[1], [0], [0], [1], [0, 0, 1, 1], [], []>} : vector<8x20xbf16>, vector<20x512xbf16>, vector<8x512xf32> -> vector<8x512xf32>
    %c0_17 = arith.constant 0 : index
    %c0_18 = arith.constant 0 : index
    %25 = vector.load %arg8[%c0_17, %c0_18] : memref<1x512xf32, #tpu.memory_space<vmem>>, vector<1x512xf32>
    %26 = vector.broadcast %25 : vector<1x512xf32> to vector<8x512xf32>
    %27 = arith.addf %24, %26 : vector<8x512xf32>
    %cst_19 = arith.constant 0.000000e+00 : f32
    %28 = vector.broadcast %cst_19 : f32 to vector<8x512xf32>
    %29 = arith.maximumf %27, %28 : vector<8x512xf32>
    %30 = arith.truncf %29 : vector<8x512xf32> to vector<8x512xbf16>
    %c0_20 = arith.constant 0 : index
    %c0_21 = arith.constant 0 : index
    %31 = vector.load %arg9[%c0_20, %c0_21] : memref<512x784xbf16, #tpu.memory_space<vmem>>, vector<512x784xbf16>
    %cst_22 = arith.constant dense<0.000000e+00> : vector<8x784xf32>
    %32 = tpu.matmul %30, %31, %cst_22 {dimension_numbers = #tpu.dot_dimension_numbers<[1], [0], [0], [1], [0, 0, 1, 1], [], []>} : vector<8x512xbf16>, vector<512x784xbf16>, vector<8x784xf32> -> vector<8x784xf32>
    %c0_23 = arith.constant 0 : index
    %c0_24 = arith.constant 0 : index
    %33 = vector.load %arg10[%c0_23, %c0_24] : memref<1x784xf32, #tpu.memory_space<vmem>>, vector<1x784xf32>
    %34 = vector.broadcast %33 : vector<1x784xf32> to vector<8x784xf32>
    %35 = arith.addf %32, %34 : vector<8x784xf32>
    %cst_25 = arith.constant 0.000000e+00 : f32
    %36 = vector.broadcast %cst_25 : f32 to vector<8x784xf32>
    %37 = arith.subf %36, %35 : vector<8x784xf32>
    %38 = math.exp %37 : vector<8x784xf32>
    %cst_26 = arith.constant 1.000000e+00 : f32
    %39 = vector.broadcast %cst_26 : f32 to vector<8x784xf32>
    %40 = arith.addf %39, %38 : vector<8x784xf32>
    %41 = tpu.reciprocal %40 {approx = true} : vector<8x784xf32> -> vector<8x784xf32>
    %c0_27 = arith.constant 0 : index
    %c0_28 = arith.constant 0 : index
    %42 = vector.load %arg11[%c0_27, %c0_28] : memref<8x784xf32, #tpu.memory_space<vmem>>, vector<8x784xf32>
    tpu.vector_store %arg11[%c0_27, %c0_28], %41 {strides = array<i32>} : memref<8x784xf32, #tpu.memory_space<vmem>>, vector<8x784xf32>,
    %c0_29 = arith.constant 0 : index
    %c0_30 = arith.constant 0 : index
    %43 = vector.load %arg12[%c0_29, %c0_30] : memref<8x40xf32, #tpu.memory_space<vmem>>, vector<8x40xf32>
    tpu.vector_store %arg12[%c0_29, %c0_30], %13 {strides = array<i32>} : memref<8x40xf32, #tpu.memory_space<vmem>>, vector<8x40xf32>,
    return
  }
  func.func @transform_0(%arg0: i32) -> (i32, i32) {
    %c0_i32 = arith.constant 0 : i32
    %c0_i32_0 = arith.constant 0 : i32
    return %arg0, %c0_i32 : i32, i32
  }
  func.func @transform_1(%arg0: i32) -> (i32, i32) {
    %c0_i32 = arith.constant 0 : i32
    %c0_i32_0 = arith.constant 0 : i32
    return %arg0, %c0_i32 : i32, i32
  }
  func.func @transform_2(%arg0: i32) -> (i32, i32) {
    %c0_i32 = arith.constant 0 : i32
    %c0_i32_0 = arith.constant 0 : i32
    %c0_i32_1 = arith.constant 0 : i32
    return %c0_i32, %c0_i32_0 : i32, i32
  }
  func.func @transform_3(%arg0: i32) -> (i32, i32) {
    %c0_i32 = arith.constant 0 : i32
    %c0_i32_0 = arith.constant 0 : i32
    %c0_i32_1 = arith.constant 0 : i32
    return %c0_i32, %c0_i32_0 : i32, i32
  }
  func.func @transform_4(%arg0: i32) -> (i32, i32) {
    %c0_i32 = arith.constant 0 : i32
    %c0_i32_0 = arith.constant 0 : i32
    %c0_i32_1 = arith.constant 0 : i32
    return %c0_i32, %c0_i32_0 : i32, i32
  }
  func.func @transform_5(%arg0: i32) -> (i32, i32) {
    %c0_i32 = arith.constant 0 : i32
    %c0_i32_0 = arith.constant 0 : i32
    %c0_i32_1 = arith.constant 0 : i32
    return %c0_i32, %c0_i32_0 : i32, i32
  }
  func.func @transform_6(%arg0: i32) -> (i32, i32) {
    %c0_i32 = arith.constant 0 : i32
    %c0_i32_0 = arith.constant 0 : i32
    %c0_i32_1 = arith.constant 0 : i32
    return %c0_i32, %c0_i32_0 : i32, i32
  }
  func.func @transform_7(%arg0: i32) -> (i32, i32) {
    %c0_i32 = arith.constant 0 : i32
    %c0_i32_0 = arith.constant 0 : i32
    %c0_i32_1 = arith.constant 0 : i32
    return %c0_i32, %c0_i32_0 : i32, i32
  }
  func.func @transform_8(%arg0: i32) -> (i32, i32) {
    %c0_i32 = arith.constant 0 : i32
    %c0_i32_0 = arith.constant 0 : i32
    %c0_i32_1 = arith.constant 0 : i32
    return %c0_i32, %c0_i32_0 : i32, i32
  }
  func.func @transform_9(%arg0: i32) -> (i32, i32) {
    %c0_i32 = arith.constant 0 : i32
    %c0_i32_0 = arith.constant 0 : i32
    %c0_i32_1 = arith.constant 0 : i32
    return %c0_i32, %c0_i32_0 : i32, i32
  }
  func.func @transform_10(%arg0: i32) -> (i32, i32) {
    %c0_i32 = arith.constant 0 : i32
    %c0_i32_0 = arith.constant 0 : i32
    return %arg0, %c0_i32 : i32, i32
  }
  func.func @transform_11(%arg0: i32) -> (i32, i32) {
    %c0_i32 = arith.constant 0 : i32
    %c0_i32_0 = arith.constant 0 : i32
    return %arg0, %c0_i32 : i32, i32
  }
}

</mosaic_0001>

<llo_original>
// kernel: tpu_custom_call.1
$region0: #{tpu_custom_call.1}
  #allocation0 [shape = 'u32[]', space=smem, size = 0x4, offset = 0x4, fixed_abs, tag = 'smem constant byte address 0x4 - core index']
  #allocation1 [shape = 'u32[144,128]{1,0:T(1,128)}', space=vmem, size = 0x12000, scoped, tag = 'internal scratch']
  %s0 = inlined_call_operand.vmem [shape: bf16[8,784], index: 0, kind: input, shape index: {}]
  %s1 = inlined_call_operand.vmem [shape: f32[8,20], index: 1, kind: input, shape index: {}]
  %s2 = inlined_call_operand.vmem [shape: bf16[784,512], index: 2, kind: input, shape index: {}]
  %s3 = inlined_call_operand.vmem [shape: f32[1,512], index: 3, kind: input, shape index: {}]
  %s4 = inlined_call_operand.vmem [shape: bf16[512,40], index: 4, kind: input, shape index: {}]
  %s5 = inlined_call_operand.vmem [shape: f32[1,40], index: 5, kind: input, shape index: {}]
  %s6 = inlined_call_operand.vmem [shape: bf16[20,512], index: 6, kind: input, shape index: {}]
  %s7 = inlined_call_operand.vmem [shape: f32[1,512], index: 7, kind: input, shape index: {}]
  %s8 = inlined_call_operand.vmem [shape: bf16[512,784], index: 8, kind: input, shape index: {}]
  %s9 = inlined_call_operand.vmem [shape: f32[1,784], index: 9, kind: input, shape index: {}]
  %s10 = inlined_call_operand.hbm [shape: f32[8,784], index: 10, kind: output, shape index: {0}]
  %s11 = inlined_call_operand.hbm [shape: f32[8,40], index: 11, kind: output, shape index: {1}]
  %12 = xla_tuple %s10, %s11
  %s13 = sld [smem:[#allocation0]]
  $region58: #{tpu_custom_call.1} parent=0
    _
  %s15 = ssub.s32 1, %s13
  %s16 = scalar_select 0, %s15, %s13
  $region1: #{tpu_custom_call.1} parent=0
    #allocation2 [shape = 'u8[28672]{0}', space=vmem, size = 0x7000, scoped, tag = 'output window, operand 0, single buffered']
    #allocation3 [shape = 's32[1]{0}', space=sflag, size = 0x4, scoped, tag = 'scoped memory for tpu_custom_call.1']
    #allocation4 [shape = 'u8[4096]{0}', space=vmem, size = 0x1000, scoped, tag = 'output window, operand 1, single buffered']
    #allocation5 [shape = 's32[1]{0}', space=sflag, size = 0x4, scoped, tag = 'scoped memory for tpu_custom_call.1']
    %17 = vsyncpa [#allocation3], 0
    %18 = vsyncpa [#allocation5], 0
    // Predicated region
    $region2: #{tpu_custom_call.1} parent=1 // pred_check
      _
    $region3: #{tpu_custom_call.1} parent=1 // pred_check_branch
      %20 = sbr.rel (0) target = $region5
    $region4: #{tpu_custom_call.1} parent=1 // pred_region
      _
    $region5: #{tpu_custom_call.1} parent=1 // pred_fallthru
      _
    // Predicated region
    $region6: #{tpu_custom_call.1} parent=1 // pred_check
      _
    $region7: #{tpu_custom_call.1} parent=1 // pred_check_branch
      %22 = sbr.rel (0) target = $region9
    $region8: #{tpu_custom_call.1} parent=1 // pred_region
      _
    $region9: #{tpu_custom_call.1} parent=1 // pred_fallthru
      _
    // Predicated region
    $region10: #{tpu_custom_call.1} parent=1 // pred_check
      _
    $region11: #{tpu_custom_call.1} parent=1 // pred_check_branch
      %24 = sbr.rel (0) target = $region13
    $region12: #{tpu_custom_call.1} parent=1 // pred_region
      _
    $region13: #{tpu_custom_call.1} parent=1 // pred_fallthru
      _
    // Predicated region
    $region14: #{tpu_custom_call.1} parent=1 // pred_check
      _
    $region15: #{tpu_custom_call.1} parent=1 // pred_check_branch
      %26 = sbr.rel (0) target = $region17
    $region16: #{tpu_custom_call.1} parent=1 // pred_region
      _
    $region17: #{tpu_custom_call.1} parent=1 // pred_fallthru
      _
    // Predicated region
    $region18: #{tpu_custom_call.1} parent=1 // pred_check
      _
    $region19: #{tpu_custom_call.1} parent=1 // pred_check_branch
      %28 = sbr.rel (0) target = $region21
    $region20: #{tpu_custom_call.1} parent=1 // pred_region
      _
    $region21: #{tpu_custom_call.1} parent=1 // pred_fallthru
      _
    // Predicated region
    $region22: #{tpu_custom_call.1} parent=1 // pred_check
      _
    $region23: #{tpu_custom_call.1} parent=1 // pred_check_branch
      %30 = sbr.rel (0) target = $region25
    $region24: #{tpu_custom_call.1} parent=1 // pred_region
      _
    $region25: #{tpu_custom_call.1} parent=1 // pred_fallthru
      _
    // Predicated region
    $region26: #{tpu_custom_call.1} parent=1 // pred_check
      _
    $region27: #{tpu_custom_call.1} parent=1 // pred_check_branch
      %32 = sbr.rel (0) target = $region29
    $region28: #{tpu_custom_call.1} parent=1 // pred_region
      _
    $region29: #{tpu_custom_call.1} parent=1 // pred_fallthru
      _
    // Predicated region
    $region30: #{tpu_custom_call.1} parent=1 // pred_check
      _
    $region31: #{tpu_custom_call.1} parent=1 // pred_check_branch
      %34 = sbr.rel (0) target = $region33
    $region32: #{tpu_custom_call.1} parent=1 // pred_region
      _
    $region33: #{tpu_custom_call.1} parent=1 // pred_fallthru
      _
    // Predicated region
    $region34: #{tpu_custom_call.1} parent=1 // pred_check
      _
    $region35: #{tpu_custom_call.1} parent=1 // pred_check_branch
      %36 = sbr.rel (0) target = $region37
    $region36: #{tpu_custom_call.1} parent=1 // pred_region
      _
    $region37: #{tpu_custom_call.1} parent=1 // pred_fallthru
      _
    // Predicated region
    $region38: #{tpu_custom_call.1} parent=1 // pred_check
      _
    $region39: #{tpu_custom_call.1} parent=1 // pred_check_branch
      %38 = sbr.rel (0) target = $region41
    $region40: #{tpu_custom_call.1} parent=1 // pred_region
      _
    $region41: #{tpu_custom_call.1} parent=1 // pred_fallthru
      _
    %v40 = vld [vmem:[%s0] sm:$0xff]
    %v41 = vld [vmem:[%s0 + $0x8] sm:$0xff]
    %v42 = vld [vmem:[%s0 + $0x10] sm:$0xff]
    %v43 = vld [vmem:[%s0 + $0x18] sm:$0xf]
    %v44 = vld [vmem:[%s2] sm:$0xff]
    %v45 = vld [vmem:[%s2 + $0x8] sm:$0xff]
    %v46 = vld [vmem:[%s2 + $0x10] sm:$0xff]
    %v47 = vld [vmem:[%s2 + $0x18] sm:$0xff]
    %v48 = vld [vmem:[%s2 + $0x20] sm:$0xff]
    %v49 = vld [vmem:[%s2 + $0x28] sm:$0xff]
    %v50 = vld [vmem:[%s2 + $0x30] sm:$0xff]
    %v51 = vld [vmem:[%s2 + $0x38] sm:$0xff]
    %v52 = vld [vmem:[%s2 + $0x40] sm:$0xff]
    %v53 = vld [vmem:[%s2 + $0x48] sm:$0xff]
    %v54 = vld [vmem:[%s2 + $0x50] sm:$0xff]
    %v55 = vld [vmem:[%s2 + $0x58] sm:$0xff]
    %v56 = vld [vmem:[%s2 + $0x60] sm:$0xff]
    %v57 = vld [vmem:[%s2 + $0x68] sm:$0xff]
    %v58 = vld [vmem:[%s2 + $0x70] sm:$0xff]
    %v59 = vld [vmem:[%s2 + $0x78] sm:$0xff]
    %v60 = vld [vmem:[%s2 + $0x80] sm:$0xff]
    %v61 = vld [vmem:[%s2 + $0x88] sm:$0xff]
    %v62 = vld [vmem:[%s2 + $0x90] sm:$0xff]
    %v63 = vld [vmem:[%s2 + $0x98] sm:$0xff]
    %v64 = vld [vmem:[%s2 + $0xa0] sm:$0xff]
    %v65 = vld [vmem:[%s2 + $0xa8] sm:$0xff]
    %v66 = vld [vmem:[%s2 + $0xb0] sm:$0xff]
    %v67 = vld [vmem:[%s2 + $0xb8] sm:$0xff]
    %v68 = vld [vmem:[%s2 + $0xc0] sm:$0xff]
    %v69 = vld [vmem:[%s2 + $0xc8] sm:$0xff]
    %v70 = vld [vmem:[%s2 + $0xd0] sm:$0xff]
    %v71 = vld [vmem:[%s2 + $0xd8] sm:$0xff]
    %v72 = vld [vmem:[%s2 + $0xe0] sm:$0xff]
    %v73 = vld [vmem:[%s2 + $0xe8] sm:$0xff]
    %v74 = vld [vmem:[%s2 + $0xf0] sm:$0xff]
    %v75 = vld [vmem:[%s2 + $0xf8] sm:$0xff]
    %v76 = vld [vmem:[%s2 + $0x100] sm:$0xff]
    %v77 = vld [vmem:[%s2 + $0x108] sm:$0xff]
    %v78 = vld [vmem:[%s2 + $0x110] sm:$0xff]
    %v79 = vld [vmem:[%s2 + $0x118] sm:$0xff]
    %v80 = vld [vmem:[%s2 + $0x120] sm:$0xff]
    %v81 = vld [vmem:[%s2 + $0x128] sm:$0xff]
    %v82 = vld [vmem:[%s2 + $0x130] sm:$0xff]
    %v83 = vld [vmem:[%s2 + $0x138] sm:$0xff]
    %v84 = vld [vmem:[%s2 + $0x140] sm:$0xff]
    %v85 = vld [vmem:[%s2 + $0x148] sm:$0xff]
    %v86 = vld [vmem:[%s2 + $0x150] sm:$0xff]
    %v87 = vld [vmem:[%s2 + $0x158] sm:$0xff]
    %v88 = vld [vmem:[%s2 + $0x160] sm:$0xff]
    %v89 = vld [vmem:[%s2 + $0x168] sm:$0xff]
    %v90 = vld [vmem:[%s2 + $0x170] sm:$0xff]
    %v91 = vld [vmem:[%s2 + $0x178] sm:$0xff]
    %v92 = vld [vmem:[%s2 + $0x180] sm:$0xff]
    %v93 = vld [vmem:[%s2 + $0x188] sm:$0xff]
    %v94 = vld [vmem:[%s2 + $0x190] sm:$0xff]
    %v95 = vld [vmem:[%s2 + $0x198] sm:$0xff]
    %v96 = vld [vmem:[%s2 + $0x1a0] sm:$0xff]
    %v97 = vld [vmem:[%s2 + $0x1a8] sm:$0xff]
    %v98 = vld [vmem:[%s2 + $0x1b0] sm:$0xff]
    %v99 = vld [vmem:[%s2 + $0x1b8] sm:$0xff]
    %v100 = vld [vmem:[%s2 + $0x1c0] sm:$0xff]
    %v101 = vld [vmem:[%s2 + $0x1c8] sm:$0xff]
    %v102 = vld [vmem:[%s2 + $0x1d0] sm:$0xff]
    %v103 = vld [vmem:[%s2 + $0x1d8] sm:$0xff]
    %v104 = vld [vmem:[%s2 + $0x1e0] sm:$0xff]
    %v105 = vld [vmem:[%s2 + $0x1e8] sm:$0xff]
    %v106 = vld [vmem:[%s2 + $0x1f0] sm:$0xff]
    %v107 = vld [vmem:[%s2 + $0x1f8] sm:$0xff]
    %v108 = vld [vmem:[%s2 + $0x200] sm:$0xff]
    %v109 = vld [vmem:[%s2 + $0x208] sm:$0xff]
    %v110 = vld [vmem:[%s2 + $0x210] sm:$0xff]
    %v111 = vld [vmem:[%s2 + $0x218] sm:$0xff]
    %v112 = vld [vmem:[%s2 + $0x220] sm:$0xff]
    %v113 = vld [vmem:[%s2 + $0x228] sm:$0xff]
    %v114 = vld [vmem:[%s2 + $0x230] sm:$0xff]
    %v115 = vld [vmem:[%s2 + $0x238] sm:$0xff]
    %v116 = vld [vmem:[%s2 + $0x240] sm:$0xff]
    %v117 = vld [vmem:[%s2 + $0x248] sm:$0xff]
    %v118 = vld [vmem:[%s2 + $0x250] sm:$0xff]
    %v119 = vld [vmem:[%s2 + $0x258] sm:$0xff]
    %v120 = vld [vmem:[%s2 + $0x260] sm:$0xff]
    %v121 = vld [vmem:[%s2 + $0x268] sm:$0xff]
    %v122 = vld [vmem:[%s2 + $0x270] sm:$0xff]
    %v123 = vld [vmem:[%s2 + $0x278] sm:$0xff]
    %v124 = vld [vmem:[%s2 + $0x280] sm:$0xff]
    %v125 = vld [vmem:[%s2 + $0x288] sm:$0xff]
    %v126 = vld [vmem:[%s2 + $0x290] sm:$0xff]
    %v127 = vld [vmem:[%s2 + $0x298] sm:$0xff]
    %v128 = vld [vmem:[%s2 + $0x2a0] sm:$0xff]
    %v129 = vld [vmem:[%s2 + $0x2a8] sm:$0xff]
    %v130 = vld [vmem:[%s2 + $0x2b0] sm:$0xff]
    %v131 = vld [vmem:[%s2 + $0x2b8] sm:$0xff]
    %v132 = vld [vmem:[%s2 + $0x2c0] sm:$0xff]
    %v133 = vld [vmem:[%s2 + $0x2c8] sm:$0xff]
    %v134 = vld [vmem:[%s2 + $0x2d0] sm:$0xff]
    %v135 = vld [vmem:[%s2 + $0x2d8] sm:$0xff]
    %v136 = vld [vmem:[%s2 + $0x2e0] sm:$0xff]
    %v137 = vld [vmem:[%s2 + $0x2e8] sm:$0xff]
    %v138 = vld [vmem:[%s2 + $0x2f0] sm:$0xff]
    %v139 = vld [vmem:[%s2 + $0x2f8] sm:$0xff]
    %v140 = vld [vmem:[%s2 + $0x300] sm:$0xff]
    %v141 = vld [vmem:[%s2 + $0x308] sm:$0xff]
    %v142 = vld [vmem:[%s2 + $0x310] sm:$0xff]
    %v143 = vld [vmem:[%s2 + $0x318] sm:$0xff]
    %v144 = vld [vmem:[%s2 + $0x320] sm:$0xff]
    %v145 = vld [vmem:[%s2 + $0x328] sm:$0xff]
    %v146 = vld [vmem:[%s2 + $0x330] sm:$0xff]
    %v147 = vld [vmem:[%s2 + $0x338] sm:$0xff]
    %v148 = vld [vmem:[%s2 + $0x340] sm:$0xff]
    %v149 = vld [vmem:[%s2 + $0x348] sm:$0xff]
    %v150 = vld [vmem:[%s2 + $0x350] sm:$0xff]
    %v151 = vld [vmem:[%s2 + $0x358] sm:$0xff]
    %v152 = vld [vmem:[%s2 + $0x360] sm:$0xff]
    %v153 = vld [vmem:[%s2 + $0x368] sm:$0xff]
    %v154 = vld [vmem:[%s2 + $0x370] sm:$0xff]
    %v155 = vld [vmem:[%s2 + $0x378] sm:$0xff]
    %v156 = vld [vmem:[%s2 + $0x380] sm:$0xff]
    %v157 = vld [vmem:[%s2 + $0x388] sm:$0xff]
    %v158 = vld [vmem:[%s2 + $0x390] sm:$0xff]
    %v159 = vld [vmem:[%s2 + $0x398] sm:$0xff]
    %v160 = vld [vmem:[%s2 + $0x3a0] sm:$0xff]
    %v161 = vld [vmem:[%s2 + $0x3a8] sm:$0xff]
    %v162 = vld [vmem:[%s2 + $0x3b0] sm:$0xff]
    %v163 = vld [vmem:[%s2 + $0x3b8] sm:$0xff]
    %v164 = vld [vmem:[%s2 + $0x3c0] sm:$0xff]
    %v165 = vld [vmem:[%s2 + $0x3c8] sm:$0xff]
    %v166 = vld [vmem:[%s2 + $0x3d0] sm:$0xff]
    %v167 = vld [vmem:[%s2 + $0x3d8] sm:$0xff]
    %v168 = vld [vmem:[%s2 + $0x3e0] sm:$0xff]
    %v169 = vld [vmem:[%s2 + $0x3e8] sm:$0xff]
    %v170 = vld [vmem:[%s2 + $0x3f0] sm:$0xff]
    %v171 = vld [vmem:[%s2 + $0x3f8] sm:$0xff]
    %v172 = vld [vmem:[%s2 + $0x400] sm:$0xff]
    %v173 = vld [vmem:[%s2 + $0x408] sm:$0xff]
    %v174 = vld [vmem:[%s2 + $0x410] sm:$0xff]
    %v175 = vld [vmem:[%s2 + $0x418] sm:$0xff]
    %v176 = vld [vmem:[%s2 + $0x420] sm:$0xff]
    %v177 = vld [vmem:[%s2 + $0x428] sm:$0xff]
    %v178 = vld [vmem:[%s2 + $0x430] sm:$0xff]
    %v179 = vld [vmem:[%s2 + $0x438] sm:$0xff]
    %v180 = vld [vmem:[%s2 + $0x440] sm:$0xff]
    %v181 = vld [vmem:[%s2 + $0x448] sm:$0xff]
    %v182 = vld [vmem:[%s2 + $0x450] sm:$0xff]
    %v183 = vld [vmem:[%s2 + $0x458] sm:$0xff]
    %v184 = vld [vmem:[%s2 + $0x460] sm:$0xff]
    %v185 = vld [vmem:[%s2 + $0x468] sm:$0xff]
    %v186 = vld [vmem:[%s2 + $0x470] sm:$0xff]
    %v187 = vld [vmem:[%s2 + $0x478] sm:$0xff]
    %v188 = vld [vmem:[%s2 + $0x480] sm:$0xff]
    %v189 = vld [vmem:[%s2 + $0x488] sm:$0xff]
    %v190 = vld [vmem:[%s2 + $0x490] sm:$0xff]
    %v191 = vld [vmem:[%s2 + $0x498] sm:$0xff]
    %v192 = vld [vmem:[%s2 + $0x4a0] sm:$0xff]
    %v193 = vld [vmem:[%s2 + $0x4a8] sm:$0xff]
    %v194 = vld [vmem:[%s2 + $0x4b0] sm:$0xff]
    %v195 = vld [vmem:[%s2 + $0x4b8] sm:$0xff]
    %v196 = vld [vmem:[%s2 + $0x4c0] sm:$0xff]
    %v197 = vld [vmem:[%s2 + $0x4c8] sm:$0xff]
    %v198 = vld [vmem:[%s2 + $0x4d0] sm:$0xff]
    %v199 = vld [vmem:[%s2 + $0x4d8] sm:$0xff]
    %v200 = vld [vmem:[%s2 + $0x4e0] sm:$0xff]
    %v201 = vld [vmem:[%s2 + $0x4e8] sm:$0xff]
    %v202 = vld [vmem:[%s2 + $0x4f0] sm:$0xff]
    %v203 = vld [vmem:[%s2 + $0x4f8] sm:$0xff]
    %v204 = vld [vmem:[%s2 + $0x500] sm:$0xff]
    %v205 = vld [vmem:[%s2 + $0x508] sm:$0xff]
    %v206 = vld [vmem:[%s2 + $0x510] sm:$0xff]
    %v207 = vld [vmem:[%s2 + $0x518] sm:$0xff]
    %v208 = vld [vmem:[%s2 + $0x520] sm:$0xff]
    %v209 = vld [vmem:[%s2 + $0x528] sm:$0xff]
    %v210 = vld [vmem:[%s2 + $0x530] sm:$0xff]
    %v211 = vld [vmem:[%s2 + $0x538] sm:$0xff]
    %v212 = vld [vmem:[%s2 + $0x540] sm:$0xff]
    %v213 = vld [vmem:[%s2 + $0x548] sm:$0xff]
    %v214 = vld [vmem:[%s2 + $0x550] sm:$0xff]
    %v215 = vld [vmem:[%s2 + $0x558] sm:$0xff]
    %v216 = vld [vmem:[%s2 + $0x560] sm:$0xff]
    %v217 = vld [vmem:[%s2 + $0x568] sm:$0xff]
    %v218 = vld [vmem:[%s2 + $0x570] sm:$0xff]
    %v219 = vld [vmem:[%s2 + $0x578] sm:$0xff]
    %v220 = vld [vmem:[%s2 + $0x580] sm:$0xff]
    %v221 = vld [vmem:[%s2 + $0x588] sm:$0xff]
    %v222 = vld [vmem:[%s2 + $0x590] sm:$0xff]
    %v223 = vld [vmem:[%s2 + $0x598] sm:$0xff]
    %v224 = vld [vmem:[%s2 + $0x5a0] sm:$0xff]
    %v225 = vld [vmem:[%s2 + $0x5a8] sm:$0xff]
    %v226 = vld [vmem:[%s2 + $0x5b0] sm:$0xff]
    %v227 = vld [vmem:[%s2 + $0x5b8] sm:$0xff]
    %v228 = vld [vmem:[%s2 + $0x5c0] sm:$0xff]
    %v229 = vld [vmem:[%s2 + $0x5c8] sm:$0xff]
    %v230 = vld [vmem:[%s2 + $0x5d0] sm:$0xff]
    %v231 = vld [vmem:[%s2 + $0x5d8] sm:$0xff]
    %v232 = vld [vmem:[%s2 + $0x5e0] sm:$0xff]
    %v233 = vld [vmem:[%s2 + $0x5e8] sm:$0xff]
    %v234 = vld [vmem:[%s2 + $0x5f0] sm:$0xff]
    %v235 = vld [vmem:[%s2 + $0x5f8] sm:$0xff]
    %v236 = vld [vmem:[%s2 + $0x600] sm:$0xff]
    %v237 = vld [vmem:[%s2 + $0x608] sm:$0xff]
    %v238 = vld [vmem:[%s2 + $0x610] sm:$0xff]
    %v239 = vld [vmem:[%s2 + $0x618] sm:$0xff]
    %v240 = vld [vmem:[%s3] sm:$0xf]
    %v242 = vlaneseq
    %v243 = vshrl.u32 %v242, 7
    %v244 = vsub.s32 0, %v243
    %v245 = vrot.slane %v240, %v244
    %v246 = vlaneseq
    %v247 = vshrl.u32 %v246, 7
    %v248 = vsub.s32 1, %v247
    %v249 = vrot.slane %v240, %v248
    %v250 = vlaneseq
    %v251 = vshrl.u32 %v250, 7
    %v252 = vsub.s32 2, %v251
    %v253 = vrot.slane %v240, %v252
    %v254 = vlaneseq
    %v255 = vshrl.u32 %v254, 7
    %v256 = vsub.s32 3, %v255
    %v257 = vrot.slane %v240, %v256
    %v266 = vunpack.c.l.b16 %v40
    %v267 = vunpack.c.h.b16 %v40
    %v268 = vunpack.c.l.b16 %v41
    %v269 = vunpack.c.h.b16 %v41
    %v270 = vunpack.c.l.b16 %v42
    %v271 = vunpack.c.h.b16 %v42
    %v272 = vunpack.c.l.b16 %v43
    %v273 = vpack.c.b16 %v266, %v266
    %v274 = vpack.c.b16 %v267, %v267
    %v275 = vpack.c.b16 %v268, %v268
    %v276 = vpack.c.b16 %v269, %v269
    %v277 = vpack.c.b16 %v270, %v270
    %v278 = vpack.c.b16 %v271, %v271
    %v279 = vpack.c.b16 %v272, %v272
    %v482 = vunpack.c.l.b16 %v44
    %v483 = vunpack.c.h.b16 %v44
    %v484 = vunpack.c.l.b16 %v45
    %v485 = vunpack.c.h.b16 %v45
    %v486 = vunpack.c.l.b16 %v46
    %v487 = vunpack.c.h.b16 %v46
    %v488 = vunpack.c.l.b16 %v47
    %v489 = vunpack.c.h.b16 %v47
    %v490 = vunpack.c.l.b16 %v48
    %v491 = vunpack.c.h.b16 %v48
    %v492 = vunpack.c.l.b16 %v49
    %v493 = vunpack.c.h.b16 %v49
    %v494 = vunpack.c.l.b16 %v50
    %v495 = vunpack.c.h.b16 %v50
    %v496 = vunpack.c.l.b16 %v51
    %v497 = vunpack.c.h.b16 %v51
    %v498 = vunpack.c.l.b16 %v52
    %v499 = vunpack.c.h.b16 %v52
    %v500 = vunpack.c.l.b16 %v53
    %v501 = vunpack.c.h.b16 %v53
    %v502 = vunpack.c.l.b16 %v54
    %v503 = vunpack.c.h.b16 %v54
    %v504 = vunpack.c.l.b16 %v55
    %v505 = vunpack.c.h.b16 %v55
    %v506 = vunpack.c.l.b16 %v56
    %v507 = vunpack.c.h.b16 %v56
    %v508 = vunpack.c.l.b16 %v57
    %v509 = vunpack.c.h.b16 %v57
    %v510 = vunpack.c.l.b16 %v58
    %v511 = vunpack.c.h.b16 %v58
    %v512 = vunpack.c.l.b16 %v59
    %v513 = vunpack.c.h.b16 %v59
    %v514 = vunpack.c.l.b16 %v60
    %v515 = vunpack.c.h.b16 %v60
    %v516 = vunpack.c.l.b16 %v61
    %v517 = vunpack.c.h.b16 %v61
    %v518 = vunpack.c.l.b16 %v62
    %v519 = vunpack.c.h.b16 %v62
    %v520 = vunpack.c.l.b16 %v63
    %v521 = vunpack.c.h.b16 %v63
    %v522 = vunpack.c.l.b16 %v64
    %v523 = vunpack.c.h.b16 %v64
    %v524 = vunpack.c.l.b16 %v65
    %v525 = vunpack.c.h.b16 %v65
    %v526 = vunpack.c.l.b16 %v66
    %v527 = vunpack.c.h.b16 %v66
    %v528 = vunpack.c.l.b16 %v67
    %v529 = vunpack.c.h.b16 %v67
    %v530 = vunpack.c.l.b16 %v68
    %v531 = vunpack.c.h.b16 %v68
    %v532 = vunpack.c.l.b16 %v69
    %v533 = vunpack.c.h.b16 %v69
    %v534 = vunpack.c.l.b16 %v70
    %v535 = vunpack.c.h.b16 %v70
    %v536 = vunpack.c.l.b16 %v71
    %v537 = vunpack.c.h.b16 %v71
    %v538 = vunpack.c.l.b16 %v72
    %v539 = vunpack.c.h.b16 %v72
    %v540 = vunpack.c.l.b16 %v73
    %v541 = vunpack.c.h.b16 %v73
    %v542 = vunpack.c.l.b16 %v74
    %v543 = vunpack.c.h.b16 %v74
    %v544 = vunpack.c.l.b16 %v75
    %v545 = vunpack.c.h.b16 %v75
    %v546 = vunpack.c.l.b16 %v76
    %v547 = vunpack.c.h.b16 %v76
    %v548 = vunpack.c.l.b16 %v77
    %v549 = vunpack.c.h.b16 %v77
    %v550 = vunpack.c.l.b16 %v78
    %v551 = vunpack.c.h.b16 %v78
    %v552 = vunpack.c.l.b16 %v79
    %v553 = vunpack.c.h.b16 %v79
    %v554 = vunpack.c.l.b16 %v80
    %v555 = vunpack.c.h.b16 %v80
    %v556 = vunpack.c.l.b16 %v81
    %v557 = vunpack.c.h.b16 %v81
    %v558 = vunpack.c.l.b16 %v82
    %v559 = vunpack.c.h.b16 %v82
    %v560 = vunpack.c.l.b16 %v83
    %v561 = vunpack.c.h.b16 %v83
    %v562 = vunpack.c.l.b16 %v84
    %v563 = vunpack.c.h.b16 %v84
    %v564 = vunpack.c.l.b16 %v85
    %v565 = vunpack.c.h.b16 %v85
    %v566 = vunpack.c.l.b16 %v86
    %v567 = vunpack.c.h.b16 %v86
    %v568 = vunpack.c.l.b16 %v87
    %v569 = vunpack.c.h.b16 %v87
    %v570 = vunpack.c.l.b16 %v88
    %v571 = vunpack.c.h.b16 %v88
    %v572 = vunpack.c.l.b16 %v89
    %v573 = vunpack.c.h.b16 %v89
    %v574 = vunpack.c.l.b16 %v90
    %v575 = vunpack.c.h.b16 %v90
    %v576 = vunpack.c.l.b16 %v91
    %v577 = vunpack.c.h.b16 %v91
    %v578 = vunpack.c.l.b16 %v92
    %v579 = vunpack.c.h.b16 %v92
    %v580 = vunpack.c.l.b16 %v93
    %v581 = vunpack.c.h.b16 %v93
    %v582 = vunpack.c.l.b16 %v94
    %v583 = vunpack.c.h.b16 %v94
    %v584 = vunpack.c.l.b16 %v95
    %v585 = vunpack.c.h.b16 %v95
    %v586 = vunpack.c.l.b16 %v96
    %v587 = vunpack.c.h.b16 %v96
    %v588 = vunpack.c.l.b16 %v97
    %v589 = vunpack.c.h.b16 %v97
    %v590 = vunpack.c.l.b16 %v98
    %v591 = vunpack.c.h.b16 %v98
    %v592 = vunpack.c.l.b16 %v99
    %v593 = vunpack.c.h.b16 %v99
    %v594 = vunpack.c.l.b16 %v100
    %v595 = vunpack.c.h.b16 %v100
    %v596 = vunpack.c.l.b16 %v101
    %v597 = vunpack.c.h.b16 %v101
    %v598 = vunpack.c.l.b16 %v102
    %v599 = vunpack.c.h.b16 %v102
    %v600 = vunpack.c.l.b16 %v103
    %v601 = vunpack.c.h.b16 %v103
    %v602 = vunpack.c.l.b16 %v104
    %v603 = vunpack.c.h.b16 %v104
    %v604 = vunpack.c.l.b16 %v105
    %v605 = vunpack.c.h.b16 %v105
    %v606 = vunpack.c.l.b16 %v106
    %v607 = vunpack.c.h.b16 %v106
    %v608 = vunpack.c.l.b16 %v107
    %v609 = vunpack.c.h.b16 %v107
    %v610 = vunpack.c.l.b16 %v108
    %v611 = vunpack.c.h.b16 %v108
    %v612 = vunpack.c.l.b16 %v109
    %v613 = vunpack.c.h.b16 %v109
    %v614 = vunpack.c.l.b16 %v110
    %v615 = vunpack.c.h.b16 %v110
    %v616 = vunpack.c.l.b16 %v111
    %v617 = vunpack.c.h.b16 %v111
    %v618 = vunpack.c.l.b16 %v112
    %v619 = vunpack.c.h.b16 %v112
    %v620 = vunpack.c.l.b16 %v113
    %v621 = vunpack.c.h.b16 %v113
    %v622 = vunpack.c.l.b16 %v114
    %v623 = vunpack.c.h.b16 %v114
    %v624 = vunpack.c.l.b16 %v115
    %v625 = vunpack.c.h.b16 %v115
    %v626 = vunpack.c.l.b16 %v116
    %v627 = vunpack.c.h.b16 %v116
    %v628 = vunpack.c.l.b16 %v117
    %v629 = vunpack.c.h.b16 %v117
    %v630 = vunpack.c.l.b16 %v118
    %v631 = vunpack.c.h.b16 %v118
    %v632 = vunpack.c.l.b16 %v119
    %v633 = vunpack.c.h.b16 %v119
    %v634 = vunpack.c.l.b16 %v120
    %v635 = vunpack.c.h.b16 %v120
    %v636 = vunpack.c.l.b16 %v121
    %v637 = vunpack.c.h.b16 %v121
    %v638 = vunpack.c.l.b16 %v122
    %v639 = vunpack.c.h.b16 %v122
    %v640 = vunpack.c.l.b16 %v123
    %v641 = vunpack.c.h.b16 %v123
    %v642 = vunpack.c.l.b16 %v124
    %v643 = vunpack.c.h.b16 %v124
    %v644 = vunpack.c.l.b16 %v125
    %v645 = vunpack.c.h.b16 %v125
    %v646 = vunpack.c.l.b16 %v126
    %v647 = vunpack.c.h.b16 %v126
    %v648 = vunpack.c.l.b16 %v127
    %v649 = vunpack.c.h.b16 %v127
    %v650 = vunpack.c.l.b16 %v128
    %v651 = vunpack.c.h.b16 %v128
    %v652 = vunpack.c.l.b16 %v129
    %v653 = vunpack.c.h.b16 %v129
    %v654 = vunpack.c.l.b16 %v130
    %v655 = vunpack.c.h.b16 %v130
    %v656 = vunpack.c.l.b16 %v131
    %v657 = vunpack.c.h.b16 %v131
    %v658 = vunpack.c.l.b16 %v132
    %v659 = vunpack.c.h.b16 %v132
    %v660 = vunpack.c.l.b16 %v133
    %v661 = vunpack.c.h.b16 %v133
    %v662 = vunpack.c.l.b16 %v134
    %v663 = vunpack.c.h.b16 %v134
    %v664 = vunpack.c.l.b16 %v135
    %v665 = vunpack.c.h.b16 %v135
    %v666 = vunpack.c.l.b16 %v136
    %v667 = vunpack.c.h.b16 %v136
    %v668 = vunpack.c.l.b16 %v137
    %v669 = vunpack.c.h.b16 %v137
    %v670 = vunpack.c.l.b16 %v138
    %v671 = vunpack.c.h.b16 %v138
    %v672 = vunpack.c.l.b16 %v139
    %v673 = vunpack.c.h.b16 %v139
    %v674 = vunpack.c.l.b16 %v140
    %v675 = vunpack.c.h.b16 %v140
    %v676 = vunpack.c.l.b16 %v141
    %v677 = vunpack.c.h.b16 %v141
    %v678 = vunpack.c.l.b16 %v142
    %v679 = vunpack.c.h.b16 %v142
    %v680 = vunpack.c.l.b16 %v143
    %v681 = vunpack.c.h.b16 %v143
    %v682 = vunpack.c.l.b16 %v144
    %v683 = vunpack.c.h.b16 %v144
    %v684 = vunpack.c.l.b16 %v145
    %v685 = vunpack.c.h.b16 %v145
    %v686 = vunpack.c.l.b16 %v146
    %v687 = vunpack.c.h.b16 %v146
    %v688 = vunpack.c.l.b16 %v147
    %v689 = vunpack.c.h.b16 %v147
    %v690 = vunpack.c.l.b16 %v148
    %v691 = vunpack.c.h.b16 %v148
    %v692 = vunpack.c.l.b16 %v149
    %v693 = vunpack.c.h.b16 %v149
    %v694 = vunpack.c.l.b16 %v150
    %v695 = vunpack.c.h.b16 %v150
    %v696 = vunpack.c.l.b16 %v151
    %v697 = vunpack.c.h.b16 %v151
    %v698 = vunpack.c.l.b16 %v152
    %v699 = vunpack.c.h.b16 %v152
    %v700 = vunpack.c.l.b16 %v153
    %v701 = vunpack.c.h.b16 %v153
    %v702 = vunpack.c.l.b16 %v154
    %v703 = vunpack.c.h.b16 %v154
    %v704 = vunpack.c.l.b16 %v155
    %v705 = vunpack.c.h.b16 %v155
    %v706 = vunpack.c.l.b16 %v156
    %v707 = vunpack.c.h.b16 %v156
    %v708 = vunpack.c.l.b16 %v157
    %v709 = vunpack.c.h.b16 %v157
    %v710 = vunpack.c.l.b16 %v158
    %v711 = vunpack.c.h.b16 %v158
    %v712 = vunpack.c.l.b16 %v159
    %v713 = vunpack.c.h.b16 %v159
    %v714 = vunpack.c.l.b16 %v160
    %v715 = vunpack.c.h.b16 %v160
    %v716 = vunpack.c.l.b16 %v161
    %v717 = vunpack.c.h.b16 %v161
    %v718 = vunpack.c.l.b16 %v162
    %v719 = vunpack.c.h.b16 %v162
    %v720 = vunpack.c.l.b16 %v163
    %v721 = vunpack.c.h.b16 %v163
    %v722 = vunpack.c.l.b16 %v164
    %v723 = vunpack.c.h.b16 %v164
    %v724 = vunpack.c.l.b16 %v165
    %v725 = vunpack.c.h.b16 %v165
    %v726 = vunpack.c.l.b16 %v166
    %v727 = vunpack.c.h.b16 %v166
    %v728 = vunpack.c.l.b16 %v167
    %v729 = vunpack.c.h.b16 %v167
    %v730 = vunpack.c.l.b16 %v168
    %v731 = vunpack.c.h.b16 %v168
    %v732 = vunpack.c.l.b16 %v169
    %v733 = vunpack.c.h.b16 %v169
    %v734 = vunpack.c.l.b16 %v170
    %v735 = vunpack.c.h.b16 %v170
    %v736 = vunpack.c.l.b16 %v171
    %v737 = vunpack.c.h.b16 %v171
    %v738 = vunpack.c.l.b16 %v172
    %v739 = vunpack.c.h.b16 %v172
    %v740 = vunpack.c.l.b16 %v173
    %v741 = vunpack.c.h.b16 %v173
    %v742 = vunpack.c.l.b16 %v174
    %v743 = vunpack.c.h.b16 %v174
    %v744 = vunpack.c.l.b16 %v175
    %v745 = vunpack.c.h.b16 %v175
    %v746 = vunpack.c.l.b16 %v176
    %v747 = vunpack.c.h.b16 %v176
    %v748 = vunpack.c.l.b16 %v177
    %v749 = vunpack.c.h.b16 %v177
    %v750 = vunpack.c.l.b16 %v178
    %v751 = vunpack.c.h.b16 %v178
    %v752 = vunpack.c.l.b16 %v179
    %v753 = vunpack.c.h.b16 %v179
    %v754 = vunpack.c.l.b16 %v180
    %v755 = vunpack.c.h.b16 %v180
    %v756 = vunpack.c.l.b16 %v181
    %v757 = vunpack.c.h.b16 %v181
    %v758 = vunpack.c.l.b16 %v182
    %v759 = vunpack.c.h.b16 %v182
    %v760 = vunpack.c.l.b16 %v183
    %v761 = vunpack.c.h.b16 %v183
    %v762 = vunpack.c.l.b16 %v184
    %v763 = vunpack.c.h.b16 %v184
    %v764 = vunpack.c.l.b16 %v185
    %v765 = vunpack.c.h.b16 %v185
    %v766 = vunpack.c.l.b16 %v186
    %v767 = vunpack.c.h.b16 %v186
    %v768 = vunpack.c.l.b16 %v187
    %v769 = vunpack.c.h.b16 %v187
    %v770 = vunpack.c.l.b16 %v188
    %v771 = vunpack.c.h.b16 %v188
    %v772 = vunpack.c.l.b16 %v189
    %v773 = vunpack.c.h.b16 %v189
    %v774 = vunpack.c.l.b16 %v190
    %v775 = vunpack.c.h.b16 %v190
    %v776 = vunpack.c.l.b16 %v191
    %v777 = vunpack.c.h.b16 %v191
    %v778 = vunpack.c.l.b16 %v192
    %v779 = vunpack.c.h.b16 %v192
    %v780 = vunpack.c.l.b16 %v193
    %v781 = vunpack.c.h.b16 %v193
    %v782 = vunpack.c.l.b16 %v194
    %v783 = vunpack.c.h.b16 %v194
    %v784 = vunpack.c.l.b16 %v195
    %v785 = vunpack.c.h.b16 %v195
    %v786 = vunpack.c.l.b16 %v196
    %v787 = vunpack.c.h.b16 %v196
    %v788 = vunpack.c.l.b16 %v197
    %v789 = vunpack.c.h.b16 %v197
    %v790 = vunpack.c.l.b16 %v198
    %v791 = vunpack.c.h.b16 %v198
    %v792 = vunpack.c.l.b16 %v199
    %v793 = vunpack.c.h.b16 %v199
    %v794 = vunpack.c.l.b16 %v200
    %v795 = vunpack.c.h.b16 %v200
    %v796 = vunpack.c.l.b16 %v201
    %v797 = vunpack.c.h.b16 %v201
    %v798 = vunpack.c.l.b16 %v202
    %v799 = vunpack.c.h.b16 %v202
    %v800 = vunpack.c.l.b16 %v203
    %v801 = vunpack.c.h.b16 %v203
    %v802 = vunpack.c.l.b16 %v204
    %v803 = vunpack.c.h.b16 %v204
    %v804 = vunpack.c.l.b16 %v205
    %v805 = vunpack.c.h.b16 %v205
    %v806 = vunpack.c.l.b16 %v206
    %v807 = vunpack.c.h.b16 %v206
    %v808 = vunpack.c.l.b16 %v207
    %v809 = vunpack.c.h.b16 %v207
    %v810 = vunpack.c.l.b16 %v208
    %v811 = vunpack.c.h.b16 %v208
    %v812 = vunpack.c.l.b16 %v209
    %v813 = vunpack.c.h.b16 %v209
    %v814 = vunpack.c.l.b16 %v210
    %v815 = vunpack.c.h.b16 %v210
    %v816 = vunpack.c.l.b16 %v211
    %v817 = vunpack.c.h.b16 %v211
    %v818 = vunpack.c.l.b16 %v212
    %v819 = vunpack.c.h.b16 %v212
    %v820 = vunpack.c.l.b16 %v213
    %v821 = vunpack.c.h.b16 %v213
    %v822 = vunpack.c.l.b16 %v214
    %v823 = vunpack.c.h.b16 %v214
    %v824 = vunpack.c.l.b16 %v215
    %v825 = vunpack.c.h.b16 %v215
    %v826 = vunpack.c.l.b16 %v216
    %v827 = vunpack.c.h.b16 %v216
    %v828 = vunpack.c.l.b16 %v217
    %v829 = vunpack.c.h.b16 %v217
    %v830 = vunpack.c.l.b16 %v218
    %v831 = vunpack.c.h.b16 %v218
    %v832 = vunpack.c.l.b16 %v219
    %v833 = vunpack.c.h.b16 %v219
    %v834 = vunpack.c.l.b16 %v220
    %v835 = vunpack.c.h.b16 %v220
    %v836 = vunpack.c.l.b16 %v221
    %v837 = vunpack.c.h.b16 %v221
    %v838 = vunpack.c.l.b16 %v222
    %v839 = vunpack.c.h.b16 %v222
    %v840 = vunpack.c.l.b16 %v223
    %v841 = vunpack.c.h.b16 %v223
    %v842 = vunpack.c.l.b16 %v224
    %v843 = vunpack.c.h.b16 %v224
    %v844 = vunpack.c.l.b16 %v225
    %v845 = vunpack.c.h.b16 %v225
    %v846 = vunpack.c.l.b16 %v226
    %v847 = vunpack.c.h.b16 %v226
    %v848 = vunpack.c.l.b16 %v227
    %v849 = vunpack.c.h.b16 %v227
    %v850 = vunpack.c.l.b16 %v228
    %v851 = vunpack.c.h.b16 %v228
    %v852 = vunpack.c.l.b16 %v229
    %v853 = vunpack.c.h.b16 %v229
    %v854 = vunpack.c.l.b16 %v230
    %v855 = vunpack.c.h.b16 %v230
    %v856 = vunpack.c.l.b16 %v231
    %v857 = vunpack.c.h.b16 %v231
    %v858 = vunpack.c.l.b16 %v232
    %v859 = vunpack.c.h.b16 %v232
    %v860 = vunpack.c.l.b16 %v233
    %v861 = vunpack.c.h.b16 %v233
    %v862 = vunpack.c.l.b16 %v234
    %v863 = vunpack.c.h.b16 %v234
    %v864 = vunpack.c.l.b16 %v235
    %v865 = vunpack.c.h.b16 %v235
    %v866 = vunpack.c.l.b16 %v236
    %v867 = vunpack.c.h.b16 %v236
    %v868 = vunpack.c.l.b16 %v237
    %v869 = vunpack.c.h.b16 %v237
    %v870 = vunpack.c.l.b16 %v238
    %v871 = vunpack.c.h.b16 %v238
    %v872 = vunpack.c.l.b16 %v239
    %v873 = vunpack.c.h.b16 %v239
    %v874 = vpack.c.b16 %v486, %v482
    %v875 = vpack.c.b16 %v487, %v483
    %v876 = vpack.c.b16 %v488, %v484
    %v877 = vpack.c.b16 %v489, %v485
    %v878 = vpack.c.b16 %v494, %v490
    %v879 = vpack.c.b16 %v495, %v491
    %v880 = vpack.c.b16 %v496, %v492
    %v881 = vpack.c.b16 %v497, %v493
    %v882 = vpack.c.b16 %v502, %v498
    %v883 = vpack.c.b16 %v503, %v499
    %v884 = vpack.c.b16 %v504, %v500
    %v885 = vpack.c.b16 %v505, %v501
    %v886 = vpack.c.b16 %v510, %v506
    %v887 = vpack.c.b16 %v511, %v507
    %v888 = vpack.c.b16 %v512, %v508
    %v889 = vpack.c.b16 %v513, %v509
    %v890 = vpack.c.b16 %v518, %v514
    %v891 = vpack.c.b16 %v519, %v515
    %v892 = vpack.c.b16 %v520, %v516
    %v893 = vpack.c.b16 %v521, %v517
    %v894 = vpack.c.b16 %v526, %v522
    %v895 = vpack.c.b16 %v527, %v523
    %v896 = vpack.c.b16 %v528, %v524
    %v897 = vpack.c.b16 %v529, %v525
    %v898 = vpack.c.b16 %v534, %v530
    %v899 = vpack.c.b16 %v535, %v531
    %v900 = vpack.c.b16 %v536, %v532
    %v901 = vpack.c.b16 %v537, %v533
    %v902 = vpack.c.b16 %v542, %v538
    %v903 = vpack.c.b16 %v543, %v539
    %v904 = vpack.c.b16 %v544, %v540
    %v905 = vpack.c.b16 %v545, %v541
    %v906 = vpack.c.b16 %v550, %v546
    %v907 = vpack.c.b16 %v551, %v547
    %v908 = vpack.c.b16 %v552, %v548
    %v909 = vpack.c.b16 %v553, %v549
    %v910 = vpack.c.b16 %v558, %v554
    %v911 = vpack.c.b16 %v559, %v555
    %v912 = vpack.c.b16 %v560, %v556
    %v913 = vpack.c.b16 %v561, %v557
    %v914 = vpack.c.b16 %v566, %v562
    %v915 = vpack.c.b16 %v567, %v563
    %v916 = vpack.c.b16 %v568, %v564
    %v917 = vpack.c.b16 %v569, %v565
    %v918 = vpack.c.b16 %v574, %v570
    %v919 = vpack.c.b16 %v575, %v571
    %v920 = vpack.c.b16 %v576, %v572
    %v921 = vpack.c.b16 %v577, %v573
    %v922 = vpack.c.b16 %v582, %v578
    %v923 = vpack.c.b16 %v583, %v579
    %v924 = vpack.c.b16 %v584, %v580
    %v925 = vpack.c.b16 %v585, %v581
    %v926 = vpack.c.b16 %v590, %v586
    %v927 = vpack.c.b16 %v591, %v587
    %v928 = vpack.c.b16 %v592, %v588
    %v929 = vpack.c.b16 %v593, %v589
    %v930 = vpack.c.b16 %v598, %v594
    %v931 = vpack.c.b16 %v599, %v595
    %v932 = vpack.c.b16 %v600, %v596
    %v933 = vpack.c.b16 %v601, %v597
    %v934 = vpack.c.b16 %v606, %v602
    %v935 = vpack.c.b16 %v607, %v603
    %v936 = vpack.c.b16 %v608, %v604
    %v937 = vpack.c.b16 %v609, %v605
    %v938 = vpack.c.b16 %v614, %v610
    %v939 = vpack.c.b16 %v615, %v611
    %v940 = vpack.c.b16 %v616, %v612
    %v941 = vpack.c.b16 %v617, %v613
    %v942 = vpack.c.b16 %v622, %v618
    %v943 = vpack.c.b16 %v623, %v619
    %v944 = vpack.c.b16 %v624, %v620
    %v945 = vpack.c.b16 %v625, %v621
    %v946 = vpack.c.b16 %v630, %v626
    %v947 = vpack.c.b16 %v631, %v627
    %v948 = vpack.c.b16 %v632, %v628
    %v949 = vpack.c.b16 %v633, %v629
    %v950 = vpack.c.b16 %v638, %v634
    %v951 = vpack.c.b16 %v639, %v635
    %v952 = vpack.c.b16 %v640, %v636
    %v953 = vpack.c.b16 %v641, %v637
    %v954 = vpack.c.b16 %v646, %v642
    %v955 = vpack.c.b16 %v647, %v643
    %v956 = vpack.c.b16 %v648, %v644
    %v957 = vpack.c.b16 %v649, %v645
    %v958 = vpack.c.b16 %v654, %v650
    %v959 = vpack.c.b16 %v655, %v651
    %v960 = vpack.c.b16 %v656, %v652
    %v961 = vpack.c.b16 %v657, %v653
    %v962 = vpack.c.b16 %v662, %v658
    %v963 = vpack.c.b16 %v663, %v659
    %v964 = vpack.c.b16 %v664, %v660
    %v965 = vpack.c.b16 %v665, %v661
    %v966 = vpack.c.b16 %v670, %v666
    %v967 = vpack.c.b16 %v671, %v667
    %v968 = vpack.c.b16 %v672, %v668
    %v969 = vpack.c.b16 %v673, %v669
    %v970 = vpack.c.b16 %v678, %v674
    %v971 = vpack.c.b16 %v679, %v675
    %v972 = vpack.c.b16 %v680, %v676
    %v973 = vpack.c.b16 %v681, %v677
    %v974 = vpack.c.b16 %v686, %v682
    %v975 = vpack.c.b16 %v687, %v683
    %v976 = vpack.c.b16 %v688, %v684
    %v977 = vpack.c.b16 %v689, %v685
    %v978 = vpack.c.b16 %v694, %v690
    %v979 = vpack.c.b16 %v695, %v691
    %v980 = vpack.c.b16 %v696, %v692
    %v981 = vpack.c.b16 %v697, %v693
    %v982 = vpack.c.b16 %v702, %v698
    %v983 = vpack.c.b16 %v703, %v699
    %v984 = vpack.c.b16 %v704, %v700
    %v985 = vpack.c.b16 %v705, %v701
    %v986 = vpack.c.b16 %v710, %v706
    %v987 = vpack.c.b16 %v711, %v707
    %v988 = vpack.c.b16 %v712, %v708
    %v989 = vpack.c.b16 %v713, %v709
    %v990 = vpack.c.b16 %v718, %v714
    %v991 = vpack.c.b16 %v719, %v715
    %v992 = vpack.c.b16 %v720, %v716
    %v993 = vpack.c.b16 %v721, %v717
    %v994 = vpack.c.b16 %v726, %v722
    %v995 = vpack.c.b16 %v727, %v723
    %v996 = vpack.c.b16 %v728, %v724
    %v997 = vpack.c.b16 %v729, %v725
    %v998 = vpack.c.b16 %v734, %v730
    %v999 = vpack.c.b16 %v735, %v731
    %v1000 = vpack.c.b16 %v736, %v732
    %v1001 = vpack.c.b16 %v737, %v733
    %v1002 = vpack.c.b16 %v742, %v738
    %v1003 = vpack.c.b16 %v743, %v739
    %v1004 = vpack.c.b16 %v744, %v740
    %v1005 = vpack.c.b16 %v745, %v741
    %v1006 = vpack.c.b16 %v750, %v746
    %v1007 = vpack.c.b16 %v751, %v747
    %v1008 = vpack.c.b16 %v752, %v748
    %v1009 = vpack.c.b16 %v753, %v749
    %v1010 = vpack.c.b16 %v758, %v754
    %v1011 = vpack.c.b16 %v759, %v755
    %v1012 = vpack.c.b16 %v760, %v756
    %v1013 = vpack.c.b16 %v761, %v757
    %v1014 = vpack.c.b16 %v766, %v762
    %v1015 = vpack.c.b16 %v767, %v763
    %v1016 = vpack.c.b16 %v768, %v764
    %v1017 = vpack.c.b16 %v769, %v765
    %v1018 = vpack.c.b16 %v774, %v770
    %v1019 = vpack.c.b16 %v775, %v771
    %v1020 = vpack.c.b16 %v776, %v772
    %v1021 = vpack.c.b16 %v777, %v773
    %v1022 = vpack.c.b16 %v782, %v778
    %v1023 = vpack.c.b16 %v783, %v779
    %v1024 = vpack.c.b16 %v784, %v780
    %v1025 = vpack.c.b16 %v785, %v781
    %v1026 = vpack.c.b16 %v790, %v786
    %v1027 = vpack.c.b16 %v791, %v787
    %v1028 = vpack.c.b16 %v792, %v788
    %v1029 = vpack.c.b16 %v793, %v789
    %v1030 = vpack.c.b16 %v798, %v794
    %v1031 = vpack.c.b16 %v799, %v795
    %v1032 = vpack.c.b16 %v800, %v796
    %v1033 = vpack.c.b16 %v801, %v797
    %v1034 = vpack.c.b16 %v806, %v802
    %v1035 = vpack.c.b16 %v807, %v803
    %v1036 = vpack.c.b16 %v808, %v804
    %v1037 = vpack.c.b16 %v809, %v805
    %v1038 = vpack.c.b16 %v814, %v810
    %v1039 = vpack.c.b16 %v815, %v811
    %v1040 = vpack.c.b16 %v816, %v812
    %v1041 = vpack.c.b16 %v817, %v813
    %v1042 = vpack.c.b16 %v822, %v818
    %v1043 = vpack.c.b16 %v823, %v819
    %v1044 = vpack.c.b16 %v824, %v820
    %v1045 = vpack.c.b16 %v825, %v821
    %v1046 = vpack.c.b16 %v830, %v826
    %v1047 = vpack.c.b16 %v831, %v827
    %v1048 = vpack.c.b16 %v832, %v828
    %v1049 = vpack.c.b16 %v833, %v829
    %v1050 = vpack.c.b16 %v838, %v834
    %v1051 = vpack.c.b16 %v839, %v835
    %v1052 = vpack.c.b16 %v840, %v836
    %v1053 = vpack.c.b16 %v841, %v837
    %v1054 = vpack.c.b16 %v846, %v842
    %v1055 = vpack.c.b16 %v847, %v843
    %v1056 = vpack.c.b16 %v848, %v844
    %v1057 = vpack.c.b16 %v849, %v845
    %v1058 = vpack.c.b16 %v854, %v850
    %v1059 = vpack.c.b16 %v855, %v851
    %v1060 = vpack.c.b16 %v856, %v852
    %v1061 = vpack.c.b16 %v857, %v853
    %v1062 = vpack.c.b16 %v862, %v858
    %v1063 = vpack.c.b16 %v863, %v859
    %v1064 = vpack.c.b16 %v864, %v860
    %v1065 = vpack.c.b16 %v865, %v861
    %v1066 = vpack.c.b16 %v870, %v866
    %v1067 = vpack.c.b16 %v871, %v867
    %v1068 = vpack.c.b16 %v872, %v868
    %v1069 = vpack.c.b16 %v873, %v869
    %vm1266 = vcmask 130048
    %v1268 = vsel %vm1266, %v279, 0
    %1270 = vmatprep.subr.bf16.mxu0 %v903
    %1271 = vmatpush1.bf16.msra.mxu0 %v902
    %1272 = vmatprep.subr.bf16.mxu0 %v899
    %1273 = vmatpush1.bf16.msra.mxu0 %v898
    %1274 = vmatprep.subr.bf16.mxu0 %v895
    %1275 = vmatpush1.bf16.msra.mxu0 %v894
    %1276 = vmatprep.subr.bf16.mxu0 %v891
    %1277 = vmatpush1.bf16.msra.mxu0 %v890
    %1278 = vmatprep.subr.bf16.mxu0 %v887
    %1279 = vmatpush1.bf16.msra.mxu0 %v886
    %1280 = vmatprep.subr.bf16.mxu0 %v883
    %1281 = vmatpush1.bf16.msra.mxu0 %v882
    %1282 = vmatprep.subr.bf16.mxu0 %v879
    %1283 = vmatpush1.bf16.msra.mxu0 %v878
    %1284 = vmatprep.subr.bf16.mxu0 %v875
    %1285 = vmatpush1.bf16.msra.mxu0 %v874
    %1286 = vmatprep.subr.bf16.mxu0 %v935
    %1287 = vmatpush2.bf16.msra.mxu0 %v934
    %1288 = vmatprep.subr.bf16.mxu0 %v931
    %1289 = vmatpush2.bf16.msra.mxu0 %v930
    %1290 = vmatprep.subr.bf16.mxu0 %v927
    %1291 = vmatpush2.bf16.msra.mxu0 %v926
    %1292 = vmatprep.subr.bf16.mxu0 %v923
    %1293 = vmatpush2.bf16.msra.mxu0 %v922
    %1294 = vmatprep.subr.bf16.mxu0 %v919
    %1295 = vmatpush2.bf16.msra.mxu0 %v918
    %1296 = vmatprep.subr.bf16.mxu0 %v915
    %1297 = vmatpush2.bf16.msra.mxu0 %v914
    %1298 = vmatprep.subr.bf16.mxu0 %v911
    %1299 = vmatpush2.bf16.msra.mxu0 %v910
    %1300 = vmatprep.subr.bf16.mxu0 %v907
    %1301 = vmatpush2.bf16.msra.mxu0 %v906
    %1302 = vmatprep.mubr.bf16.mxu0 %v274
    %1303 = vmatmul.mubr.bf16.gmra.mxu0 %v273
    %v1304 = vpop.f32.mrf.mxu0
    %v1305 = vadd.f32 %v245, %v1304
    %v1306 = vpop.f32.mrf.mxu0
    %v1307 = vadd.f32 %v249, %v1306
    %v1308 = vpop.f32.mrf.mxu0
    %v1309 = vpop.f32.mrf.mxu0
    %1310 = vdwg.mxu0
    %1311 = vmatprep.subr.bf16.mxu0 %v967
    %1312 = vmatpush1.bf16.msra.mxu0 %v966
    %1313 = vmatprep.subr.bf16.mxu0 %v963
    %1314 = vmatpush1.bf16.msra.mxu0 %v962
    %1315 = vmatprep.subr.bf16.mxu0 %v959
    %1316 = vmatpush1.bf16.msra.mxu0 %v958
    %1317 = vmatprep.subr.bf16.mxu0 %v955
    %1318 = vmatpush1.bf16.msra.mxu0 %v954
    %1319 = vmatprep.subr.bf16.mxu0 %v951
    %1320 = vmatpush1.bf16.msra.mxu0 %v950
    %1321 = vmatprep.subr.bf16.mxu0 %v947
    %1322 = vmatpush1.bf16.msra.mxu0 %v946
    %1323 = vmatprep.subr.bf16.mxu0 %v943
    %1324 = vmatpush1.bf16.msra.mxu0 %v942
    %1325 = vmatprep.subr.bf16.mxu0 %v939
    %1326 = vmatpush1.bf16.msra.mxu0 %v938
    %1327 = vmatprep.subr.bf16.mxu0 %v999
    %1328 = vmatpush2.bf16.msra.mxu0 %v998
    %1329 = vmatprep.subr.bf16.mxu0 %v995
    %1330 = vmatpush2.bf16.msra.mxu0 %v994
    %1331 = vmatprep.subr.bf16.mxu0 %v991
    %1332 = vmatpush2.bf16.msra.mxu0 %v990
    %1333 = vmatprep.subr.bf16.mxu0 %v987
    %1334 = vmatpush2.bf16.msra.mxu0 %v986
    %1335 = vmatprep.subr.bf16.mxu0 %v983
    %1336 = vmatpush2.bf16.msra.mxu0 %v982
    %1337 = vmatprep.subr.bf16.mxu0 %v979
    %1338 = vmatpush2.bf16.msra.mxu0 %v978
    %1339 = vmatprep.subr.bf16.mxu0 %v975
    %1340 = vmatpush2.bf16.msra.mxu0 %v974
    %1341 = vmatprep.subr.bf16.mxu0 %v971
    %1342 = vmatpush2.bf16.msra.mxu0 %v970
    %1343 = vmatprep.mubr.bf16.mxu0 %v276
    %1344 = vmatmul.mubr.bf16.gmra.mxu0 %v275
    %v1345 = vpop.f32.mrf.mxu0
    %v1346 = vadd.f32 %v1305, %v1345
    %v1347 = vpop.f32.mrf.mxu0
    %v1348 = vadd.f32 %v1307, %v1347
    %v1349 = vpop.f32.mrf.mxu0
    %v1350 = vpop.f32.mrf.mxu0
    %1351 = vdwg.mxu0
    %1352 = vmatprep.subr.bf16.mxu0 %v1031
    %1353 = vmatpush1.bf16.msra.mxu0 %v1030
    %1354 = vmatprep.subr.bf16.mxu0 %v1027
    %1355 = vmatpush1.bf16.msra.mxu0 %v1026
    %1356 = vmatprep.subr.bf16.mxu0 %v1023
    %1357 = vmatpush1.bf16.msra.mxu0 %v1022
    %1358 = vmatprep.subr.bf16.mxu0 %v1019
    %1359 = vmatpush1.bf16.msra.mxu0 %v1018
    %1360 = vmatprep.subr.bf16.mxu0 %v1015
    %1361 = vmatpush1.bf16.msra.mxu0 %v1014
    %1362 = vmatprep.subr.bf16.mxu0 %v1011
    %1363 = vmatpush1.bf16.msra.mxu0 %v1010
    %1364 = vmatprep.subr.bf16.mxu0 %v1007
    %1365 = vmatpush1.bf16.msra.mxu0 %v1006
    %1366 = vmatprep.subr.bf16.mxu0 %v1003
    %1367 = vmatpush1.bf16.msra.mxu0 %v1002
    %1368 = vmatprep.subr.bf16.mxu0 %v1063
    %1369 = vmatpush2.bf16.msra.mxu0 %v1062
    %1370 = vmatprep.subr.bf16.mxu0 %v1059
    %1371 = vmatpush2.bf16.msra.mxu0 %v1058
    %1372 = vmatprep.subr.bf16.mxu0 %v1055
    %1373 = vmatpush2.bf16.msra.mxu0 %v1054
    %1374 = vmatprep.subr.bf16.mxu0 %v1051
    %1375 = vmatpush2.bf16.msra.mxu0 %v1050
    %1376 = vmatprep.subr.bf16.mxu0 %v1047
    %1377 = vmatpush2.bf16.msra.mxu0 %v1046
    %1378 = vmatprep.subr.bf16.mxu0 %v1043
    %1379 = vmatpush2.bf16.msra.mxu0 %v1042
    %1380 = vmatprep.subr.bf16.mxu0 %v1039
    %1381 = vmatpush2.bf16.msra.mxu0 %v1038
    %1382 = vmatprep.subr.bf16.mxu0 %v1035
    %1383 = vmatpush2.bf16.msra.mxu0 %v1034
    %1384 = vmatprep.mubr.bf16.mxu0 %v278
    %1385 = vmatmul.mubr.bf16.gmra.mxu0 %v277
    %v1386 = vpop.f32.mrf.mxu0
    %v1387 = vadd.f32 %v1346, %v1386
    %v1388 = vpop.f32.mrf.mxu0
    %v1389 = vadd.f32 %v1348, %v1388
    %v1390 = vpop.f32.mrf.mxu0
    %v1391 = vpop.f32.mrf.mxu0
    %1392 = vdwg.mxu0
    %1393 = vmatprep.subr.bf16.mxu0 0
    %1394 = vmatpush1.bf16.msra.mxu0 0
    %1395 = vmatprep.subr.bf16.mxu0 0
    %1396 = vmatpush1.bf16.msra.mxu0 0
    %1397 = vmatprep.subr.bf16.mxu0 0
    %1398 = vmatpush1.bf16.msra.mxu0 0
    %1399 = vmatprep.subr.bf16.mxu0 0
    %1400 = vmatpush1.bf16.msra.mxu0 0
    %1401 = vmatprep.subr.bf16.mxu0 0
    %1402 = vmatpush1.bf16.msra.mxu0 0
    %1403 = vmatprep.subr.bf16.mxu0 0
    %1404 = vmatpush1.bf16.msra.mxu0 0
    %1405 = vmatprep.subr.bf16.mxu0 0
    %1406 = vmatpush1.bf16.msra.mxu0 0
    %1407 = vmatprep.subr.bf16.mxu0 %v1067
    %1408 = vmatpush1.bf16.msra.mxu0 %v1066
    %1409 = vmatprep.subr.bf16.mxu0 0
    %1410 = vmatpush2.bf16.msra.mxu0 0
    %1411 = vmatprep.subr.bf16.mxu0 0
    %1412 = vmatpush2.bf16.msra.mxu0 0
    %1413 = vmatprep.subr.bf16.mxu0 0
    %1414 = vmatpush2.bf16.msra.mxu0 0
    %1415 = vmatprep.subr.bf16.mxu0 0
    %1416 = vmatpush2.bf16.msra.mxu0 0
    %1417 = vmatprep.subr.bf16.mxu0 0
    %1418 = vmatpush2.bf16.msra.mxu0 0
    %1419 = vmatprep.subr.bf16.mxu0 0
    %1420 = vmatpush2.bf16.msra.mxu0 0
    %1421 = vmatprep.subr.bf16.mxu0 0
    %1422 = vmatpush2.bf16.msra.mxu0 0
    %1423 = vmatprep.subr.bf16.mxu0 0
    %1424 = vmatpush2.bf16.msra.mxu0 0
    %1425 = vmatprep.mubr.bf16.mxu0 0
    %1426 = vmatmul.mubr.bf16.gmra.mxu0 %v1268
    %v1427 = vpop.f32.mrf.mxu0
    %v1428 = vadd.f32 %v1387, %v1427
    %v1429 = vpop.f32.mrf.mxu0
    %v1430 = vadd.f32 %v1389, %v1429
    %v1431 = vpop.f32.mrf.mxu0
    %v1432 = vpop.f32.mrf.mxu0
    %1433 = vdwg.mxu0
    %1434 = vmatprep.subr.bf16.mxu0 %v905
    %1435 = vmatpush1.bf16.msra.mxu0 %v904
    %1436 = vmatprep.subr.bf16.mxu0 %v901
    %1437 = vmatpush1.bf16.msra.mxu0 %v900
    %1438 = vmatprep.subr.bf16.mxu0 %v897
    %1439 = vmatpush1.bf16.msra.mxu0 %v896
    %1440 = vmatprep.subr.bf16.mxu0 %v893
    %1441 = vmatpush1.bf16.msra.mxu0 %v892
    %1442 = vmatprep.subr.bf16.mxu0 %v889
    %1443 = vmatpush1.bf16.msra.mxu0 %v888
    %1444 = vmatprep.subr.bf16.mxu0 %v885
    %1445 = vmatpush1.bf16.msra.mxu0 %v884
    %1446 = vmatprep.subr.bf16.mxu0 %v881
    %1447 = vmatpush1.bf16.msra.mxu0 %v880
    %1448 = vmatprep.subr.bf16.mxu0 %v877
    %1449 = vmatpush1.bf16.msra.mxu0 %v876
    %1450 = vmatprep.subr.bf16.mxu0 %v937
    %1451 = vmatpush2.bf16.msra.mxu0 %v936
    %1452 = vmatprep.subr.bf16.mxu0 %v933
    %1453 = vmatpush2.bf16.msra.mxu0 %v932
    %1454 = vmatprep.subr.bf16.mxu0 %v929
    %1455 = vmatpush2.bf16.msra.mxu0 %v928
    %1456 = vmatprep.subr.bf16.mxu0 %v925
    %1457 = vmatpush2.bf16.msra.mxu0 %v924
    %1458 = vmatprep.subr.bf16.mxu0 %v921
    %1459 = vmatpush2.bf16.msra.mxu0 %v920
    %1460 = vmatprep.subr.bf16.mxu0 %v917
    %1461 = vmatpush2.bf16.msra.mxu0 %v916
    %1462 = vmatprep.subr.bf16.mxu0 %v913
    %1463 = vmatpush2.bf16.msra.mxu0 %v912
    %1464 = vmatprep.subr.bf16.mxu0 %v909
    %1465 = vmatpush2.bf16.msra.mxu0 %v908
    %1466 = vmatprep.mubr.bf16.mxu0 %v274
    %1467 = vmatmul.mubr.bf16.gmra.mxu0 %v273
    %v1468 = vpop.f32.mrf.mxu0
    %v1469 = vadd.f32 %v253, %v1468
    %v1470 = vpop.f32.mrf.mxu0
    %v1471 = vadd.f32 %v257, %v1470
    %v1472 = vpop.f32.mrf.mxu0
    %v1473 = vpop.f32.mrf.mxu0
    %1474 = vdwg.mxu0
    %1475 = vmatprep.subr.bf16.mxu0 %v969
    %1476 = vmatpush1.bf16.msra.mxu0 %v968
    %1477 = vmatprep.subr.bf16.mxu0 %v965
    %1478 = vmatpush1.bf16.msra.mxu0 %v964
    %1479 = vmatprep.subr.bf16.mxu0 %v961
    %1480 = vmatpush1.bf16.msra.mxu0 %v960
    %1481 = vmatprep.subr.bf16.mxu0 %v957
    %1482 = vmatpush1.bf16.msra.mxu0 %v956
    %1483 = vmatprep.subr.bf16.mxu0 %v953
    %1484 = vmatpush1.bf16.msra.mxu0 %v952
    %1485 = vmatprep.subr.bf16.mxu0 %v949
    %1486 = vmatpush1.bf16.msra.mxu0 %v948
    %1487 = vmatprep.subr.bf16.mxu0 %v945
    %1488 = vmatpush1.bf16.msra.mxu0 %v944
    %1489 = vmatprep.subr.bf16.mxu0 %v941
    %1490 = vmatpush1.bf16.msra.mxu0 %v940
    %1491 = vmatprep.subr.bf16.mxu0 %v1001
    %1492 = vmatpush2.bf16.msra.mxu0 %v1000
    %1493 = vmatprep.subr.bf16.mxu0 %v997
    %1494 = vmatpush2.bf16.msra.mxu0 %v996
    %1495 = vmatprep.subr.bf16.mxu0 %v993
    %1496 = vmatpush2.bf16.msra.mxu0 %v992
    %1497 = vmatprep.subr.bf16.mxu0 %v989
    %1498 = vmatpush2.bf16.msra.mxu0 %v988
    %1499 = vmatprep.subr.bf16.mxu0 %v985
    %1500 = vmatpush2.bf16.msra.mxu0 %v984
    %1501 = vmatprep.subr.bf16.mxu0 %v981
    %1502 = vmatpush2.bf16.msra.mxu0 %v980
    %1503 = vmatprep.subr.bf16.mxu0 %v977
    %1504 = vmatpush2.bf16.msra.mxu0 %v976
    %1505 = vmatprep.subr.bf16.mxu0 %v973
    %1506 = vmatpush2.bf16.msra.mxu0 %v972
    %1507 = vmatprep.mubr.bf16.mxu0 %v276
    %1508 = vmatmul.mubr.bf16.gmra.mxu0 %v275
    %v1509 = vpop.f32.mrf.mxu0
    %v1510 = vadd.f32 %v1469, %v1509
    %v1511 = vpop.f32.mrf.mxu0
    %v1512 = vadd.f32 %v1471, %v1511
    %v1513 = vpop.f32.mrf.mxu0
    %v1514 = vpop.f32.mrf.mxu0
    %1515 = vdwg.mxu0
    %1516 = vmatprep.subr.bf16.mxu0 %v1033
    %1517 = vmatpush1.bf16.msra.mxu0 %v1032
    %1518 = vmatprep.subr.bf16.mxu0 %v1029
    %1519 = vmatpush1.bf16.msra.mxu0 %v1028
    %1520 = vmatprep.subr.bf16.mxu0 %v1025
    %1521 = vmatpush1.bf16.msra.mxu0 %v1024
    %1522 = vmatprep.subr.bf16.mxu0 %v1021
    %1523 = vmatpush1.bf16.msra.mxu0 %v1020
    %1524 = vmatprep.subr.bf16.mxu0 %v1017
    %1525 = vmatpush1.bf16.msra.mxu0 %v1016
    %1526 = vmatprep.subr.bf16.mxu0 %v1013
    %1527 = vmatpush1.bf16.msra.mxu0 %v1012
    %1528 = vmatprep.subr.bf16.mxu0 %v1009
    %1529 = vmatpush1.bf16.msra.mxu0 %v1008
    %1530 = vmatprep.subr.bf16.mxu0 %v1005
    %1531 = vmatpush1.bf16.msra.mxu0 %v1004
    %1532 = vmatprep.subr.bf16.mxu0 %v1065
    %1533 = vmatpush2.bf16.msra.mxu0 %v1064
    %1534 = vmatprep.subr.bf16.mxu0 %v1061
    %1535 = vmatpush2.bf16.msra.mxu0 %v1060
    %1536 = vmatprep.subr.bf16.mxu0 %v1057
    %1537 = vmatpush2.bf16.msra.mxu0 %v1056
    %1538 = vmatprep.subr.bf16.mxu0 %v1053
    %1539 = vmatpush2.bf16.msra.mxu0 %v1052
    %1540 = vmatprep.subr.bf16.mxu0 %v1049
    %1541 = vmatpush2.bf16.msra.mxu0 %v1048
    %1542 = vmatprep.subr.bf16.mxu0 %v1045
    %1543 = vmatpush2.bf16.msra.mxu0 %v1044
    %1544 = vmatprep.subr.bf16.mxu0 %v1041
    %1545 = vmatpush2.bf16.msra.mxu0 %v1040
    %1546 = vmatprep.subr.bf16.mxu0 %v1037
    %1547 = vmatpush2.bf16.msra.mxu0 %v1036
    %1548 = vmatprep.mubr.bf16.mxu0 %v278
    %1549 = vmatmul.mubr.bf16.gmra.mxu0 %v277
    %v1550 = vpop.f32.mrf.mxu0
    %v1551 = vadd.f32 %v1510, %v1550
    %v1552 = vpop.f32.mrf.mxu0
    %v1553 = vadd.f32 %v1512, %v1552
    %v1554 = vpop.f32.mrf.mxu0
    %v1555 = vpop.f32.mrf.mxu0
    %1556 = vdwg.mxu0
    %1557 = vmatprep.subr.bf16.mxu0 0
    %1558 = vmatpush1.bf16.msra.mxu0 0
    %1559 = vmatprep.subr.bf16.mxu0 0
    %1560 = vmatpush1.bf16.msra.mxu0 0
    %1561 = vmatprep.subr.bf16.mxu0 0
    %1562 = vmatpush1.bf16.msra.mxu0 0
    %1563 = vmatprep.subr.bf16.mxu0 0
    %1564 = vmatpush1.bf16.msra.mxu0 0
    %1565 = vmatprep.subr.bf16.mxu0 0
    %1566 = vmatpush1.bf16.msra.mxu0 0
    %1567 = vmatprep.subr.bf16.mxu0 0
    %1568 = vmatpush1.bf16.msra.mxu0 0
    %1569 = vmatprep.subr.bf16.mxu0 0
    %1570 = vmatpush1.bf16.msra.mxu0 0
    %1571 = vmatprep.subr.bf16.mxu0 %v1069
    %1572 = vmatpush1.bf16.msra.mxu0 %v1068
    %1573 = vmatprep.subr.bf16.mxu0 0
    %1574 = vmatpush2.bf16.msra.mxu0 0
    %1575 = vmatprep.subr.bf16.mxu0 0
    %1576 = vmatpush2.bf16.msra.mxu0 0
    %1577 = vmatprep.subr.bf16.mxu0 0
    %1578 = vmatpush2.bf16.msra.mxu0 0
    %1579 = vmatprep.subr.bf16.mxu0 0
    %1580 = vmatpush2.bf16.msra.mxu0 0
    %1581 = vmatprep.subr.bf16.mxu0 0
    %1582 = vmatpush2.bf16.msra.mxu0 0
    %1583 = vmatprep.subr.bf16.mxu0 0
    %1584 = vmatpush2.bf16.msra.mxu0 0
    %1585 = vmatprep.subr.bf16.mxu0 0
    %1586 = vmatpush2.bf16.msra.mxu0 0
    %1587 = vmatprep.subr.bf16.mxu0 0
    %1588 = vmatpush2.bf16.msra.mxu0 0
    %1589 = vmatprep.mubr.bf16.mxu0 0
    %1590 = vmatmul.mubr.bf16.gmra.mxu0 %v1268
    %v1591 = vpop.f32.mrf.mxu0
    %v1592 = vadd.f32 %v1551, %v1591
    %v1593 = vpop.f32.mrf.mxu0
    %v1594 = vadd.f32 %v1553, %v1593
    %v1595 = vpop.f32.mrf.mxu0
    %v1596 = vpop.f32.mrf.mxu0
    %1597 = vdwg.mxu0
    %v1598 = vmax.f32 %v1428, 0.0
    %v1599 = vmax.f32 %v1430, 0.0
    %v1600 = vmax.f32 %v1592, 0.0
    %v1601 = vmax.f32 %v1594, 0.0
    %v1602 = vpack.c.bf16 %v1598, %v1598
    %v1603 = vpack.c.bf16 %v1599, %v1599
    %v1604 = vpack.c.bf16 %v1600, %v1600
    %v1605 = vpack.c.bf16 %v1601, %v1601
    %v1606 = vld [vmem:[%s4] sm:$0xf]
    %v1607 = vld [vmem:[%s4 + $0x4] sm:$0xf]
    %v1608 = vld [vmem:[%s4 + $0x8] sm:$0xf]
    %v1609 = vld [vmem:[%s4 + $0xc] sm:$0xf]
    %v1610 = vld [vmem:[%s4 + $0x10] sm:$0xf]
    %v1611 = vld [vmem:[%s4 + $0x14] sm:$0xf]
    %v1612 = vld [vmem:[%s4 + $0x18] sm:$0xf]
    %v1613 = vld [vmem:[%s4 + $0x1c] sm:$0xf]
    %v1614 = vld [vmem:[%s4 + $0x20] sm:$0xf]
    %v1615 = vld [vmem:[%s4 + $0x24] sm:$0xf]
    %v1616 = vld [vmem:[%s4 + $0x28] sm:$0xf]
    %v1617 = vld [vmem:[%s4 + $0x2c] sm:$0xf]
    %v1618 = vld [vmem:[%s4 + $0x30] sm:$0xf]
    %v1619 = vld [vmem:[%s4 + $0x34] sm:$0xf]
    %v1620 = vld [vmem:[%s4 + $0x38] sm:$0xf]
    %v1621 = vld [vmem:[%s4 + $0x3c] sm:$0xf]
    %v1622 = vld [vmem:[%s4 + $0x40] sm:$0xf]
    %v1623 = vld [vmem:[%s4 + $0x44] sm:$0xf]
    %v1624 = vld [vmem:[%s4 + $0x48] sm:$0xf]
    %v1625 = vld [vmem:[%s4 + $0x4c] sm:$0xf]
    %v1626 = vld [vmem:[%s4 + $0x50] sm:$0xf]
    %v1627 = vld [vmem:[%s4 + $0x54] sm:$0xf]
    %v1628 = vld [vmem:[%s4 + $0x58] sm:$0xf]
    %v1629 = vld [vmem:[%s4 + $0x5c] sm:$0xf]
    %v1630 = vld [vmem:[%s4 + $0x60] sm:$0xf]
    %v1631 = vld [vmem:[%s4 + $0x64] sm:$0xf]
    %v1632 = vld [vmem:[%s4 + $0x68] sm:$0xf]
    %v1633 = vld [vmem:[%s4 + $0x6c] sm:$0xf]
    %v1634 = vld [vmem:[%s4 + $0x70] sm:$0xf]
    %v1635 = vld [vmem:[%s4 + $0x74] sm:$0xf]
    %v1636 = vld [vmem:[%s4 + $0x78] sm:$0xf]
    %v1637 = vld [vmem:[%s4 + $0x7c] sm:$0xf]
    %v1638 = vld [vmem:[%s4 + $0x80] sm:$0xf]
    %v1639 = vld [vmem:[%s4 + $0x84] sm:$0xf]
    %v1640 = vld [vmem:[%s4 + $0x88] sm:$0xf]
    %v1641 = vld [vmem:[%s4 + $0x8c] sm:$0xf]
    %v1642 = vld [vmem:[%s4 + $0x90] sm:$0xf]
    %v1643 = vld [vmem:[%s4 + $0x94] sm:$0xf]
    %v1644 = vld [vmem:[%s4 + $0x98] sm:$0xf]
    %v1645 = vld [vmem:[%s4 + $0x9c] sm:$0xf]
    %v1646 = vld [vmem:[%s4 + $0xa0] sm:$0xf]
    %v1647 = vld [vmem:[%s4 + $0xa4] sm:$0xf]
    %v1648 = vld [vmem:[%s4 + $0xa8] sm:$0xf]
    %v1649 = vld [vmem:[%s4 + $0xac] sm:$0xf]
    %v1650 = vld [vmem:[%s4 + $0xb0] sm:$0xf]
    %v1651 = vld [vmem:[%s4 + $0xb4] sm:$0xf]
    %v1652 = vld [vmem:[%s4 + $0xb8] sm:$0xf]
    %v1653 = vld [vmem:[%s4 + $0xbc] sm:$0xf]
    %v1654 = vld [vmem:[%s4 + $0xc0] sm:$0xf]
    %v1655 = vld [vmem:[%s4 + $0xc4] sm:$0xf]
    %v1656 = vld [vmem:[%s4 + $0xc8] sm:$0xf]
    %v1657 = vld [vmem:[%s4 + $0xcc] sm:$0xf]
    %v1658 = vld [vmem:[%s4 + $0xd0] sm:$0xf]
    %v1659 = vld [vmem:[%s4 + $0xd4] sm:$0xf]
    %v1660 = vld [vmem:[%s4 + $0xd8] sm:$0xf]
    %v1661 = vld [vmem:[%s4 + $0xdc] sm:$0xf]
    %v1662 = vld [vmem:[%s4 + $0xe0] sm:$0xf]
    %v1663 = vld [vmem:[%s4 + $0xe4] sm:$0xf]
    %v1664 = vld [vmem:[%s4 + $0xe8] sm:$0xf]
    %v1665 = vld [vmem:[%s4 + $0xec] sm:$0xf]
    %v1666 = vld [vmem:[%s4 + $0xf0] sm:$0xf]
    %v1667 = vld [vmem:[%s4 + $0xf4] sm:$0xf]
    %v1668 = vld [vmem:[%s4 + $0xf8] sm:$0xf]
    %v1669 = vld [vmem:[%s4 + $0xfc] sm:$0xf]
    %v1670 = vld [vmem:[%s5] sm:$0x1]
    %v1672 = vlaneseq
    %v1673 = vshrl.u32 %v1672, 7
    %v1674 = vsub.s32 0, %v1673
    %v1675 = vrot.slane %v1670, %v1674
    %v1741 = vunpack.c.l.b16 %v1606
    %v1742 = vunpack.c.l.b16 %v1607
    %v1743 = vunpack.c.l.b16 %v1608
    %v1744 = vunpack.c.l.b16 %v1609
    %v1745 = vunpack.c.l.b16 %v1610
    %v1746 = vunpack.c.l.b16 %v1611
    %v1747 = vunpack.c.l.b16 %v1612
    %v1748 = vunpack.c.l.b16 %v1613
    %v1749 = vunpack.c.l.b16 %v1614
    %v1750 = vunpack.c.l.b16 %v1615
    %v1751 = vunpack.c.l.b16 %v1616
    %v1752 = vunpack.c.l.b16 %v1617
    %v1753 = vunpack.c.l.b16 %v1618
    %v1754 = vunpack.c.l.b16 %v1619
    %v1755 = vunpack.c.l.b16 %v1620
    %v1756 = vunpack.c.l.b16 %v1621
    %v1757 = vunpack.c.l.b16 %v1622
    %v1758 = vunpack.c.l.b16 %v1623
    %v1759 = vunpack.c.l.b16 %v1624
    %v1760 = vunpack.c.l.b16 %v1625
    %v1761 = vunpack.c.l.b16 %v1626
    %v1762 = vunpack.c.l.b16 %v1627
    %v1763 = vunpack.c.l.b16 %v1628
    %v1764 = vunpack.c.l.b16 %v1629
    %v1765 = vunpack.c.l.b16 %v1630
    %v1766 = vunpack.c.l.b16 %v1631
    %v1767 = vunpack.c.l.b16 %v1632
    %v1768 = vunpack.c.l.b16 %v1633
    %v1769 = vunpack.c.l.b16 %v1634
    %v1770 = vunpack.c.l.b16 %v1635
    %v1771 = vunpack.c.l.b16 %v1636
    %v1772 = vunpack.c.l.b16 %v1637
    %v1773 = vunpack.c.l.b16 %v1638
    %v1774 = vunpack.c.l.b16 %v1639
    %v1775 = vunpack.c.l.b16 %v1640
    %v1776 = vunpack.c.l.b16 %v1641
    %v1777 = vunpack.c.l.b16 %v1642
    %v1778 = vunpack.c.l.b16 %v1643
    %v1779 = vunpack.c.l.b16 %v1644
    %v1780 = vunpack.c.l.b16 %v1645
    %v1781 = vunpack.c.l.b16 %v1646
    %v1782 = vunpack.c.l.b16 %v1647
    %v1783 = vunpack.c.l.b16 %v1648
    %v1784 = vunpack.c.l.b16 %v1649
    %v1785 = vunpack.c.l.b16 %v1650
    %v1786 = vunpack.c.l.b16 %v1651
    %v1787 = vunpack.c.l.b16 %v1652
    %v1788 = vunpack.c.l.b16 %v1653
    %v1789 = vunpack.c.l.b16 %v1654
    %v1790 = vunpack.c.l.b16 %v1655
    %v1791 = vunpack.c.l.b16 %v1656
    %v1792 = vunpack.c.l.b16 %v1657
    %v1793 = vunpack.c.l.b16 %v1658
    %v1794 = vunpack.c.l.b16 %v1659
    %v1795 = vunpack.c.l.b16 %v1660
    %v1796 = vunpack.c.l.b16 %v1661
    %v1797 = vunpack.c.l.b16 %v1662
    %v1798 = vunpack.c.l.b16 %v1663
    %v1799 = vunpack.c.l.b16 %v1664
    %v1800 = vunpack.c.l.b16 %v1665
    %v1801 = vunpack.c.l.b16 %v1666
    %v1802 = vunpack.c.l.b16 %v1667
    %v1803 = vunpack.c.l.b16 %v1668
    %v1804 = vunpack.c.l.b16 %v1669
    %v1805 = vpack.c.b16 %v1742, %v1741
    %v1806 = vpack.c.b16 %v1744, %v1743
    %v1807 = vpack.c.b16 %v1746, %v1745
    %v1808 = vpack.c.b16 %v1748, %v1747
    %v1809 = vpack.c.b16 %v1750, %v1749
    %v1810 = vpack.c.b16 %v1752, %v1751
    %v1811 = vpack.c.b16 %v1754, %v1753
    %v1812 = vpack.c.b16 %v1756, %v1755
    %v1813 = vpack.c.b16 %v1758, %v1757
    %v1814 = vpack.c.b16 %v1760, %v1759
    %v1815 = vpack.c.b16 %v1762, %v1761
    %v1816 = vpack.c.b16 %v1764, %v1763
    %v1817 = vpack.c.b16 %v1766, %v1765
    %v1818 = vpack.c.b16 %v1768, %v1767
    %v1819 = vpack.c.b16 %v1770, %v1769
    %v1820 = vpack.c.b16 %v1772, %v1771
    %v1821 = vpack.c.b16 %v1774, %v1773
    %v1822 = vpack.c.b16 %v1776, %v1775
    %v1823 = vpack.c.b16 %v1778, %v1777
    %v1824 = vpack.c.b16 %v1780, %v1779
    %v1825 = vpack.c.b16 %v1782, %v1781
    %v1826 = vpack.c.b16 %v1784, %v1783
    %v1827 = vpack.c.b16 %v1786, %v1785
    %v1828 = vpack.c.b16 %v1788, %v1787
    %v1829 = vpack.c.b16 %v1790, %v1789
    %v1830 = vpack.c.b16 %v1792, %v1791
    %v1831 = vpack.c.b16 %v1794, %v1793
    %v1832 = vpack.c.b16 %v1796, %v1795
    %v1833 = vpack.c.b16 %v1798, %v1797
    %v1834 = vpack.c.b16 %v1800, %v1799
    %v1835 = vpack.c.b16 %v1802, %v1801
    %v1836 = vpack.c.b16 %v1804, %v1803
    %1869 = vmatprep.subr.bf16.mxu0 0
    %1870 = vmatpush1.bf16.msra.mxu0 %v1812
    %1871 = vmatprep.subr.bf16.mxu0 0
    %1872 = vmatpush1.bf16.msra.mxu0 %v1811
    %1873 = vmatprep.subr.bf16.mxu0 0
    %1874 = vmatpush1.bf16.msra.mxu0 %v1810
    %1875 = vmatprep.subr.bf16.mxu0 0
    %1876 = vmatpush1.bf16.msra.mxu0 %v1809
    %1877 = vmatprep.subr.bf16.mxu0 0
    %1878 = vmatpush1.bf16.msra.mxu0 %v1808
    %1879 = vmatprep.subr.bf16.mxu0 0
    %1880 = vmatpush1.bf16.msra.mxu0 %v1807
    %1881 = vmatprep.subr.bf16.mxu0 0
    %1882 = vmatpush1.bf16.msra.mxu0 %v1806
    %1883 = vmatprep.subr.bf16.mxu0 0
    %1884 = vmatpush1.bf16.msra.mxu0 %v1805
    %1885 = vmatprep.subr.bf16.mxu0 0
    %1886 = vmatpush2.bf16.msra.mxu0 %v1820
    %1887 = vmatprep.subr.bf16.mxu0 0
    %1888 = vmatpush2.bf16.msra.mxu0 %v1819
    %1889 = vmatprep.subr.bf16.mxu0 0
    %1890 = vmatpush2.bf16.msra.mxu0 %v1818
    %1891 = vmatprep.subr.bf16.mxu0 0
    %1892 = vmatpush2.bf16.msra.mxu0 %v1817
    %1893 = vmatprep.subr.bf16.mxu0 0
    %1894 = vmatpush2.bf16.msra.mxu0 %v1816
    %1895 = vmatprep.subr.bf16.mxu0 0
    %1896 = vmatpush2.bf16.msra.mxu0 %v1815
    %1897 = vmatprep.subr.bf16.mxu0 0
    %1898 = vmatpush2.bf16.msra.mxu0 %v1814
    %1899 = vmatprep.subr.bf16.mxu0 0
    %1900 = vmatpush2.bf16.msra.mxu0 %v1813
    %1901 = vmatprep.mubr.bf16.mxu0 %v1603
    %1902 = vmatmul.mubr.bf16.gmra.mxu0 %v1602
    %v1903 = vpop.f32.mrf.mxu0
    %v1904 = vadd.f32 %v1675, %v1903
    %v1905 = vpop.f32.mrf.mxu0
    %v1906 = vpop.f32.mrf.mxu0
    %v1907 = vpop.f32.mrf.mxu0
    %1908 = vdwg.mxu0
    %1909 = vmatprep.subr.bf16.mxu0 0
    %1910 = vmatpush1.bf16.msra.mxu0 %v1828
    %1911 = vmatprep.subr.bf16.mxu0 0
    %1912 = vmatpush1.bf16.msra.mxu0 %v1827
    %1913 = vmatprep.subr.bf16.mxu0 0
    %1914 = vmatpush1.bf16.msra.mxu0 %v1826
    %1915 = vmatprep.subr.bf16.mxu0 0
    %1916 = vmatpush1.bf16.msra.mxu0 %v1825
    %1917 = vmatprep.subr.bf16.mxu0 0
    %1918 = vmatpush1.bf16.msra.mxu0 %v1824
    %1919 = vmatprep.subr.bf16.mxu0 0
    %1920 = vmatpush1.bf16.msra.mxu0 %v1823
    %1921 = vmatprep.subr.bf16.mxu0 0
    %1922 = vmatpush1.bf16.msra.mxu0 %v1822
    %1923 = vmatprep.subr.bf16.mxu0 0
    %1924 = vmatpush1.bf16.msra.mxu0 %v1821
    %1925 = vmatprep.subr.bf16.mxu0 0
    %1926 = vmatpush2.bf16.msra.mxu0 %v1836
    %1927 = vmatprep.subr.bf16.mxu0 0
    %1928 = vmatpush2.bf16.msra.mxu0 %v1835
    %1929 = vmatprep.subr.bf16.mxu0 0
    %1930 = vmatpush2.bf16.msra.mxu0 %v1834
    %1931 = vmatprep.subr.bf16.mxu0 0
    %1932 = vmatpush2.bf16.msra.mxu0 %v1833
    %1933 = vmatprep.subr.bf16.mxu0 0
    %1934 = vmatpush2.bf16.msra.mxu0 %v1832
    %1935 = vmatprep.subr.bf16.mxu0 0
    %1936 = vmatpush2.bf16.msra.mxu0 %v1831
    %1937 = vmatprep.subr.bf16.mxu0 0
    %1938 = vmatpush2.bf16.msra.mxu0 %v1830
    %1939 = vmatprep.subr.bf16.mxu0 0
    %1940 = vmatpush2.bf16.msra.mxu0 %v1829
    %1941 = vmatprep.mubr.bf16.mxu0 %v1605
    %1942 = vmatmul.mubr.bf16.gmra.mxu0 %v1604
    %v1943 = vpop.f32.mrf.mxu0
    %v1944 = vadd.f32 %v1904, %v1943
    %v1945 = vpop.f32.mrf.mxu0
    %v1946 = vpop.f32.mrf.mxu0
    %v1947 = vpop.f32.mrf.mxu0
    %1948 = vdwg.mxu0
    %v1949 = vmul.f32 %v1944, 0.5
    %v1950 = vmul.f32 %v1949, 1.442695
    %v1951 = vpow.pop %v1950
    %v1952 = vld [vmem:[%s1] sm:$0xff]
    %1954 = vrot.lane.b32.xlu0 %v1951, 108
    %v1955 = vpop.permute.xlu0 %1954
    %v1957 = vmul.f32 %v1952, %v1955
    %v1958 = vadd.f32 %v1944, %v1957
    %v1959 = vpack.c.bf16 %v1958, %v1958
    %v1960 = vld [vmem:[%s6] sm:$0xff]
    %v1961 = vld [vmem:[%s6 + $0x8] sm:$0xff]
    %v1962 = vld [vmem:[%s6 + $0x10] sm:$0xff]
    %v1963 = vld [vmem:[%s6 + $0x18] sm:$0xff]
    %v1964 = vld [vmem:[%s6 + $0x20] sm:$0x33]
    %v1965 = vld [vmem:[%s6 + $0x28] sm:$0x33]
    %v1966 = vld [vmem:[%s7] sm:$0xf]
    %v1968 = vlaneseq
    %v1969 = vshrl.u32 %v1968, 7
    %v1970 = vsub.s32 0, %v1969
    %v1971 = vrot.slane %v1966, %v1970
    %v1972 = vlaneseq
    %v1973 = vshrl.u32 %v1972, 7
    %v1974 = vsub.s32 1, %v1973
    %v1975 = vrot.slane %v1966, %v1974
    %v1976 = vlaneseq
    %v1977 = vshrl.u32 %v1976, 7
    %v1978 = vsub.s32 2, %v1977
    %v1979 = vrot.slane %v1966, %v1978
    %v1980 = vlaneseq
    %v1981 = vshrl.u32 %v1980, 7
    %v1982 = vsub.s32 3, %v1981
    %v1983 = vrot.slane %v1966, %v1982
    %v1994 = vunpack.c.l.b16 %v1960
    %v1995 = vunpack.c.h.b16 %v1960
    %v1996 = vunpack.c.l.b16 %v1961
    %v1997 = vunpack.c.h.b16 %v1961
    %v1998 = vunpack.c.l.b16 %v1962
    %v1999 = vunpack.c.h.b16 %v1962
    %v2000 = vunpack.c.l.b16 %v1963
    %v2001 = vunpack.c.h.b16 %v1963
    %v2002 = vunpack.c.l.b16 %v1964
    %v2003 = vunpack.c.h.b16 %v1964
    %v2004 = vunpack.c.l.b16 %v1965
    %v2005 = vunpack.c.h.b16 %v1965
    %v2006 = vpack.c.b16 %v1998, %v1994
    %v2007 = vpack.c.b16 %v1999, %v1995
    %v2008 = vpack.c.b16 %v2000, %v1996
    %v2009 = vpack.c.b16 %v2001, %v1997
    %v2010 = vpack.c.b16 %v2002, %v2002
    %v2011 = vpack.c.b16 %v2003, %v2003
    %v2012 = vpack.c.b16 %v2004, %v2004
    %v2013 = vpack.c.b16 %v2005, %v2005
    %vm2018 = vcmask 162816
    %v2020 = vsel %vm2018, %v1959, 0
    %vm2022 = vcmask 1041408
    %v2024 = vsel %vm2022, %v2010, 0
    %v2027 = vsel %vm2022, %v2011, 0
    %v2030 = vsel %vm2022, %v2012, 0
    %v2033 = vsel %vm2022, %v2013, 0
    %2035 = vmatprep.subr.bf16.mxu0 0
    %2036 = vmatpush1.bf16.msra.mxu0 0
    %2037 = vmatprep.subr.bf16.mxu0 0
    %2038 = vmatpush1.bf16.msra.mxu0 0
    %2039 = vmatprep.subr.bf16.mxu0 0
    %2040 = vmatpush1.bf16.msra.mxu0 0
    %2041 = vmatprep.subr.bf16.mxu0 0
    %2042 = vmatpush1.bf16.msra.mxu0 0
    %2043 = vmatprep.subr.bf16.mxu0 0
    %2044 = vmatpush1.bf16.msra.mxu0 0
    %2045 = vmatprep.subr.bf16.mxu0 0
    %2046 = vmatpush1.bf16.msra.mxu0 0
    %2047 = vmatprep.subr.bf16.mxu0 %v2027
    %2048 = vmatpush1.bf16.msra.mxu0 %v2024
    %2049 = vmatprep.subr.bf16.mxu0 %v2007
    %2050 = vmatpush1.bf16.msra.mxu0 %v2006
    %2051 = vmatprep.subr.bf16.mxu0 0
    %2052 = vmatpush2.bf16.msra.mxu0 0
    %2053 = vmatprep.subr.bf16.mxu0 0
    %2054 = vmatpush2.bf16.msra.mxu0 0
    %2055 = vmatprep.subr.bf16.mxu0 0
    %2056 = vmatpush2.bf16.msra.mxu0 0
    %2057 = vmatprep.subr.bf16.mxu0 0
    %2058 = vmatpush2.bf16.msra.mxu0 0
    %2059 = vmatprep.subr.bf16.mxu0 0
    %2060 = vmatpush2.bf16.msra.mxu0 0
    %2061 = vmatprep.subr.bf16.mxu0 0
    %2062 = vmatpush2.bf16.msra.mxu0 0
    %2063 = vmatprep.subr.bf16.mxu0 0
    %2064 = vmatpush2.bf16.msra.mxu0 0
    %2065 = vmatprep.subr.bf16.mxu0 0
    %2066 = vmatpush2.bf16.msra.mxu0 0
    %2067 = vmatprep.mubr.bf16.mxu0 0
    %2068 = vmatmul.mubr.bf16.gmra.mxu0 %v2020
    %v2069 = vpop.f32.mrf.mxu0
    %v2070 = vadd.f32 %v1971, %v2069
    %v2071 = vpop.f32.mrf.mxu0
    %v2072 = vadd.f32 %v1975, %v2071
    %v2073 = vpop.f32.mrf.mxu0
    %v2074 = vpop.f32.mrf.mxu0
    %2075 = vdwg.mxu0
    %2076 = vmatprep.subr.bf16.mxu0 0
    %2077 = vmatpush1.bf16.msra.mxu0 0
    %2078 = vmatprep.subr.bf16.mxu0 0
    %2079 = vmatpush1.bf16.msra.mxu0 0
    %2080 = vmatprep.subr.bf16.mxu0 0
    %2081 = vmatpush1.bf16.msra.mxu0 0
    %2082 = vmatprep.subr.bf16.mxu0 0
    %2083 = vmatpush1.bf16.msra.mxu0 0
    %2084 = vmatprep.subr.bf16.mxu0 0
    %2085 = vmatpush1.bf16.msra.mxu0 0
    %2086 = vmatprep.subr.bf16.mxu0 0
    %2087 = vmatpush1.bf16.msra.mxu0 0
    %2088 = vmatprep.subr.bf16.mxu0 %v2033
    %2089 = vmatpush1.bf16.msra.mxu0 %v2030
    %2090 = vmatprep.subr.bf16.mxu0 %v2009
    %2091 = vmatpush1.bf16.msra.mxu0 %v2008
    %2092 = vmatprep.subr.bf16.mxu0 0
    %2093 = vmatpush2.bf16.msra.mxu0 0
    %2094 = vmatprep.subr.bf16.mxu0 0
    %2095 = vmatpush2.bf16.msra.mxu0 0
    %2096 = vmatprep.subr.bf16.mxu0 0
    %2097 = vmatpush2.bf16.msra.mxu0 0
    %2098 = vmatprep.subr.bf16.mxu0 0
    %2099 = vmatpush2.bf16.msra.mxu0 0
    %2100 = vmatprep.subr.bf16.mxu0 0
    %2101 = vmatpush2.bf16.msra.mxu0 0
    %2102 = vmatprep.subr.bf16.mxu0 0
    %2103 = vmatpush2.bf16.msra.mxu0 0
    %2104 = vmatprep.subr.bf16.mxu0 0
    %2105 = vmatpush2.bf16.msra.mxu0 0
    %2106 = vmatprep.subr.bf16.mxu0 0
    %2107 = vmatpush2.bf16.msra.mxu0 0
    %2108 = vmatprep.mubr.bf16.mxu0 0
    %2109 = vmatmul.mubr.bf16.gmra.mxu0 %v2020
    %v2110 = vpop.f32.mrf.mxu0
    %v2111 = vadd.f32 %v1979, %v2110
    %v2112 = vpop.f32.mrf.mxu0
    %v2113 = vadd.f32 %v1983, %v2112
    %v2114 = vpop.f32.mrf.mxu0
    %v2115 = vpop.f32.mrf.mxu0
    %2116 = vdwg.mxu0
    %v2117 = vmax.f32 %v2070, 0.0
    %v2118 = vmax.f32 %v2072, 0.0
    %v2119 = vmax.f32 %v2111, 0.0
    %v2120 = vmax.f32 %v2113, 0.0
    %v2121 = vpack.c.bf16 %v2117, %v2117
    %v2122 = vpack.c.bf16 %v2118, %v2118
    %v2123 = vpack.c.bf16 %v2119, %v2119
    %v2124 = vpack.c.bf16 %v2120, %v2120
    %v2125 = vld [vmem:[%s8] sm:$0xff]
    %v2126 = vld [vmem:[%s8 + $0x8] sm:$0xff]
    %v2127 = vld [vmem:[%s8 + $0x10] sm:$0xff]
    %v2128 = vld [vmem:[%s8 + $0x18] sm:$0xf]
    %v2129 = vld [vmem:[%s8 + $0x1c] sm:$0xff]
    %v2130 = vld [vmem:[%s8 + $0x24] sm:$0xff]
    %v2131 = vld [vmem:[%s8 + $0x2c] sm:$0xff]
    %v2132 = vld [vmem:[%s8 + $0x34] sm:$0xf]
    %v2133 = vld [vmem:[%s8 + $0x38] sm:$0xff]
    %v2134 = vld [vmem:[%s8 + $0x40] sm:$0xff]
    %v2135 = vld [vmem:[%s8 + $0x48] sm:$0xff]
    %v2136 = vld [vmem:[%s8 + $0x50] sm:$0xf]
    %v2137 = vld [vmem:[%s8 + $0x54] sm:$0xff]
    %v2138 = vld [vmem:[%s8 + $0x5c] sm:$0xff]
    %v2139 = vld [vmem:[%s8 + $0x64] sm:$0xff]
    %v2140 = vld [vmem:[%s8 + $0x6c] sm:$0xf]
    %v2141 = vld [vmem:[%s8 + $0x70] sm:$0xff]
    %v2142 = vld [vmem:[%s8 + $0x78] sm:$0xff]
    %v2143 = vld [vmem:[%s8 + $0x80] sm:$0xff]
    %v2144 = vld [vmem:[%s8 + $0x88] sm:$0xf]
    %v2145 = vld [vmem:[%s8 + $0x8c] sm:$0xff]
    %v2146 = vld [vmem:[%s8 + $0x94] sm:$0xff]
    %v2147 = vld [vmem:[%s8 + $0x9c] sm:$0xff]
    %v2148 = vld [vmem:[%s8 + $0xa4] sm:$0xf]
    %v2149 = vld [vmem:[%s8 + $0xa8] sm:$0xff]
    %v2150 = vld [vmem:[%s8 + $0xb0] sm:$0xff]
    %v2151 = vld [vmem:[%s8 + $0xb8] sm:$0xff]
    %v2152 = vld [vmem:[%s8 + $0xc0] sm:$0xf]
    %v2153 = vld [vmem:[%s8 + $0xc4] sm:$0xff]
    %v2154 = vld [vmem:[%s8 + $0xcc] sm:$0xff]
    %v2155 = vld [vmem:[%s8 + $0xd4] sm:$0xff]
    %v2156 = vld [vmem:[%s8 + $0xdc] sm:$0xf]
    %v2157 = vld [vmem:[%s8 + $0xe0] sm:$0xff]
    %v2158 = vld [vmem:[%s8 + $0xe8] sm:$0xff]
    %v2159 = vld [vmem:[%s8 + $0xf0] sm:$0xff]
    %v2160 = vld [vmem:[%s8 + $0xf8] sm:$0xf]
    %v2161 = vld [vmem:[%s8 + $0xfc] sm:$0xff]
    %v2162 = vld [vmem:[%s8 + $0x104] sm:$0xff]
    %v2163 = vld [vmem:[%s8 + $0x10c] sm:$0xff]
    %v2164 = vld [vmem:[%s8 + $0x114] sm:$0xf]
    %v2165 = vld [vmem:[%s8 + $0x118] sm:$0xff]
    %v2166 = vld [vmem:[%s8 + $0x120] sm:$0xff]
    %v2167 = vld [vmem:[%s8 + $0x128] sm:$0xff]
    %v2168 = vld [vmem:[%s8 + $0x130] sm:$0xf]
    %v2169 = vld [vmem:[%s8 + $0x134] sm:$0xff]
    %v2170 = vld [vmem:[%s8 + $0x13c] sm:$0xff]
    %v2171 = vld [vmem:[%s8 + $0x144] sm:$0xff]
    %v2172 = vld [vmem:[%s8 + $0x14c] sm:$0xf]
    %v2173 = vld [vmem:[%s8 + $0x150] sm:$0xff]
    %v2174 = vld [vmem:[%s8 + $0x158] sm:$0xff]
    %v2175 = vld [vmem:[%s8 + $0x160] sm:$0xff]
    %v2176 = vld [vmem:[%s8 + $0x168] sm:$0xf]
    %v2177 = vld [vmem:[%s8 + $0x16c] sm:$0xff]
    %v2178 = vld [vmem:[%s8 + $0x174] sm:$0xff]
    %v2179 = vld [vmem:[%s8 + $0x17c] sm:$0xff]
    %v2180 = vld [vmem:[%s8 + $0x184] sm:$0xf]
    %v2181 = vld [vmem:[%s8 + $0x188] sm:$0xff]
    %v2182 = vld [vmem:[%s8 + $0x190] sm:$0xff]
    %v2183 = vld [vmem:[%s8 + $0x198] sm:$0xff]
    %v2184 = vld [vmem:[%s8 + $0x1a0] sm:$0xf]
    %v2185 = vld [vmem:[%s8 + $0x1a4] sm:$0xff]
    %v2186 = vld [vmem:[%s8 + $0x1ac] sm:$0xff]
    %v2187 = vld [vmem:[%s8 + $0x1b4] sm:$0xff]
    %v2188 = vld [vmem:[%s8 + $0x1bc] sm:$0xf]
    %v2189 = vld [vmem:[%s8 + $0x1c0] sm:$0xff]
    %v2190 = vld [vmem:[%s8 + $0x1c8] sm:$0xff]
    %v2191 = vld [vmem:[%s8 + $0x1d0] sm:$0xff]
    %v2192 = vld [vmem:[%s8 + $0x1d8] sm:$0xf]
    %v2193 = vld [vmem:[%s8 + $0x1dc] sm:$0xff]
    %v2194 = vld [vmem:[%s8 + $0x1e4] sm:$0xff]
    %v2195 = vld [vmem:[%s8 + $0x1ec] sm:$0xff]
    %v2196 = vld [vmem:[%s8 + $0x1f4] sm:$0xf]
    %v2197 = vld [vmem:[%s8 + $0x1f8] sm:$0xff]
    %v2198 = vld [vmem:[%s8 + $0x200] sm:$0xff]
    %v2199 = vld [vmem:[%s8 + $0x208] sm:$0xff]
    %v2200 = vld [vmem:[%s8 + $0x210] sm:$0xf]
    %v2201 = vld [vmem:[%s8 + $0x214] sm:$0xff]
    %v2202 = vld [vmem:[%s8 + $0x21c] sm:$0xff]
    %v2203 = vld [vmem:[%s8 + $0x224] sm:$0xff]
    %v2204 = vld [vmem:[%s8 + $0x22c] sm:$0xf]
    %v2205 = vld [vmem:[%s8 + $0x230] sm:$0xff]
    %v2206 = vld [vmem:[%s8 + $0x238] sm:$0xff]
    %v2207 = vld [vmem:[%s8 + $0x240] sm:$0xff]
    %v2208 = vld [vmem:[%s8 + $0x248] sm:$0xf]
    %v2209 = vld [vmem:[%s8 + $0x24c] sm:$0xff]
    %v2210 = vld [vmem:[%s8 + $0x254] sm:$0xff]
    %v2211 = vld [vmem:[%s8 + $0x25c] sm:$0xff]
    %v2212 = vld [vmem:[%s8 + $0x264] sm:$0xf]
    %v2213 = vld [vmem:[%s8 + $0x268] sm:$0xff]
    %v2214 = vld [vmem:[%s8 + $0x270] sm:$0xff]
    %v2215 = vld [vmem:[%s8 + $0x278] sm:$0xff]
    %v2216 = vld [vmem:[%s8 + $0x280] sm:$0xf]
    %v2217 = vld [vmem:[%s8 + $0x284] sm:$0xff]
    %v2218 = vld [vmem:[%s8 + $0x28c] sm:$0xff]
    %v2219 = vld [vmem:[%s8 + $0x294] sm:$0xff]
    %v2220 = vld [vmem:[%s8 + $0x29c] sm:$0xf]
    %v2221 = vld [vmem:[%s8 + $0x2a0] sm:$0xff]
    %v2222 = vld [vmem:[%s8 + $0x2a8] sm:$0xff]
    %v2223 = vld [vmem:[%s8 + $0x2b0] sm:$0xff]
    %v2224 = vld [vmem:[%s8 + $0x2b8] sm:$0xf]
    %v2225 = vld [vmem:[%s8 + $0x2bc] sm:$0xff]
    %v2226 = vld [vmem:[%s8 + $0x2c4] sm:$0xff]
    %v2227 = vld [vmem:[%s8 + $0x2cc] sm:$0xff]
    %v2228 = vld [vmem:[%s8 + $0x2d4] sm:$0xf]
    %v2229 = vld [vmem:[%s8 + $0x2d8] sm:$0xff]
    %v2230 = vld [vmem:[%s8 + $0x2e0] sm:$0xff]
    %v2231 = vld [vmem:[%s8 + $0x2e8] sm:$0xff]
    %v2232 = vld [vmem:[%s8 + $0x2f0] sm:$0xf]
    %v2233 = vld [vmem:[%s8 + $0x2f4] sm:$0xff]
    %v2234 = vld [vmem:[%s8 + $0x2fc] sm:$0xff]
    %v2235 = vld [vmem:[%s8 + $0x304] sm:$0xff]
    %v2236 = vld [vmem:[%s8 + $0x30c] sm:$0xf]
    %v2237 = vld [vmem:[%s8 + $0x310] sm:$0xff]
    %v2238 = vld [vmem:[%s8 + $0x318] sm:$0xff]
    %v2239 = vld [vmem:[%s8 + $0x320] sm:$0xff]
    %v2240 = vld [vmem:[%s8 + $0x328] sm:$0xf]
    %v2241 = vld [vmem:[%s8 + $0x32c] sm:$0xff]
    %v2242 = vld [vmem:[%s8 + $0x334] sm:$0xff]
    %v2243 = vld [vmem:[%s8 + $0x33c] sm:$0xff]
    %v2244 = vld [vmem:[%s8 + $0x344] sm:$0xf]
    %v2245 = vld [vmem:[%s8 + $0x348] sm:$0xff]
    %v2246 = vld [vmem:[%s8 + $0x350] sm:$0xff]
    %v2247 = vld [vmem:[%s8 + $0x358] sm:$0xff]
    %v2248 = vld [vmem:[%s8 + $0x360] sm:$0xf]
    %v2249 = vld [vmem:[%s8 + $0x364] sm:$0xff]
    %v2250 = vld [vmem:[%s8 + $0x36c] sm:$0xff]
    %v2251 = vld [vmem:[%s8 + $0x374] sm:$0xff]
    %v2252 = vld [vmem:[%s8 + $0x37c] sm:$0xf]
    %v2253 = vld [vmem:[%s8 + $0x380] sm:$0xff]
    %v2254 = vld [vmem:[%s8 + $0x388] sm:$0xff]
    %v2255 = vld [vmem:[%s8 + $0x390] sm:$0xff]
    %v2256 = vld [vmem:[%s8 + $0x398] sm:$0xf]
    %v2257 = vld [vmem:[%s8 + $0x39c] sm:$0xff]
    %v2258 = vld [vmem:[%s8 + $0x3a4] sm:$0xff]
    %v2259 = vld [vmem:[%s8 + $0x3ac] sm:$0xff]
    %v2260 = vld [vmem:[%s8 + $0x3b4] sm:$0xf]
    %v2261 = vld [vmem:[%s8 + $0x3b8] sm:$0xff]
    %v2262 = vld [vmem:[%s8 + $0x3c0] sm:$0xff]
    %v2263 = vld [vmem:[%s8 + $0x3c8] sm:$0xff]
    %v2264 = vld [vmem:[%s8 + $0x3d0] sm:$0xf]
    %v2265 = vld [vmem:[%s8 + $0x3d4] sm:$0xff]
    %v2266 = vld [vmem:[%s8 + $0x3dc] sm:$0xff]
    %v2267 = vld [vmem:[%s8 + $0x3e4] sm:$0xff]
    %v2268 = vld [vmem:[%s8 + $0x3ec] sm:$0xf]
    %v2269 = vld [vmem:[%s8 + $0x3f0] sm:$0xff]
    %v2270 = vld [vmem:[%s8 + $0x3f8] sm:$0xff]
    %v2271 = vld [vmem:[%s8 + $0x400] sm:$0xff]
    %v2272 = vld [vmem:[%s8 + $0x408] sm:$0xf]
    %v2273 = vld [vmem:[%s8 + $0x40c] sm:$0xff]
    %v2274 = vld [vmem:[%s8 + $0x414] sm:$0xff]
    %v2275 = vld [vmem:[%s8 + $0x41c] sm:$0xff]
    %v2276 = vld [vmem:[%s8 + $0x424] sm:$0xf]
    %v2277 = vld [vmem:[%s8 + $0x428] sm:$0xff]
    %v2278 = vld [vmem:[%s8 + $0x430] sm:$0xff]
    %v2279 = vld [vmem:[%s8 + $0x438] sm:$0xff]
    %v2280 = vld [vmem:[%s8 + $0x440] sm:$0xf]
    %v2281 = vld [vmem:[%s8 + $0x444] sm:$0xff]
    %v2282 = vld [vmem:[%s8 + $0x44c] sm:$0xff]
    %v2283 = vld [vmem:[%s8 + $0x454] sm:$0xff]
    %v2284 = vld [vmem:[%s8 + $0x45c] sm:$0xf]
    %v2285 = vld [vmem:[%s8 + $0x460] sm:$0xff]
    %v2286 = vld [vmem:[%s8 + $0x468] sm:$0xff]
    %v2287 = vld [vmem:[%s8 + $0x470] sm:$0xff]
    %v2288 = vld [vmem:[%s8 + $0x478] sm:$0xf]
    %v2289 = vld [vmem:[%s8 + $0x47c] sm:$0xff]
    %v2290 = vld [vmem:[%s8 + $0x484] sm:$0xff]
    %v2291 = vld [vmem:[%s8 + $0x48c] sm:$0xff]
    %v2292 = vld [vmem:[%s8 + $0x494] sm:$0xf]
    %v2293 = vld [vmem:[%s8 + $0x498] sm:$0xff]
    %v2294 = vld [vmem:[%s8 + $0x4a0] sm:$0xff]
    %v2295 = vld [vmem:[%s8 + $0x4a8] sm:$0xff]
    %v2296 = vld [vmem:[%s8 + $0x4b0] sm:$0xf]
    %v2297 = vld [vmem:[%s8 + $0x4b4] sm:$0xff]
    %v2298 = vld [vmem:[%s8 + $0x4bc] sm:$0xff]
    %v2299 = vld [vmem:[%s8 + $0x4c4] sm:$0xff]
    %v2300 = vld [vmem:[%s8 + $0x4cc] sm:$0xf]
    %v2301 = vld [vmem:[%s8 + $0x4d0] sm:$0xff]
    %v2302 = vld [vmem:[%s8 + $0x4d8] sm:$0xff]
    %v2303 = vld [vmem:[%s8 + $0x4e0] sm:$0xff]
    %v2304 = vld [vmem:[%s8 + $0x4e8] sm:$0xf]
    %v2305 = vld [vmem:[%s8 + $0x4ec] sm:$0xff]
    %v2306 = vld [vmem:[%s8 + $0x4f4] sm:$0xff]
    %v2307 = vld [vmem:[%s8 + $0x4fc] sm:$0xff]
    %v2308 = vld [vmem:[%s8 + $0x504] sm:$0xf]
    %v2309 = vld [vmem:[%s8 + $0x508] sm:$0xff]
    %v2310 = vld [vmem:[%s8 + $0x510] sm:$0xff]
    %v2311 = vld [vmem:[%s8 + $0x518] sm:$0xff]
    %v2312 = vld [vmem:[%s8 + $0x520] sm:$0xf]
    %v2313 = vld [vmem:[%s8 + $0x524] sm:$0xff]
    %v2314 = vld [vmem:[%s8 + $0x52c] sm:$0xff]
    %v2315 = vld [vmem:[%s8 + $0x534] sm:$0xff]
    %v2316 = vld [vmem:[%s8 + $0x53c] sm:$0xf]
    %v2317 = vld [vmem:[%s8 + $0x540] sm:$0xff]
    %v2318 = vld [vmem:[%s8 + $0x548] sm:$0xff]
    %v2319 = vld [vmem:[%s8 + $0x550] sm:$0xff]
    %v2320 = vld [vmem:[%s8 + $0x558] sm:$0xf]
    %v2321 = vld [vmem:[%s8 + $0x55c] sm:$0xff]
    %v2322 = vld [vmem:[%s8 + $0x564] sm:$0xff]
    %v2323 = vld [vmem:[%s8 + $0x56c] sm:$0xff]
    %v2324 = vld [vmem:[%s8 + $0x574] sm:$0xf]
    %v2325 = vld [vmem:[%s8 + $0x578] sm:$0xff]
    %v2326 = vld [vmem:[%s8 + $0x580] sm:$0xff]
    %v2327 = vld [vmem:[%s8 + $0x588] sm:$0xff]
    %v2328 = vld [vmem:[%s8 + $0x590] sm:$0xf]
    %v2329 = vld [vmem:[%s8 + $0x594] sm:$0xff]
    %v2330 = vld [vmem:[%s8 + $0x59c] sm:$0xff]
    %v2331 = vld [vmem:[%s8 + $0x5a4] sm:$0xff]
    %v2332 = vld [vmem:[%s8 + $0x5ac] sm:$0xf]
    %v2333 = vld [vmem:[%s8 + $0x5b0] sm:$0xff]
    %v2334 = vld [vmem:[%s8 + $0x5b8] sm:$0xff]
    %v2335 = vld [vmem:[%s8 + $0x5c0] sm:$0xff]
    %v2336 = vld [vmem:[%s8 + $0x5c8] sm:$0xf]
    %v2337 = vld [vmem:[%s8 + $0x5cc] sm:$0xff]
    %v2338 = vld [vmem:[%s8 + $0x5d4] sm:$0xff]
    %v2339 = vld [vmem:[%s8 + $0x5dc] sm:$0xff]
    %v2340 = vld [vmem:[%s8 + $0x5e4] sm:$0xf]
    %v2341 = vld [vmem:[%s8 + $0x5e8] sm:$0xff]
    %v2342 = vld [vmem:[%s8 + $0x5f0] sm:$0xff]
    %v2343 = vld [vmem:[%s8 + $0x5f8] sm:$0xff]
    %v2344 = vld [vmem:[%s8 + $0x600] sm:$0xf]
    %v2345 = vld [vmem:[%s8 + $0x604] sm:$0xff]
    %v2346 = vld [vmem:[%s8 + $0x60c] sm:$0xff]
    %v2347 = vld [vmem:[%s8 + $0x614] sm:$0xff]
    %v2348 = vld [vmem:[%s8 + $0x61c] sm:$0xf]
    %v2349 = vld [vmem:[%s8 + $0x620] sm:$0xff]
    %v2350 = vld [vmem:[%s8 + $0x628] sm:$0xff]
    %v2351 = vld [vmem:[%s8 + $0x630] sm:$0xff]
    %v2352 = vld [vmem:[%s8 + $0x638] sm:$0xf]
    %v2353 = vld [vmem:[%s8 + $0x63c] sm:$0xff]
    %v2354 = vld [vmem:[%s8 + $0x644] sm:$0xff]
    %v2355 = vld [vmem:[%s8 + $0x64c] sm:$0xff]
    %v2356 = vld [vmem:[%s8 + $0x654] sm:$0xf]
    %v2357 = vld [vmem:[%s8 + $0x658] sm:$0xff]
    %v2358 = vld [vmem:[%s8 + $0x660] sm:$0xff]
    %v2359 = vld [vmem:[%s8 + $0x668] sm:$0xff]
    %v2360 = vld [vmem:[%s8 + $0x670] sm:$0xf]
    %v2361 = vld [vmem:[%s8 + $0x674] sm:$0xff]
    %v2362 = vld [vmem:[%s8 + $0x67c] sm:$0xff]
    %v2363 = vld [vmem:[%s8 + $0x684] sm:$0xff]
    %v2364 = vld [vmem:[%s8 + $0x68c] sm:$0xf]
    %v2365 = vld [vmem:[%s8 + $0x690] sm:$0xff]
    %v2366 = vld [vmem:[%s8 + $0x698] sm:$0xff]
    %v2367 = vld [vmem:[%s8 + $0x6a0] sm:$0xff]
    %v2368 = vld [vmem:[%s8 + $0x6a8] sm:$0xf]
    %v2369 = vld [vmem:[%s8 + $0x6ac] sm:$0xff]
    %v2370 = vld [vmem:[%s8 + $0x6b4] sm:$0xff]
    %v2371 = vld [vmem:[%s8 + $0x6bc] sm:$0xff]
    %v2372 = vld [vmem:[%s8 + $0x6c4] sm:$0xf]
    %v2373 = vld [vmem:[%s8 + $0x6c8] sm:$0xff]
    %v2374 = vld [vmem:[%s8 + $0x6d0] sm:$0xff]
    %v2375 = vld [vmem:[%s8 + $0x6d8] sm:$0xff]
    %v2376 = vld [vmem:[%s8 + $0x6e0] sm:$0xf]
    %v2377 = vld [vmem:[%s8 + $0x6e4] sm:$0xff]
    %v2378 = vld [vmem:[%s8 + $0x6ec] sm:$0xff]
    %v2379 = vld [vmem:[%s8 + $0x6f4] sm:$0xff]
    %v2380 = vld [vmem:[%s8 + $0x6fc] sm:$0xf]
    %v2381 = vld [vmem:[%s9] sm:$0x7f]
    %v2383 = vlaneseq
    %v2384 = vshrl.u32 %v2383, 7
    %v2385 = vsub.s32 0, %v2384
    %v2386 = vrot.slane %v2381, %v2385
    %v2387 = vlaneseq
    %v2388 = vshrl.u32 %v2387, 7
    %v2389 = vsub.s32 1, %v2388
    %v2390 = vrot.slane %v2381, %v2389
    %v2391 = vlaneseq
    %v2392 = vshrl.u32 %v2391, 7
    %v2393 = vsub.s32 2, %v2392
    %v2394 = vrot.slane %v2381, %v2393
    %v2395 = vlaneseq
    %v2396 = vshrl.u32 %v2395, 7
    %v2397 = vsub.s32 3, %v2396
    %v2398 = vrot.slane %v2381, %v2397
    %v2399 = vlaneseq
    %v2400 = vshrl.u32 %v2399, 7
    %v2401 = vsub.s32 4, %v2400
    %v2402 = vrot.slane %v2381, %v2401
    %v2403 = vlaneseq
    %v2404 = vshrl.u32 %v2403, 7
    %v2405 = vsub.s32 5, %v2404
    %v2406 = vrot.slane %v2381, %v2405
    %v2407 = vlaneseq
    %v2408 = vshrl.u32 %v2407, 7
    %v2409 = vsub.s32 6, %v2408
    %v2410 = vrot.slane %v2381, %v2409
    %v2674 = vunpack.c.l.b16 %v2125
    %v2675 = vunpack.c.h.b16 %v2125
    %v2676 = vunpack.c.l.b16 %v2126
    %v2677 = vunpack.c.h.b16 %v2126
    %v2678 = vunpack.c.l.b16 %v2127
    %v2679 = vunpack.c.h.b16 %v2127
    %v2680 = vunpack.c.l.b16 %v2128
    %v2681 = vunpack.c.l.b16 %v2129
    %v2682 = vunpack.c.h.b16 %v2129
    %v2683 = vunpack.c.l.b16 %v2130
    %v2684 = vunpack.c.h.b16 %v2130
    %v2685 = vunpack.c.l.b16 %v2131
    %v2686 = vunpack.c.h.b16 %v2131
    %v2687 = vunpack.c.l.b16 %v2132
    %v2688 = vunpack.c.l.b16 %v2133
    %v2689 = vunpack.c.h.b16 %v2133
    %v2690 = vunpack.c.l.b16 %v2134
    %v2691 = vunpack.c.h.b16 %v2134
    %v2692 = vunpack.c.l.b16 %v2135
    %v2693 = vunpack.c.h.b16 %v2135
    %v2694 = vunpack.c.l.b16 %v2136
    %v2695 = vunpack.c.l.b16 %v2137
    %v2696 = vunpack.c.h.b16 %v2137
    %v2697 = vunpack.c.l.b16 %v2138
    %v2698 = vunpack.c.h.b16 %v2138
    %v2699 = vunpack.c.l.b16 %v2139
    %v2700 = vunpack.c.h.b16 %v2139
    %v2701 = vunpack.c.l.b16 %v2140
    %v2702 = vunpack.c.l.b16 %v2141
    %v2703 = vunpack.c.h.b16 %v2141
    %v2704 = vunpack.c.l.b16 %v2142
    %v2705 = vunpack.c.h.b16 %v2142
    %v2706 = vunpack.c.l.b16 %v2143
    %v2707 = vunpack.c.h.b16 %v2143
    %v2708 = vunpack.c.l.b16 %v2144
    %v2709 = vunpack.c.l.b16 %v2145
    %v2710 = vunpack.c.h.b16 %v2145
    %v2711 = vunpack.c.l.b16 %v2146
    %v2712 = vunpack.c.h.b16 %v2146
    %v2713 = vunpack.c.l.b16 %v2147
    %v2714 = vunpack.c.h.b16 %v2147
    %v2715 = vunpack.c.l.b16 %v2148
    %v2716 = vunpack.c.l.b16 %v2149
    %v2717 = vunpack.c.h.b16 %v2149
    %v2718 = vunpack.c.l.b16 %v2150
    %v2719 = vunpack.c.h.b16 %v2150
    %v2720 = vunpack.c.l.b16 %v2151
    %v2721 = vunpack.c.h.b16 %v2151
    %v2722 = vunpack.c.l.b16 %v2152
    %v2723 = vunpack.c.l.b16 %v2153
    %v2724 = vunpack.c.h.b16 %v2153
    %v2725 = vunpack.c.l.b16 %v2154
    %v2726 = vunpack.c.h.b16 %v2154
    %v2727 = vunpack.c.l.b16 %v2155
    %v2728 = vunpack.c.h.b16 %v2155
    %v2729 = vunpack.c.l.b16 %v2156
    %v2730 = vunpack.c.l.b16 %v2157
    %v2731 = vunpack.c.h.b16 %v2157
    %v2732 = vunpack.c.l.b16 %v2158
    %v2733 = vunpack.c.h.b16 %v2158
    %v2734 = vunpack.c.l.b16 %v2159
    %v2735 = vunpack.c.h.b16 %v2159
    %v2736 = vunpack.c.l.b16 %v2160
    %v2737 = vunpack.c.l.b16 %v2161
    %v2738 = vunpack.c.h.b16 %v2161
    %v2739 = vunpack.c.l.b16 %v2162
    %v2740 = vunpack.c.h.b16 %v2162
    %v2741 = vunpack.c.l.b16 %v2163
    %v2742 = vunpack.c.h.b16 %v2163
    %v2743 = vunpack.c.l.b16 %v2164
    %v2744 = vunpack.c.l.b16 %v2165
    %v2745 = vunpack.c.h.b16 %v2165
    %v2746 = vunpack.c.l.b16 %v2166
    %v2747 = vunpack.c.h.b16 %v2166
    %v2748 = vunpack.c.l.b16 %v2167
    %v2749 = vunpack.c.h.b16 %v2167
    %v2750 = vunpack.c.l.b16 %v2168
    %v2751 = vunpack.c.l.b16 %v2169
    %v2752 = vunpack.c.h.b16 %v2169
    %v2753 = vunpack.c.l.b16 %v2170
    %v2754 = vunpack.c.h.b16 %v2170
    %v2755 = vunpack.c.l.b16 %v2171
    %v2756 = vunpack.c.h.b16 %v2171
    %v2757 = vunpack.c.l.b16 %v2172
    %v2758 = vunpack.c.l.b16 %v2173
    %v2759 = vunpack.c.h.b16 %v2173
    %v2760 = vunpack.c.l.b16 %v2174
    %v2761 = vunpack.c.h.b16 %v2174
    %v2762 = vunpack.c.l.b16 %v2175
    %v2763 = vunpack.c.h.b16 %v2175
    %v2764 = vunpack.c.l.b16 %v2176
    %v2765 = vunpack.c.l.b16 %v2177
    %v2766 = vunpack.c.h.b16 %v2177
    %v2767 = vunpack.c.l.b16 %v2178
    %v2768 = vunpack.c.h.b16 %v2178
    %v2769 = vunpack.c.l.b16 %v2179
    %v2770 = vunpack.c.h.b16 %v2179
    %v2771 = vunpack.c.l.b16 %v2180
    %v2772 = vunpack.c.l.b16 %v2181
    %v2773 = vunpack.c.h.b16 %v2181
    %v2774 = vunpack.c.l.b16 %v2182
    %v2775 = vunpack.c.h.b16 %v2182
    %v2776 = vunpack.c.l.b16 %v2183
    %v2777 = vunpack.c.h.b16 %v2183
    %v2778 = vunpack.c.l.b16 %v2184
    %v2779 = vunpack.c.l.b16 %v2185
    %v2780 = vunpack.c.h.b16 %v2185
    %v2781 = vunpack.c.l.b16 %v2186
    %v2782 = vunpack.c.h.b16 %v2186
    %v2783 = vunpack.c.l.b16 %v2187
    %v2784 = vunpack.c.h.b16 %v2187
    %v2785 = vunpack.c.l.b16 %v2188
    %v2786 = vunpack.c.l.b16 %v2189
    %v2787 = vunpack.c.h.b16 %v2189
    %v2788 = vunpack.c.l.b16 %v2190
    %v2789 = vunpack.c.h.b16 %v2190
    %v2790 = vunpack.c.l.b16 %v2191
    %v2791 = vunpack.c.h.b16 %v2191
    %v2792 = vunpack.c.l.b16 %v2192
    %v2793 = vunpack.c.l.b16 %v2193
    %v2794 = vunpack.c.h.b16 %v2193
    %v2795 = vunpack.c.l.b16 %v2194
    %v2796 = vunpack.c.h.b16 %v2194
    %v2797 = vunpack.c.l.b16 %v2195
    %v2798 = vunpack.c.h.b16 %v2195
    %v2799 = vunpack.c.l.b16 %v2196
    %v2800 = vunpack.c.l.b16 %v2197
    %v2801 = vunpack.c.h.b16 %v2197
    %v2802 = vunpack.c.l.b16 %v2198
    %v2803 = vunpack.c.h.b16 %v2198
    %v2804 = vunpack.c.l.b16 %v2199
    %v2805 = vunpack.c.h.b16 %v2199
    %v2806 = vunpack.c.l.b16 %v2200
    %v2807 = vunpack.c.l.b16 %v2201
    %v2808 = vunpack.c.h.b16 %v2201
    %v2809 = vunpack.c.l.b16 %v2202
    %v2810 = vunpack.c.h.b16 %v2202
    %v2811 = vunpack.c.l.b16 %v2203
    %v2812 = vunpack.c.h.b16 %v2203
    %v2813 = vunpack.c.l.b16 %v2204
    %v2814 = vunpack.c.l.b16 %v2205
    %v2815 = vunpack.c.h.b16 %v2205
    %v2816 = vunpack.c.l.b16 %v2206
    %v2817 = vunpack.c.h.b16 %v2206
    %v2818 = vunpack.c.l.b16 %v2207
    %v2819 = vunpack.c.h.b16 %v2207
    %v2820 = vunpack.c.l.b16 %v2208
    %v2821 = vunpack.c.l.b16 %v2209
    %v2822 = vunpack.c.h.b16 %v2209
    %v2823 = vunpack.c.l.b16 %v2210
    %v2824 = vunpack.c.h.b16 %v2210
    %v2825 = vunpack.c.l.b16 %v2211
    %v2826 = vunpack.c.h.b16 %v2211
    %v2827 = vunpack.c.l.b16 %v2212
    %v2828 = vunpack.c.l.b16 %v2213
    %v2829 = vunpack.c.h.b16 %v2213
    %v2830 = vunpack.c.l.b16 %v2214
    %v2831 = vunpack.c.h.b16 %v2214
    %v2832 = vunpack.c.l.b16 %v2215
    %v2833 = vunpack.c.h.b16 %v2215
    %v2834 = vunpack.c.l.b16 %v2216
    %v2835 = vunpack.c.l.b16 %v2217
    %v2836 = vunpack.c.h.b16 %v2217
    %v2837 = vunpack.c.l.b16 %v2218
    %v2838 = vunpack.c.h.b16 %v2218
    %v2839 = vunpack.c.l.b16 %v2219
    %v2840 = vunpack.c.h.b16 %v2219
    %v2841 = vunpack.c.l.b16 %v2220
    %v2842 = vunpack.c.l.b16 %v2221
    %v2843 = vunpack.c.h.b16 %v2221
    %v2844 = vunpack.c.l.b16 %v2222
    %v2845 = vunpack.c.h.b16 %v2222
    %v2846 = vunpack.c.l.b16 %v2223
    %v2847 = vunpack.c.h.b16 %v2223
    %v2848 = vunpack.c.l.b16 %v2224
    %v2849 = vunpack.c.l.b16 %v2225
    %v2850 = vunpack.c.h.b16 %v2225
    %v2851 = vunpack.c.l.b16 %v2226
    %v2852 = vunpack.c.h.b16 %v2226
    %v2853 = vunpack.c.l.b16 %v2227
    %v2854 = vunpack.c.h.b16 %v2227
    %v2855 = vunpack.c.l.b16 %v2228
    %v2856 = vunpack.c.l.b16 %v2229
    %v2857 = vunpack.c.h.b16 %v2229
    %v2858 = vunpack.c.l.b16 %v2230
    %v2859 = vunpack.c.h.b16 %v2230
    %v2860 = vunpack.c.l.b16 %v2231
    %v2861 = vunpack.c.h.b16 %v2231
    %v2862 = vunpack.c.l.b16 %v2232
    %v2863 = vunpack.c.l.b16 %v2233
    %v2864 = vunpack.c.h.b16 %v2233
    %v2865 = vunpack.c.l.b16 %v2234
    %v2866 = vunpack.c.h.b16 %v2234
    %v2867 = vunpack.c.l.b16 %v2235
    %v2868 = vunpack.c.h.b16 %v2235
    %v2869 = vunpack.c.l.b16 %v2236
    %v2870 = vunpack.c.l.b16 %v2237
    %v2871 = vunpack.c.h.b16 %v2237
    %v2872 = vunpack.c.l.b16 %v2238
    %v2873 = vunpack.c.h.b16 %v2238
    %v2874 = vunpack.c.l.b16 %v2239
    %v2875 = vunpack.c.h.b16 %v2239
    %v2876 = vunpack.c.l.b16 %v2240
    %v2877 = vunpack.c.l.b16 %v2241
    %v2878 = vunpack.c.h.b16 %v2241
    %v2879 = vunpack.c.l.b16 %v2242
    %v2880 = vunpack.c.h.b16 %v2242
    %v2881 = vunpack.c.l.b16 %v2243
    %v2882 = vunpack.c.h.b16 %v2243
    %v2883 = vunpack.c.l.b16 %v2244
    %v2884 = vunpack.c.l.b16 %v2245
    %v2885 = vunpack.c.h.b16 %v2245
    %v2886 = vunpack.c.l.b16 %v2246
    %v2887 = vunpack.c.h.b16 %v2246
    %v2888 = vunpack.c.l.b16 %v2247
    %v2889 = vunpack.c.h.b16 %v2247
    %v2890 = vunpack.c.l.b16 %v2248
    %v2891 = vunpack.c.l.b16 %v2249
    %v2892 = vunpack.c.h.b16 %v2249
    %v2893 = vunpack.c.l.b16 %v2250
    %v2894 = vunpack.c.h.b16 %v2250
    %v2895 = vunpack.c.l.b16 %v2251
    %v2896 = vunpack.c.h.b16 %v2251
    %v2897 = vunpack.c.l.b16 %v2252
    %v2898 = vunpack.c.l.b16 %v2253
    %v2899 = vunpack.c.h.b16 %v2253
    %v2900 = vunpack.c.l.b16 %v2254
    %v2901 = vunpack.c.h.b16 %v2254
    %v2902 = vunpack.c.l.b16 %v2255
    %v2903 = vunpack.c.h.b16 %v2255
    %v2904 = vunpack.c.l.b16 %v2256
    %v2905 = vunpack.c.l.b16 %v2257
    %v2906 = vunpack.c.h.b16 %v2257
    %v2907 = vunpack.c.l.b16 %v2258
    %v2908 = vunpack.c.h.b16 %v2258
    %v2909 = vunpack.c.l.b16 %v2259
    %v2910 = vunpack.c.h.b16 %v2259
    %v2911 = vunpack.c.l.b16 %v2260
    %v2912 = vunpack.c.l.b16 %v2261
    %v2913 = vunpack.c.h.b16 %v2261
    %v2914 = vunpack.c.l.b16 %v2262
    %v2915 = vunpack.c.h.b16 %v2262
    %v2916 = vunpack.c.l.b16 %v2263
    %v2917 = vunpack.c.h.b16 %v2263
    %v2918 = vunpack.c.l.b16 %v2264
    %v2919 = vunpack.c.l.b16 %v2265
    %v2920 = vunpack.c.h.b16 %v2265
    %v2921 = vunpack.c.l.b16 %v2266
    %v2922 = vunpack.c.h.b16 %v2266
    %v2923 = vunpack.c.l.b16 %v2267
    %v2924 = vunpack.c.h.b16 %v2267
    %v2925 = vunpack.c.l.b16 %v2268
    %v2926 = vunpack.c.l.b16 %v2269
    %v2927 = vunpack.c.h.b16 %v2269
    %v2928 = vunpack.c.l.b16 %v2270
    %v2929 = vunpack.c.h.b16 %v2270
    %v2930 = vunpack.c.l.b16 %v2271
    %v2931 = vunpack.c.h.b16 %v2271
    %v2932 = vunpack.c.l.b16 %v2272
    %v2933 = vunpack.c.l.b16 %v2273
    %v2934 = vunpack.c.h.b16 %v2273
    %v2935 = vunpack.c.l.b16 %v2274
    %v2936 = vunpack.c.h.b16 %v2274
    %v2937 = vunpack.c.l.b16 %v2275
    %v2938 = vunpack.c.h.b16 %v2275
    %v2939 = vunpack.c.l.b16 %v2276
    %v2940 = vunpack.c.l.b16 %v2277
    %v2941 = vunpack.c.h.b16 %v2277
    %v2942 = vunpack.c.l.b16 %v2278
    %v2943 = vunpack.c.h.b16 %v2278
    %v2944 = vunpack.c.l.b16 %v2279
    %v2945 = vunpack.c.h.b16 %v2279
    %v2946 = vunpack.c.l.b16 %v2280
    %v2947 = vunpack.c.l.b16 %v2281
    %v2948 = vunpack.c.h.b16 %v2281
    %v2949 = vunpack.c.l.b16 %v2282
    %v2950 = vunpack.c.h.b16 %v2282
    %v2951 = vunpack.c.l.b16 %v2283
    %v2952 = vunpack.c.h.b16 %v2283
    %v2953 = vunpack.c.l.b16 %v2284
    %v2954 = vunpack.c.l.b16 %v2285
    %v2955 = vunpack.c.h.b16 %v2285
    %v2956 = vunpack.c.l.b16 %v2286
    %v2957 = vunpack.c.h.b16 %v2286
    %v2958 = vunpack.c.l.b16 %v2287
    %v2959 = vunpack.c.h.b16 %v2287
    %v2960 = vunpack.c.l.b16 %v2288
    %v2961 = vunpack.c.l.b16 %v2289
    %v2962 = vunpack.c.h.b16 %v2289
    %v2963 = vunpack.c.l.b16 %v2290
    %v2964 = vunpack.c.h.b16 %v2290
    %v2965 = vunpack.c.l.b16 %v2291
    %v2966 = vunpack.c.h.b16 %v2291
    %v2967 = vunpack.c.l.b16 %v2292
    %v2968 = vunpack.c.l.b16 %v2293
    %v2969 = vunpack.c.h.b16 %v2293
    %v2970 = vunpack.c.l.b16 %v2294
    %v2971 = vunpack.c.h.b16 %v2294
    %v2972 = vunpack.c.l.b16 %v2295
    %v2973 = vunpack.c.h.b16 %v2295
    %v2974 = vunpack.c.l.b16 %v2296
    %v2975 = vunpack.c.l.b16 %v2297
    %v2976 = vunpack.c.h.b16 %v2297
    %v2977 = vunpack.c.l.b16 %v2298
    %v2978 = vunpack.c.h.b16 %v2298
    %v2979 = vunpack.c.l.b16 %v2299
    %v2980 = vunpack.c.h.b16 %v2299
    %v2981 = vunpack.c.l.b16 %v2300
    %v2982 = vunpack.c.l.b16 %v2301
    %v2983 = vunpack.c.h.b16 %v2301
    %v2984 = vunpack.c.l.b16 %v2302
    %v2985 = vunpack.c.h.b16 %v2302
    %v2986 = vunpack.c.l.b16 %v2303
    %v2987 = vunpack.c.h.b16 %v2303
    %v2988 = vunpack.c.l.b16 %v2304
    %v2989 = vunpack.c.l.b16 %v2305
    %v2990 = vunpack.c.h.b16 %v2305
    %v2991 = vunpack.c.l.b16 %v2306
    %v2992 = vunpack.c.h.b16 %v2306
    %v2993 = vunpack.c.l.b16 %v2307
    %v2994 = vunpack.c.h.b16 %v2307
    %v2995 = vunpack.c.l.b16 %v2308
    %v2996 = vunpack.c.l.b16 %v2309
    %v2997 = vunpack.c.h.b16 %v2309
    %v2998 = vunpack.c.l.b16 %v2310
    %v2999 = vunpack.c.h.b16 %v2310
    %v3000 = vunpack.c.l.b16 %v2311
    %v3001 = vunpack.c.h.b16 %v2311
    %v3002 = vunpack.c.l.b16 %v2312
    %v3003 = vunpack.c.l.b16 %v2313
    %v3004 = vunpack.c.h.b16 %v2313
    %v3005 = vunpack.c.l.b16 %v2314
    %v3006 = vunpack.c.h.b16 %v2314
    %v3007 = vunpack.c.l.b16 %v2315
    %v3008 = vunpack.c.h.b16 %v2315
    %v3009 = vunpack.c.l.b16 %v2316
    %v3010 = vunpack.c.l.b16 %v2317
    %v3011 = vunpack.c.h.b16 %v2317
    %v3012 = vunpack.c.l.b16 %v2318
    %v3013 = vunpack.c.h.b16 %v2318
    %v3014 = vunpack.c.l.b16 %v2319
    %v3015 = vunpack.c.h.b16 %v2319
    %v3016 = vunpack.c.l.b16 %v2320
    %v3017 = vunpack.c.l.b16 %v2321
    %v3018 = vunpack.c.h.b16 %v2321
    %v3019 = vunpack.c.l.b16 %v2322
    %v3020 = vunpack.c.h.b16 %v2322
    %v3021 = vunpack.c.l.b16 %v2323
    %v3022 = vunpack.c.h.b16 %v2323
    %v3023 = vunpack.c.l.b16 %v2324
    %v3024 = vunpack.c.l.b16 %v2325
    %v3025 = vunpack.c.h.b16 %v2325
    %v3026 = vunpack.c.l.b16 %v2326
    %v3027 = vunpack.c.h.b16 %v2326
    %v3028 = vunpack.c.l.b16 %v2327
    %v3029 = vunpack.c.h.b16 %v2327
    %v3030 = vunpack.c.l.b16 %v2328
    %v3031 = vunpack.c.l.b16 %v2329
    %v3032 = vunpack.c.h.b16 %v2329
    %v3033 = vunpack.c.l.b16 %v2330
    %v3034 = vunpack.c.h.b16 %v2330
    %v3035 = vunpack.c.l.b16 %v2331
    %v3036 = vunpack.c.h.b16 %v2331
    %v3037 = vunpack.c.l.b16 %v2332
    %v3038 = vunpack.c.l.b16 %v2333
    %v3039 = vunpack.c.h.b16 %v2333
    %v3040 = vunpack.c.l.b16 %v2334
    %v3041 = vunpack.c.h.b16 %v2334
    %v3042 = vunpack.c.l.b16 %v2335
    %v3043 = vunpack.c.h.b16 %v2335
    %v3044 = vunpack.c.l.b16 %v2336
    %v3045 = vunpack.c.l.b16 %v2337
    %v3046 = vunpack.c.h.b16 %v2337
    %v3047 = vunpack.c.l.b16 %v2338
    %v3048 = vunpack.c.h.b16 %v2338
    %v3049 = vunpack.c.l.b16 %v2339
    %v3050 = vunpack.c.h.b16 %v2339
    %v3051 = vunpack.c.l.b16 %v2340
    %v3052 = vunpack.c.l.b16 %v2341
    %v3053 = vunpack.c.h.b16 %v2341
    %v3054 = vunpack.c.l.b16 %v2342
    %v3055 = vunpack.c.h.b16 %v2342
    %v3056 = vunpack.c.l.b16 %v2343
    %v3057 = vunpack.c.h.b16 %v2343
    %v3058 = vunpack.c.l.b16 %v2344
    %v3059 = vunpack.c.l.b16 %v2345
    %v3060 = vunpack.c.h.b16 %v2345
    %v3061 = vunpack.c.l.b16 %v2346
    %v3062 = vunpack.c.h.b16 %v2346
    %v3063 = vunpack.c.l.b16 %v2347
    %v3064 = vunpack.c.h.b16 %v2347
    %v3065 = vunpack.c.l.b16 %v2348
    %v3066 = vunpack.c.l.b16 %v2349
    %v3067 = vunpack.c.h.b16 %v2349
    %v3068 = vunpack.c.l.b16 %v2350
    %v3069 = vunpack.c.h.b16 %v2350
    %v3070 = vunpack.c.l.b16 %v2351
    %v3071 = vunpack.c.h.b16 %v2351
    %v3072 = vunpack.c.l.b16 %v2352
    %v3073 = vunpack.c.l.b16 %v2353
    %v3074 = vunpack.c.h.b16 %v2353
    %v3075 = vunpack.c.l.b16 %v2354
    %v3076 = vunpack.c.h.b16 %v2354
    %v3077 = vunpack.c.l.b16 %v2355
    %v3078 = vunpack.c.h.b16 %v2355
    %v3079 = vunpack.c.l.b16 %v2356
    %v3080 = vunpack.c.l.b16 %v2357
    %v3081 = vunpack.c.h.b16 %v2357
    %v3082 = vunpack.c.l.b16 %v2358
    %v3083 = vunpack.c.h.b16 %v2358
    %v3084 = vunpack.c.l.b16 %v2359
    %v3085 = vunpack.c.h.b16 %v2359
    %v3086 = vunpack.c.l.b16 %v2360
    %v3087 = vunpack.c.l.b16 %v2361
    %v3088 = vunpack.c.h.b16 %v2361
    %v3089 = vunpack.c.l.b16 %v2362
    %v3090 = vunpack.c.h.b16 %v2362
    %v3091 = vunpack.c.l.b16 %v2363
    %v3092 = vunpack.c.h.b16 %v2363
    %v3093 = vunpack.c.l.b16 %v2364
    %v3094 = vunpack.c.l.b16 %v2365
    %v3095 = vunpack.c.h.b16 %v2365
    %v3096 = vunpack.c.l.b16 %v2366
    %v3097 = vunpack.c.h.b16 %v2366
    %v3098 = vunpack.c.l.b16 %v2367
    %v3099 = vunpack.c.h.b16 %v2367
    %v3100 = vunpack.c.l.b16 %v2368
    %v3101 = vunpack.c.l.b16 %v2369
    %v3102 = vunpack.c.h.b16 %v2369
    %v3103 = vunpack.c.l.b16 %v2370
    %v3104 = vunpack.c.h.b16 %v2370
    %v3105 = vunpack.c.l.b16 %v2371
    %v3106 = vunpack.c.h.b16 %v2371
    %v3107 = vunpack.c.l.b16 %v2372
    %v3108 = vunpack.c.l.b16 %v2373
    %v3109 = vunpack.c.h.b16 %v2373
    %v3110 = vunpack.c.l.b16 %v2374
    %v3111 = vunpack.c.h.b16 %v2374
    %v3112 = vunpack.c.l.b16 %v2375
    %v3113 = vunpack.c.h.b16 %v2375
    %v3114 = vunpack.c.l.b16 %v2376
    %v3115 = vunpack.c.l.b16 %v2377
    %v3116 = vunpack.c.h.b16 %v2377
    %v3117 = vunpack.c.l.b16 %v2378
    %v3118 = vunpack.c.h.b16 %v2378
    %v3119 = vunpack.c.l.b16 %v2379
    %v3120 = vunpack.c.h.b16 %v2379
    %v3121 = vunpack.c.l.b16 %v2380
    %v3122 = vpack.c.b16 %v2681, %v2674
    %v3123 = vpack.c.b16 %v2682, %v2675
    %v3124 = vpack.c.b16 %v2683, %v2676
    %v3125 = vpack.c.b16 %v2684, %v2677
    %v3126 = vpack.c.b16 %v2685, %v2678
    %v3127 = vpack.c.b16 %v2686, %v2679
    %v3128 = vpack.c.b16 %v2687, %v2680
    %v3129 = vpack.c.b16 %v2695, %v2688
    %v3130 = vpack.c.b16 %v2696, %v2689
    %v3131 = vpack.c.b16 %v2697, %v2690
    %v3132 = vpack.c.b16 %v2698, %v2691
    %v3133 = vpack.c.b16 %v2699, %v2692
    %v3134 = vpack.c.b16 %v2700, %v2693
    %v3135 = vpack.c.b16 %v2701, %v2694
    %v3136 = vpack.c.b16 %v2709, %v2702
    %v3137 = vpack.c.b16 %v2710, %v2703
    %v3138 = vpack.c.b16 %v2711, %v2704
    %v3139 = vpack.c.b16 %v2712, %v2705
    %v3140 = vpack.c.b16 %v2713, %v2706
    %v3141 = vpack.c.b16 %v2714, %v2707
    %v3142 = vpack.c.b16 %v2715, %v2708
    %v3143 = vpack.c.b16 %v2723, %v2716
    %v3144 = vpack.c.b16 %v2724, %v2717
    %v3145 = vpack.c.b16 %v2725, %v2718
    %v3146 = vpack.c.b16 %v2726, %v2719
    %v3147 = vpack.c.b16 %v2727, %v2720
    %v3148 = vpack.c.b16 %v2728, %v2721
    %v3149 = vpack.c.b16 %v2729, %v2722
    %v3150 = vpack.c.b16 %v2737, %v2730
    %v3151 = vpack.c.b16 %v2738, %v2731
    %v3152 = vpack.c.b16 %v2739, %v2732
    %v3153 = vpack.c.b16 %v2740, %v2733
    %v3154 = vpack.c.b16 %v2741, %v2734
    %v3155 = vpack.c.b16 %v2742, %v2735
    %v3156 = vpack.c.b16 %v2743, %v2736
    %v3157 = vpack.c.b16 %v2751, %v2744
    %v3158 = vpack.c.b16 %v2752, %v2745
    %v3159 = vpack.c.b16 %v2753, %v2746
    %v3160 = vpack.c.b16 %v2754, %v2747
    %v3161 = vpack.c.b16 %v2755, %v2748
    %v3162 = vpack.c.b16 %v2756, %v2749
    %v3163 = vpack.c.b16 %v2757, %v2750
    %v3164 = vpack.c.b16 %v2765, %v2758
    %v3165 = vpack.c.b16 %v2766, %v2759
    %v3166 = vpack.c.b16 %v2767, %v2760
    %v3167 = vpack.c.b16 %v2768, %v2761
    %v3168 = vpack.c.b16 %v2769, %v2762
    %v3169 = vpack.c.b16 %v2770, %v2763
    %v3170 = vpack.c.b16 %v2771, %v2764
    %v3171 = vpack.c.b16 %v2779, %v2772
    %v3172 = vpack.c.b16 %v2780, %v2773
    %v3173 = vpack.c.b16 %v2781, %v2774
    %v3174 = vpack.c.b16 %v2782, %v2775
    %v3175 = vpack.c.b16 %v2783, %v2776
    %v3176 = vpack.c.b16 %v2784, %v2777
    %v3177 = vpack.c.b16 %v2785, %v2778
    %v3178 = vpack.c.b16 %v2793, %v2786
    %v3179 = vpack.c.b16 %v2794, %v2787
    %v3180 = vpack.c.b16 %v2795, %v2788
    %v3181 = vpack.c.b16 %v2796, %v2789
    %v3182 = vpack.c.b16 %v2797, %v2790
    %v3183 = vpack.c.b16 %v2798, %v2791
    %v3184 = vpack.c.b16 %v2799, %v2792
    %v3185 = vpack.c.b16 %v2807, %v2800
    %v3186 = vpack.c.b16 %v2808, %v2801
    %v3187 = vpack.c.b16 %v2809, %v2802
    %v3188 = vpack.c.b16 %v2810, %v2803
    %v3189 = vpack.c.b16 %v2811, %v2804
    %v3190 = vpack.c.b16 %v2812, %v2805
    %v3191 = vpack.c.b16 %v2813, %v2806
    %v3192 = vpack.c.b16 %v2821, %v2814
    %v3193 = vpack.c.b16 %v2822, %v2815
    %v3194 = vpack.c.b16 %v2823, %v2816
    %v3195 = vpack.c.b16 %v2824, %v2817
    %v3196 = vpack.c.b16 %v2825, %v2818
    %v3197 = vpack.c.b16 %v2826, %v2819
    %v3198 = vpack.c.b16 %v2827, %v2820
    %v3199 = vpack.c.b16 %v2835, %v2828
    %v3200 = vpack.c.b16 %v2836, %v2829
    %v3201 = vpack.c.b16 %v2837, %v2830
    %v3202 = vpack.c.b16 %v2838, %v2831
    %v3203 = vpack.c.b16 %v2839, %v2832
    %v3204 = vpack.c.b16 %v2840, %v2833
    %v3205 = vpack.c.b16 %v2841, %v2834
    %v3206 = vpack.c.b16 %v2849, %v2842
    %v3207 = vpack.c.b16 %v2850, %v2843
    %v3208 = vpack.c.b16 %v2851, %v2844
    %v3209 = vpack.c.b16 %v2852, %v2845
    %v3210 = vpack.c.b16 %v2853, %v2846
    %v3211 = vpack.c.b16 %v2854, %v2847
    %v3212 = vpack.c.b16 %v2855, %v2848
    %v3213 = vpack.c.b16 %v2863, %v2856
    %v3214 = vpack.c.b16 %v2864, %v2857
    %v3215 = vpack.c.b16 %v2865, %v2858
    %v3216 = vpack.c.b16 %v2866, %v2859
    %v3217 = vpack.c.b16 %v2867, %v2860
    %v3218 = vpack.c.b16 %v2868, %v2861
    %v3219 = vpack.c.b16 %v2869, %v2862
    %v3220 = vpack.c.b16 %v2877, %v2870
    %v3221 = vpack.c.b16 %v2878, %v2871
    %v3222 = vpack.c.b16 %v2879, %v2872
    %v3223 = vpack.c.b16 %v2880, %v2873
    %v3224 = vpack.c.b16 %v2881, %v2874
    %v3225 = vpack.c.b16 %v2882, %v2875
    %v3226 = vpack.c.b16 %v2883, %v2876
    %v3227 = vpack.c.b16 %v2891, %v2884
    %v3228 = vpack.c.b16 %v2892, %v2885
    %v3229 = vpack.c.b16 %v2893, %v2886
    %v3230 = vpack.c.b16 %v2894, %v2887
    %v3231 = vpack.c.b16 %v2895, %v2888
    %v3232 = vpack.c.b16 %v2896, %v2889
    %v3233 = vpack.c.b16 %v2897, %v2890
    %v3234 = vpack.c.b16 %v2905, %v2898
    %v3235 = vpack.c.b16 %v2906, %v2899
    %v3236 = vpack.c.b16 %v2907, %v2900
    %v3237 = vpack.c.b16 %v2908, %v2901
    %v3238 = vpack.c.b16 %v2909, %v2902
    %v3239 = vpack.c.b16 %v2910, %v2903
    %v3240 = vpack.c.b16 %v2911, %v2904
    %v3241 = vpack.c.b16 %v2919, %v2912
    %v3242 = vpack.c.b16 %v2920, %v2913
    %v3243 = vpack.c.b16 %v2921, %v2914
    %v3244 = vpack.c.b16 %v2922, %v2915
    %v3245 = vpack.c.b16 %v2923, %v2916
    %v3246 = vpack.c.b16 %v2924, %v2917
    %v3247 = vpack.c.b16 %v2925, %v2918
    %v3248 = vpack.c.b16 %v2933, %v2926
    %v3249 = vpack.c.b16 %v2934, %v2927
    %v3250 = vpack.c.b16 %v2935, %v2928
    %v3251 = vpack.c.b16 %v2936, %v2929
    %v3252 = vpack.c.b16 %v2937, %v2930
    %v3253 = vpack.c.b16 %v2938, %v2931
    %v3254 = vpack.c.b16 %v2939, %v2932
    %v3255 = vpack.c.b16 %v2947, %v2940
    %v3256 = vpack.c.b16 %v2948, %v2941
    %v3257 = vpack.c.b16 %v2949, %v2942
    %v3258 = vpack.c.b16 %v2950, %v2943
    %v3259 = vpack.c.b16 %v2951, %v2944
    %v3260 = vpack.c.b16 %v2952, %v2945
    %v3261 = vpack.c.b16 %v2953, %v2946
    %v3262 = vpack.c.b16 %v2961, %v2954
    %v3263 = vpack.c.b16 %v2962, %v2955
    %v3264 = vpack.c.b16 %v2963, %v2956
    %v3265 = vpack.c.b16 %v2964, %v2957
    %v3266 = vpack.c.b16 %v2965, %v2958
    %v3267 = vpack.c.b16 %v2966, %v2959
    %v3268 = vpack.c.b16 %v2967, %v2960
    %v3269 = vpack.c.b16 %v2975, %v2968
    %v3270 = vpack.c.b16 %v2976, %v2969
    %v3271 = vpack.c.b16 %v2977, %v2970
    %v3272 = vpack.c.b16 %v2978, %v2971
    %v3273 = vpack.c.b16 %v2979, %v2972
    %v3274 = vpack.c.b16 %v2980, %v2973
    %v3275 = vpack.c.b16 %v2981, %v2974
    %v3276 = vpack.c.b16 %v2989, %v2982
    %v3277 = vpack.c.b16 %v2990, %v2983
    %v3278 = vpack.c.b16 %v2991, %v2984
    %v3279 = vpack.c.b16 %v2992, %v2985
    %v3280 = vpack.c.b16 %v2993, %v2986
    %v3281 = vpack.c.b16 %v2994, %v2987
    %v3282 = vpack.c.b16 %v2995, %v2988
    %v3283 = vpack.c.b16 %v3003, %v2996
    %v3284 = vpack.c.b16 %v3004, %v2997
    %v3285 = vpack.c.b16 %v3005, %v2998
    %v3286 = vpack.c.b16 %v3006, %v2999
    %v3287 = vpack.c.b16 %v3007, %v3000
    %v3288 = vpack.c.b16 %v3008, %v3001
    %v3289 = vpack.c.b16 %v3009, %v3002
    %v3290 = vpack.c.b16 %v3017, %v3010
    %v3291 = vpack.c.b16 %v3018, %v3011
    %v3292 = vpack.c.b16 %v3019, %v3012
    %v3293 = vpack.c.b16 %v3020, %v3013
    %v3294 = vpack.c.b16 %v3021, %v3014
    %v3295 = vpack.c.b16 %v3022, %v3015
    %v3296 = vpack.c.b16 %v3023, %v3016
    %v3297 = vpack.c.b16 %v3031, %v3024
    %v3298 = vpack.c.b16 %v3032, %v3025
    %v3299 = vpack.c.b16 %v3033, %v3026
    %v3300 = vpack.c.b16 %v3034, %v3027
    %v3301 = vpack.c.b16 %v3035, %v3028
    %v3302 = vpack.c.b16 %v3036, %v3029
    %v3303 = vpack.c.b16 %v3037, %v3030
    %v3304 = vpack.c.b16 %v3045, %v3038
    %v3305 = vpack.c.b16 %v3046, %v3039
    %v3306 = vpack.c.b16 %v3047, %v3040
    %v3307 = vpack.c.b16 %v3048, %v3041
    %v3308 = vpack.c.b16 %v3049, %v3042
    %v3309 = vpack.c.b16 %v3050, %v3043
    %v3310 = vpack.c.b16 %v3051, %v3044
    %v3311 = vpack.c.b16 %v3059, %v3052
    %v3312 = vpack.c.b16 %v3060, %v3053
    %v3313 = vpack.c.b16 %v3061, %v3054
    %v3314 = vpack.c.b16 %v3062, %v3055
    %v3315 = vpack.c.b16 %v3063, %v3056
    %v3316 = vpack.c.b16 %v3064, %v3057
    %v3317 = vpack.c.b16 %v3065, %v3058
    %v3318 = vpack.c.b16 %v3073, %v3066
    %v3319 = vpack.c.b16 %v3074, %v3067
    %v3320 = vpack.c.b16 %v3075, %v3068
    %v3321 = vpack.c.b16 %v3076, %v3069
    %v3322 = vpack.c.b16 %v3077, %v3070
    %v3323 = vpack.c.b16 %v3078, %v3071
    %v3324 = vpack.c.b16 %v3079, %v3072
    %v3325 = vpack.c.b16 %v3087, %v3080
    %v3326 = vpack.c.b16 %v3088, %v3081
    %v3327 = vpack.c.b16 %v3089, %v3082
    %v3328 = vpack.c.b16 %v3090, %v3083
    %v3329 = vpack.c.b16 %v3091, %v3084
    %v3330 = vpack.c.b16 %v3092, %v3085
    %v3331 = vpack.c.b16 %v3093, %v3086
    %v3332 = vpack.c.b16 %v3101, %v3094
    %v3333 = vpack.c.b16 %v3102, %v3095
    %v3334 = vpack.c.b16 %v3103, %v3096
    %v3335 = vpack.c.b16 %v3104, %v3097
    %v3336 = vpack.c.b16 %v3105, %v3098
    %v3337 = vpack.c.b16 %v3106, %v3099
    %v3338 = vpack.c.b16 %v3107, %v3100
    %v3339 = vpack.c.b16 %v3115, %v3108
    %v3340 = vpack.c.b16 %v3116, %v3109
    %v3341 = vpack.c.b16 %v3117, %v3110
    %v3342 = vpack.c.b16 %v3118, %v3111
    %v3343 = vpack.c.b16 %v3119, %v3112
    %v3344 = vpack.c.b16 %v3120, %v3113
    %v3345 = vpack.c.b16 %v3121, %v3114
    %3570 = vmatprep.subr.bf16.mxu0 %v3172
    %3571 = vmatpush1.bf16.msra.mxu0 %v3171
    %3572 = vmatprep.subr.bf16.mxu0 %v3165
    %3573 = vmatpush1.bf16.msra.mxu0 %v3164
    %3574 = vmatprep.subr.bf16.mxu0 %v3158
    %3575 = vmatpush1.bf16.msra.mxu0 %v3157
    %3576 = vmatprep.subr.bf16.mxu0 %v3151
    %3577 = vmatpush1.bf16.msra.mxu0 %v3150
    %3578 = vmatprep.subr.bf16.mxu0 %v3144
    %3579 = vmatpush1.bf16.msra.mxu0 %v3143
    %3580 = vmatprep.subr.bf16.mxu0 %v3137
    %3581 = vmatpush1.bf16.msra.mxu0 %v3136
    %3582 = vmatprep.subr.bf16.mxu0 %v3130
    %3583 = vmatpush1.bf16.msra.mxu0 %v3129
    %3584 = vmatprep.subr.bf16.mxu0 %v3123
    %3585 = vmatpush1.bf16.msra.mxu0 %v3122
    %3586 = vmatprep.subr.bf16.mxu0 %v3228
    %3587 = vmatpush2.bf16.msra.mxu0 %v3227
    %3588 = vmatprep.subr.bf16.mxu0 %v3221
    %3589 = vmatpush2.bf16.msra.mxu0 %v3220
    %3590 = vmatprep.subr.bf16.mxu0 %v3214
    %3591 = vmatpush2.bf16.msra.mxu0 %v3213
    %3592 = vmatprep.subr.bf16.mxu0 %v3207
    %3593 = vmatpush2.bf16.msra.mxu0 %v3206
    %3594 = vmatprep.subr.bf16.mxu0 %v3200
    %3595 = vmatpush2.bf16.msra.mxu0 %v3199
    %3596 = vmatprep.subr.bf16.mxu0 %v3193
    %3597 = vmatpush2.bf16.msra.mxu0 %v3192
    %3598 = vmatprep.subr.bf16.mxu0 %v3186
    %3599 = vmatpush2.bf16.msra.mxu0 %v3185
    %3600 = vmatprep.subr.bf16.mxu0 %v3179
    %3601 = vmatpush2.bf16.msra.mxu0 %v3178
    %3602 = vmatprep.mubr.bf16.mxu0 %v2122
    %3603 = vmatmul.mubr.bf16.gmra.mxu0 %v2121
    %v3604 = vpop.f32.mrf.mxu0
    %v3605 = vadd.f32 %v2386, %v3604
    %v3606 = vpop.f32.mrf.mxu0
    %v3607 = vadd.f32 %v2390, %v3606
    %v3608 = vpop.f32.mrf.mxu0
    %v3609 = vpop.f32.mrf.mxu0
    %3610 = vdwg.mxu0
    %3611 = vmatprep.subr.bf16.mxu0 %v3284
    %3612 = vmatpush1.bf16.msra.mxu0 %v3283
    %3613 = vmatprep.subr.bf16.mxu0 %v3277
    %3614 = vmatpush1.bf16.msra.mxu0 %v3276
    %3615 = vmatprep.subr.bf16.mxu0 %v3270
    %3616 = vmatpush1.bf16.msra.mxu0 %v3269
    %3617 = vmatprep.subr.bf16.mxu0 %v3263
    %3618 = vmatpush1.bf16.msra.mxu0 %v3262
    %3619 = vmatprep.subr.bf16.mxu0 %v3256
    %3620 = vmatpush1.bf16.msra.mxu0 %v3255
    %3621 = vmatprep.subr.bf16.mxu0 %v3249
    %3622 = vmatpush1.bf16.msra.mxu0 %v3248
    %3623 = vmatprep.subr.bf16.mxu0 %v3242
    %3624 = vmatpush1.bf16.msra.mxu0 %v3241
    %3625 = vmatprep.subr.bf16.mxu0 %v3235
    %3626 = vmatpush1.bf16.msra.mxu0 %v3234
    %3627 = vmatprep.subr.bf16.mxu0 %v3340
    %3628 = vmatpush2.bf16.msra.mxu0 %v3339
    %3629 = vmatprep.subr.bf16.mxu0 %v3333
    %3630 = vmatpush2.bf16.msra.mxu0 %v3332
    %3631 = vmatprep.subr.bf16.mxu0 %v3326
    %3632 = vmatpush2.bf16.msra.mxu0 %v3325
    %3633 = vmatprep.subr.bf16.mxu0 %v3319
    %3634 = vmatpush2.bf16.msra.mxu0 %v3318
    %3635 = vmatprep.subr.bf16.mxu0 %v3312
    %3636 = vmatpush2.bf16.msra.mxu0 %v3311
    %3637 = vmatprep.subr.bf16.mxu0 %v3305
    %3638 = vmatpush2.bf16.msra.mxu0 %v3304
    %3639 = vmatprep.subr.bf16.mxu0 %v3298
    %3640 = vmatpush2.bf16.msra.mxu0 %v3297
    %3641 = vmatprep.subr.bf16.mxu0 %v3291
    %3642 = vmatpush2.bf16.msra.mxu0 %v3290
    %3643 = vmatprep.mubr.bf16.mxu0 %v2124
    %3644 = vmatmul.mubr.bf16.gmra.mxu0 %v2123
    %v3645 = vpop.f32.mrf.mxu0
    %v3646 = vadd.f32 %v3605, %v3645
    %v3647 = vpop.f32.mrf.mxu0
    %v3648 = vadd.f32 %v3607, %v3647
    %v3649 = vpop.f32.mrf.mxu0
    %v3650 = vpop.f32.mrf.mxu0
    %3651 = vdwg.mxu0
    %3652 = vmatprep.subr.bf16.mxu0 %v3174
    %3653 = vmatpush1.bf16.msra.mxu0 %v3173
    %3654 = vmatprep.subr.bf16.mxu0 %v3167
    %3655 = vmatpush1.bf16.msra.mxu0 %v3166
    %3656 = vmatprep.subr.bf16.mxu0 %v3160
    %3657 = vmatpush1.bf16.msra.mxu0 %v3159
    %3658 = vmatprep.subr.bf16.mxu0 %v3153
    %3659 = vmatpush1.bf16.msra.mxu0 %v3152
    %3660 = vmatprep.subr.bf16.mxu0 %v3146
    %3661 = vmatpush1.bf16.msra.mxu0 %v3145
    %3662 = vmatprep.subr.bf16.mxu0 %v3139
    %3663 = vmatpush1.bf16.msra.mxu0 %v3138
    %3664 = vmatprep.subr.bf16.mxu0 %v3132
    %3665 = vmatpush1.bf16.msra.mxu0 %v3131
    %3666 = vmatprep.subr.bf16.mxu0 %v3125
    %3667 = vmatpush1.bf16.msra.mxu0 %v3124
    %3668 = vmatprep.subr.bf16.mxu0 %v3230
    %3669 = vmatpush2.bf16.msra.mxu0 %v3229
    %3670 = vmatprep.subr.bf16.mxu0 %v3223
    %3671 = vmatpush2.bf16.msra.mxu0 %v3222
    %3672 = vmatprep.subr.bf16.mxu0 %v3216
    %3673 = vmatpush2.bf16.msra.mxu0 %v3215
    %3674 = vmatprep.subr.bf16.mxu0 %v3209
    %3675 = vmatpush2.bf16.msra.mxu0 %v3208
    %3676 = vmatprep.subr.bf16.mxu0 %v3202
    %3677 = vmatpush2.bf16.msra.mxu0 %v3201
    %3678 = vmatprep.subr.bf16.mxu0 %v3195
    %3679 = vmatpush2.bf16.msra.mxu0 %v3194
    %3680 = vmatprep.subr.bf16.mxu0 %v3188
    %3681 = vmatpush2.bf16.msra.mxu0 %v3187
    %3682 = vmatprep.subr.bf16.mxu0 %v3181
    %3683 = vmatpush2.bf16.msra.mxu0 %v3180
    %3684 = vmatprep.mubr.bf16.mxu0 %v2122
    %3685 = vmatmul.mubr.bf16.gmra.mxu0 %v2121
    %v3686 = vpop.f32.mrf.mxu0
    %v3687 = vadd.f32 %v2394, %v3686
    %v3688 = vpop.f32.mrf.mxu0
    %v3689 = vadd.f32 %v2398, %v3688
    %v3690 = vpop.f32.mrf.mxu0
    %v3691 = vpop.f32.mrf.mxu0
    %3692 = vdwg.mxu0
    %3693 = vmatprep.subr.bf16.mxu0 %v3286
    %3694 = vmatpush1.bf16.msra.mxu0 %v3285
    %3695 = vmatprep.subr.bf16.mxu0 %v3279
    %3696 = vmatpush1.bf16.msra.mxu0 %v3278
    %3697 = vmatprep.subr.bf16.mxu0 %v3272
    %3698 = vmatpush1.bf16.msra.mxu0 %v3271
    %3699 = vmatprep.subr.bf16.mxu0 %v3265
    %3700 = vmatpush1.bf16.msra.mxu0 %v3264
    %3701 = vmatprep.subr.bf16.mxu0 %v3258
    %3702 = vmatpush1.bf16.msra.mxu0 %v3257
    %3703 = vmatprep.subr.bf16.mxu0 %v3251
    %3704 = vmatpush1.bf16.msra.mxu0 %v3250
    %3705 = vmatprep.subr.bf16.mxu0 %v3244
    %3706 = vmatpush1.bf16.msra.mxu0 %v3243
    %3707 = vmatprep.subr.bf16.mxu0 %v3237
    %3708 = vmatpush1.bf16.msra.mxu0 %v3236
    %3709 = vmatprep.subr.bf16.mxu0 %v3342
    %3710 = vmatpush2.bf16.msra.mxu0 %v3341
    %3711 = vmatprep.subr.bf16.mxu0 %v3335
    %3712 = vmatpush2.bf16.msra.mxu0 %v3334
    %3713 = vmatprep.subr.bf16.mxu0 %v3328
    %3714 = vmatpush2.bf16.msra.mxu0 %v3327
    %3715 = vmatprep.subr.bf16.mxu0 %v3321
    %3716 = vmatpush2.bf16.msra.mxu0 %v3320
    %3717 = vmatprep.subr.bf16.mxu0 %v3314
    %3718 = vmatpush2.bf16.msra.mxu0 %v3313
    %3719 = vmatprep.subr.bf16.mxu0 %v3307
    %3720 = vmatpush2.bf16.msra.mxu0 %v3306
    %3721 = vmatprep.subr.bf16.mxu0 %v3300
    %3722 = vmatpush2.bf16.msra.mxu0 %v3299
    %3723 = vmatprep.subr.bf16.mxu0 %v3293
    %3724 = vmatpush2.bf16.msra.mxu0 %v3292
    %3725 = vmatprep.mubr.bf16.mxu0 %v2124
    %3726 = vmatmul.mubr.bf16.gmra.mxu0 %v2123
    %v3727 = vpop.f32.mrf.mxu0
    %v3728 = vadd.f32 %v3687, %v3727
    %v3729 = vpop.f32.mrf.mxu0
    %v3730 = vadd.f32 %v3689, %v3729
    %v3731 = vpop.f32.mrf.mxu0
    %v3732 = vpop.f32.mrf.mxu0
    %3733 = vdwg.mxu0
    %3734 = vmatprep.subr.bf16.mxu0 %v3176
    %3735 = vmatpush1.bf16.msra.mxu0 %v3175
    %3736 = vmatprep.subr.bf16.mxu0 %v3169
    %3737 = vmatpush1.bf16.msra.mxu0 %v3168
    %3738 = vmatprep.subr.bf16.mxu0 %v3162
    %3739 = vmatpush1.bf16.msra.mxu0 %v3161
    %3740 = vmatprep.subr.bf16.mxu0 %v3155
    %3741 = vmatpush1.bf16.msra.mxu0 %v3154
    %3742 = vmatprep.subr.bf16.mxu0 %v3148
    %3743 = vmatpush1.bf16.msra.mxu0 %v3147
    %3744 = vmatprep.subr.bf16.mxu0 %v3141
    %3745 = vmatpush1.bf16.msra.mxu0 %v3140
    %3746 = vmatprep.subr.bf16.mxu0 %v3134
    %3747 = vmatpush1.bf16.msra.mxu0 %v3133
    %3748 = vmatprep.subr.bf16.mxu0 %v3127
    %3749 = vmatpush1.bf16.msra.mxu0 %v3126
    %3750 = vmatprep.subr.bf16.mxu0 %v3232
    %3751 = vmatpush2.bf16.msra.mxu0 %v3231
    %3752 = vmatprep.subr.bf16.mxu0 %v3225
    %3753 = vmatpush2.bf16.msra.mxu0 %v3224
    %3754 = vmatprep.subr.bf16.mxu0 %v3218
    %3755 = vmatpush2.bf16.msra.mxu0 %v3217
    %3756 = vmatprep.subr.bf16.mxu0 %v3211
    %3757 = vmatpush2.bf16.msra.mxu0 %v3210
    %3758 = vmatprep.subr.bf16.mxu0 %v3204
    %3759 = vmatpush2.bf16.msra.mxu0 %v3203
    %3760 = vmatprep.subr.bf16.mxu0 %v3197
    %3761 = vmatpush2.bf16.msra.mxu0 %v3196
    %3762 = vmatprep.subr.bf16.mxu0 %v3190
    %3763 = vmatpush2.bf16.msra.mxu0 %v3189
    %3764 = vmatprep.subr.bf16.mxu0 %v3183
    %3765 = vmatpush2.bf16.msra.mxu0 %v3182
    %3766 = vmatprep.mubr.bf16.mxu0 %v2122
    %3767 = vmatmul.mubr.bf16.gmra.mxu0 %v2121
    %v3768 = vpop.f32.mrf.mxu0
    %v3769 = vadd.f32 %v2402, %v3768
    %v3770 = vpop.f32.mrf.mxu0
    %v3771 = vadd.f32 %v2406, %v3770
    %v3772 = vpop.f32.mrf.mxu0
    %v3773 = vpop.f32.mrf.mxu0
    %3774 = vdwg.mxu0
    %3775 = vmatprep.subr.bf16.mxu0 %v3288
    %3776 = vmatpush1.bf16.msra.mxu0 %v3287
    %3777 = vmatprep.subr.bf16.mxu0 %v3281
    %3778 = vmatpush1.bf16.msra.mxu0 %v3280
    %3779 = vmatprep.subr.bf16.mxu0 %v3274
    %3780 = vmatpush1.bf16.msra.mxu0 %v3273
    %3781 = vmatprep.subr.bf16.mxu0 %v3267
    %3782 = vmatpush1.bf16.msra.mxu0 %v3266
    %3783 = vmatprep.subr.bf16.mxu0 %v3260
    %3784 = vmatpush1.bf16.msra.mxu0 %v3259
    %3785 = vmatprep.subr.bf16.mxu0 %v3253
    %3786 = vmatpush1.bf16.msra.mxu0 %v3252
    %3787 = vmatprep.subr.bf16.mxu0 %v3246
    %3788 = vmatpush1.bf16.msra.mxu0 %v3245
    %3789 = vmatprep.subr.bf16.mxu0 %v3239
    %3790 = vmatpush1.bf16.msra.mxu0 %v3238
    %3791 = vmatprep.subr.bf16.mxu0 %v3344
    %3792 = vmatpush2.bf16.msra.mxu0 %v3343
    %3793 = vmatprep.subr.bf16.mxu0 %v3337
    %3794 = vmatpush2.bf16.msra.mxu0 %v3336
    %3795 = vmatprep.subr.bf16.mxu0 %v3330
    %3796 = vmatpush2.bf16.msra.mxu0 %v3329
    %3797 = vmatprep.subr.bf16.mxu0 %v3323
    %3798 = vmatpush2.bf16.msra.mxu0 %v3322
    %3799 = vmatprep.subr.bf16.mxu0 %v3316
    %3800 = vmatpush2.bf16.msra.mxu0 %v3315
    %3801 = vmatprep.subr.bf16.mxu0 %v3309
    %3802 = vmatpush2.bf16.msra.mxu0 %v3308
    %3803 = vmatprep.subr.bf16.mxu0 %v3302
    %3804 = vmatpush2.bf16.msra.mxu0 %v3301
    %3805 = vmatprep.subr.bf16.mxu0 %v3295
    %3806 = vmatpush2.bf16.msra.mxu0 %v3294
    %3807 = vmatprep.mubr.bf16.mxu0 %v2124
    %3808 = vmatmul.mubr.bf16.gmra.mxu0 %v2123
    %v3809 = vpop.f32.mrf.mxu0
    %v3810 = vadd.f32 %v3769, %v3809
    %v3811 = vpop.f32.mrf.mxu0
    %v3812 = vadd.f32 %v3771, %v3811
    %v3813 = vpop.f32.mrf.mxu0
    %v3814 = vpop.f32.mrf.mxu0
    %3815 = vdwg.mxu0
    %3816 = vmatprep.subr.bf16.mxu0 0
    %3817 = vmatpush1.bf16.msra.mxu0 %v3177
    %3818 = vmatprep.subr.bf16.mxu0 0
    %3819 = vmatpush1.bf16.msra.mxu0 %v3170
    %3820 = vmatprep.subr.bf16.mxu0 0
    %3821 = vmatpush1.bf16.msra.mxu0 %v3163
    %3822 = vmatprep.subr.bf16.mxu0 0
    %3823 = vmatpush1.bf16.msra.mxu0 %v3156
    %3824 = vmatprep.subr.bf16.mxu0 0
    %3825 = vmatpush1.bf16.msra.mxu0 %v3149
    %3826 = vmatprep.subr.bf16.mxu0 0
    %3827 = vmatpush1.bf16.msra.mxu0 %v3142
    %3828 = vmatprep.subr.bf16.mxu0 0
    %3829 = vmatpush1.bf16.msra.mxu0 %v3135
    %3830 = vmatprep.subr.bf16.mxu0 0
    %3831 = vmatpush1.bf16.msra.mxu0 %v3128
    %3832 = vmatprep.subr.bf16.mxu0 0
    %3833 = vmatpush2.bf16.msra.mxu0 %v3233
    %3834 = vmatprep.subr.bf16.mxu0 0
    %3835 = vmatpush2.bf16.msra.mxu0 %v3226
    %3836 = vmatprep.subr.bf16.mxu0 0
    %3837 = vmatpush2.bf16.msra.mxu0 %v3219
    %3838 = vmatprep.subr.bf16.mxu0 0
    %3839 = vmatpush2.bf16.msra.mxu0 %v3212
    %3840 = vmatprep.subr.bf16.mxu0 0
    %3841 = vmatpush2.bf16.msra.mxu0 %v3205
    %3842 = vmatprep.subr.bf16.mxu0 0
    %3843 = vmatpush2.bf16.msra.mxu0 %v3198
    %3844 = vmatprep.subr.bf16.mxu0 0
    %3845 = vmatpush2.bf16.msra.mxu0 %v3191
    %3846 = vmatprep.subr.bf16.mxu0 0
    %3847 = vmatpush2.bf16.msra.mxu0 %v3184
    %3848 = vmatprep.mubr.bf16.mxu0 %v2122
    %3849 = vmatmul.mubr.bf16.gmra.mxu0 %v2121
    %v3850 = vpop.f32.mrf.mxu0
    %v3851 = vadd.f32 %v2410, %v3850
    %v3852 = vpop.f32.mrf.mxu0
    %v3853 = vpop.f32.mrf.mxu0
    %v3854 = vpop.f32.mrf.mxu0
    %3855 = vdwg.mxu0
    %3856 = vmatprep.subr.bf16.mxu0 0
    %3857 = vmatpush1.bf16.msra.mxu0 %v3289
    %3858 = vmatprep.subr.bf16.mxu0 0
    %3859 = vmatpush1.bf16.msra.mxu0 %v3282
    %3860 = vmatprep.subr.bf16.mxu0 0
    %3861 = vmatpush1.bf16.msra.mxu0 %v3275
    %3862 = vmatprep.subr.bf16.mxu0 0
    %3863 = vmatpush1.bf16.msra.mxu0 %v3268
    %3864 = vmatprep.subr.bf16.mxu0 0
    %3865 = vmatpush1.bf16.msra.mxu0 %v3261
    %3866 = vmatprep.subr.bf16.mxu0 0
    %3867 = vmatpush1.bf16.msra.mxu0 %v3254
    %3868 = vmatprep.subr.bf16.mxu0 0
    %3869 = vmatpush1.bf16.msra.mxu0 %v3247
    %3870 = vmatprep.subr.bf16.mxu0 0
    %3871 = vmatpush1.bf16.msra.mxu0 %v3240
    %3872 = vmatprep.subr.bf16.mxu0 0
    %3873 = vmatpush2.bf16.msra.mxu0 %v3345
    %3874 = vmatprep.subr.bf16.mxu0 0
    %3875 = vmatpush2.bf16.msra.mxu0 %v3338
    %3876 = vmatprep.subr.bf16.mxu0 0
    %3877 = vmatpush2.bf16.msra.mxu0 %v3331
    %3878 = vmatprep.subr.bf16.mxu0 0
    %3879 = vmatpush2.bf16.msra.mxu0 %v3324
    %3880 = vmatprep.subr.bf16.mxu0 0
    %3881 = vmatpush2.bf16.msra.mxu0 %v3317
    %3882 = vmatprep.subr.bf16.mxu0 0
    %3883 = vmatpush2.bf16.msra.mxu0 %v3310
    %3884 = vmatprep.subr.bf16.mxu0 0
    %3885 = vmatpush2.bf16.msra.mxu0 %v3303
    %3886 = vmatprep.subr.bf16.mxu0 0
    %3887 = vmatpush2.bf16.msra.mxu0 %v3296
    %3888 = vmatprep.mubr.bf16.mxu0 %v2124
    %3889 = vmatmul.mubr.bf16.gmra.mxu0 %v2123
    %v3890 = vpop.f32.mrf.mxu0
    %v3891 = vadd.f32 %v3851, %v3890
    %v3892 = vpop.f32.mrf.mxu0
    %v3893 = vpop.f32.mrf.mxu0
    %v3894 = vpop.f32.mrf.mxu0
    %3895 = vdwg.mxu0
    %v3896 = vsub.f32 0.0, %v3646
    %v3897 = vsub.f32 0.0, %v3648
    %v3898 = vsub.f32 0.0, %v3728
    %v3899 = vsub.f32 0.0, %v3730
    %v3900 = vsub.f32 0.0, %v3810
    %v3901 = vsub.f32 0.0, %v3812
    %v3902 = vsub.f32 0.0, %v3891
    %v3903 = vmul.f32 %v3896, 1.442695
    %v3904 = vpow.pop %v3903
    %v3905 = vmul.f32 %v3897, 1.442695
    %v3906 = vpow.pop %v3905
    %v3907 = vmul.f32 %v3898, 1.442695
    %v3908 = vpow.pop %v3907
    %v3909 = vmul.f32 %v3899, 1.442695
    %v3910 = vpow.pop %v3909
    %v3911 = vmul.f32 %v3900, 1.442695
    %v3912 = vpow.pop %v3911
    %v3913 = vmul.f32 %v3901, 1.442695
    %v3914 = vpow.pop %v3913
    %v3915 = vmul.f32 %v3902, 1.442695
    %v3916 = vpow.pop %v3915
    %v3917 = vadd.f32 %v3904, 1.0
    %v3918 = vadd.f32 %v3906, 1.0
    %v3919 = vadd.f32 %v3908, 1.0
    %v3920 = vadd.f32 %v3910, 1.0
    %v3921 = vadd.f32 %v3912, 1.0
    %v3922 = vadd.f32 %v3914, 1.0
    %v3923 = vadd.f32 %v3916, 1.0
    %v3924 = vrcp.pop %v3917
    %v3925 = vrcp.pop %v3918
    %v3926 = vrcp.pop %v3919
    %v3927 = vrcp.pop %v3920
    %v3928 = vrcp.pop %v3921
    %v3929 = vrcp.pop %v3922
    %v3930 = vrcp.pop %v3923
    %3931 = vst [vmem:[#allocation2] sm:$0xff] %v3924
    %3932 = vst [vmem:[#allocation2 + $0x8] sm:$0xff] %v3925
    %3933 = vst [vmem:[#allocation2 + $0x10] sm:$0xff] %v3926
    %3934 = vst [vmem:[#allocation2 + $0x18] sm:$0xff] %v3927
    %3935 = vst [vmem:[#allocation2 + $0x20] sm:$0xff] %v3928
    %3936 = vst [vmem:[#allocation2 + $0x28] sm:$0xff] %v3929
    %3937 = vst.msk [vmem:[#allocation2 + $0x30] sm:$0xff] %vm1266, %v3930
    %vm3938 = vcmask 326656
    %3939 = vst.msk [vmem:[#allocation4] sm:$0xff] %vm3938, %v1944
    // Predicated region
    $region42: #{tpu_custom_call.1} parent=1 // pred_check
      _
    $region43: #{tpu_custom_call.1} parent=1 // pred_check_branch
      %3941 = sbr.rel (0) target = $region45
    $region44: #{tpu_custom_call.1} parent=1 // pred_region
      %s3943 = ssub.s32 896, 896
      %3944 = vsyncadd [#allocation3], %s3943
      %s3946 = sshll.u32 [#allocation2], 4
      %s3947 = int_to_ptr.vmem [resolvable:$true] %s3946
      %3949 = dma.vmem_to_hbm [thread:$0]  %s3947, 896, %s10, [#allocation3]
    $region45: #{tpu_custom_call.1} parent=1 // pred_fallthru
      _
    // Predicated region
    $region46: #{tpu_custom_call.1} parent=1 // pred_check
      _
    $region47: #{tpu_custom_call.1} parent=1 // pred_check_branch
      %3951 = sbr.rel (0) target = $region49
    $region48: #{tpu_custom_call.1} parent=1 // pred_region
      %s3953 = ssub.s32 128, 128
      %3954 = vsyncadd [#allocation5], %s3953
      %s3956 = sshll.u32 [#allocation4], 4
      %s3957 = int_to_ptr.vmem [resolvable:$true] %s3956
      %3959 = dma.vmem_to_hbm [thread:$0]  %s3957, 128, %s11, [#allocation5]
    $region49: #{tpu_custom_call.1} parent=1 // pred_fallthru
      _
    // Predicated region
    $region50: #{tpu_custom_call.1} parent=1 // pred_check
      _
    $region51: #{tpu_custom_call.1} parent=1 // pred_check_branch
      %3961 = sbr.rel (0) target = $region53
    $region52: #{tpu_custom_call.1} parent=1 // pred_region
      %3962 = dma.done [#allocation3], 896
    $region53: #{tpu_custom_call.1} parent=1 // pred_fallthru
      _
    // Predicated region
    $region54: #{tpu_custom_call.1} parent=1 // pred_check
      _
    $region55: #{tpu_custom_call.1} parent=1 // pred_check_branch
      %3964 = sbr.rel (0) target = $region57
    $region56: #{tpu_custom_call.1} parent=1 // pred_region
      %3965 = dma.done [#allocation5], 128
    $region57: #{tpu_custom_call.1} parent=1 // pred_fallthru
      _
    %3966 = vsyncpa [#allocation3], 1
    %3967 = vsyncpa [#allocation5], 1

</llo_original>
